<compile_context>
chip_gen: v6e
topology: v6e:2x2x1
jax: 0.10.0
libtpu: 0.0.40
codegen_flags: <defaults>
</compile_context>

<pallas_src>
import math

import jax
import jax.numpy as jnp
import numpy as np
from jax.experimental import pallas as pl
from jax.experimental.pallas import tpu as pltpu

# ---- model constants (from the PyTorch module) -------------------------------
CHANNELS = 1
HIDDEN = 64
IMAGE = 28
PATCH = 4
HEADS = 8
CLASSES = 10
GRID_P = IMAGE // PATCH            # 7
NP = GRID_P * GRID_P               # 49 patches
SEQ = NP + 1                       # 50 real tokens (class token + patches)
SEQ_P = 56                         # padded tokens (multiple of 8)
HD = HIDDEN // HEADS               # 8 per-head dim
BATCH = 2                          # attention couples exactly two images
PATCH_DIM = CHANNELS * PATCH * PATCH   # 16
H2 = 2 * HIDDEN                    # 128 lanes: two images lane-packed

_F32 = jnp.float32
_LN_EPS = 1e-5
_INV_H = 1.0 / HIDDEN
_INV_SQRT2 = 1.0 / math.sqrt(2.0)
_ATTN_SCALE = 1.0 / math.sqrt(HD)
_NEG = -1e9                        # "minus infinity" for padded class lanes

# ---- const-slab layout --------------------------------------------------------
# rows [0, 56): additive slab add0 (class token / positional / proj-bias)
# rows [56, 56+11*128): 128x128 matrices (block-diagonal per image)
# rows [1464, 1496): (1,128) bias / gain rows
(M_O1, M_MLP2_1, M_MLP2_2, M_O3, M_MLP4_1, M_MLP4_2,
 M_H1, M_H2, M_PW, M_ONES, M_PHEAD) = range(11)
N_MATS = 11
MAT_OFF = SEQ_P                        # 56  (multiple of 8)
VEC_OFF = MAT_OFF + N_MATS * H2        # 1464 (multiple of 8)
N_VEC_ROWS = 32
CONST_ROWS = VEC_OFF + N_VEC_ROWS      # 1496

V_LN1_G, V_LN1_B = 0, 1
V_BQ1, V_BK1, V_BV1, V_KB1, V_VB1, V_BO1 = 2, 3, 4, 5, 6, 7
V_LN2_G, V_LN2_B, V_M2_B1, V_M2_B2 = 8, 9, 10, 11
V_LN3_G, V_LN3_B = 12, 13
V_BQ3, V_BK3, V_BV3, V_KB3, V_VB3, V_BO3 = 14, 15, 16, 17, 18, 19
V_LN4_G, V_LN4_B, V_M4_B1, V_M4_B2 = 20, 21, 22, 23
V_LN5_G, V_LN5_B, V_H_B1, V_H_B2 = 24, 25, 26, 27


# ---- in-kernel math helpers ----------------------------------------------------
def _recip_newton(d):
    # EUP approximate reciprocal + one Newton step: relative error ~1e-7.
    r = pl.reciprocal(d, approx=True)
    return r * (2.0 - d * r)


def _erf(x):
    # Abramowitz & Stegun 7.1.26 polynomial, |err| < 1.5e-7.
    a1, a2, a3, a4, a5 = 0.254829592, -0.284496736, 1.421413741, -1.453152027, 1.061405429
    p = 0.3275911
    ax = jnp.abs(x)
    t = _recip_newton(1.0 + p * ax)
    poly = ((((a5 * t + a4) * t + a3) * t + a2) * t + a1) * t
    y = 1.0 - poly * jnp.exp(-ax * ax)
    return jnp.where(x >= 0, y, -y)


def _gelu(x):
    return 0.5 * x * (1.0 + _erf(x * _INV_SQRT2))


# ---- the Pallas kernel: entire ViT forward, single invocation ------------------
def vit_kernel(patch_ref, qkv_ref, const_ref, out_ref):
    def M(i):                          # (128,128) matrix, sublane-aligned static slice
        r0 = MAT_OFF + i * H2
        return const_ref[r0:r0 + H2, :]

    def V(i):                          # (1,128) bias / gain row
        r0 = VEC_OFF + i
        return const_ref[r0:r0 + 1, :]

    def layer_norm(x, gi, bi):
        # per-image (64-lane) statistics via block-diagonal ones selector on the MXU
        sel = M(M_ONES)
        s1 = jnp.dot(x, sel, preferred_element_type=_F32)
        s2 = jnp.dot(x * x, sel, preferred_element_type=_F32)
        mu = s1 * _INV_H
        var = jnp.maximum(s2 * _INV_H - mu * mu, 0.0)
        return (x - mu) * jax.lax.rsqrt(var + _LN_EPS) * V(gi) + V(bi)

    def mha(z, wqkv, wo, bqi, bki, bvi, kbi, vbi, boi):
        # torch.nn.MultiheadAttention(64, 8, add_bias_kv=True), batch_first=False
        # on the lane-packed (56,128) slab.  wq / bq pre-scaled by 1/sqrt(HD).
        p_head = M(M_PHEAD)
        r = jnp.dot(z, wqkv, preferred_element_type=_F32)          # (56, 384) fused QKV
        q = r[:, 0:H2] + V(bqi)
        k = r[:, H2:2 * H2] + V(bki)
        v = r[:, 2 * H2:3 * H2] + V(bvi)
        # per-head replicated scores for the 3 key positions (self / other / kv-bias)
        s_self = jnp.dot(q * k, p_head, preferred_element_type=_F32)
        k_sw = pltpu.roll(k, shift=HIDDEN, axis=1)                 # other image, same head/dim
        s_cross = jnp.dot(q * k_sw, p_head, preferred_element_type=_F32)
        s_bias = jnp.dot(q * V(kbi), p_head, preferred_element_type=_F32)
        m = jnp.maximum(jnp.maximum(s_self, s_cross), s_bias)
        e_self = jnp.exp(s_self - m)
        e_cross = jnp.exp(s_cross - m)
        e_bias = jnp.exp(s_bias - m)
        inv = pl.reciprocal(e_self + e_cross + e_bias, approx=True)   # EUP, free slot
        # softmax weights are already head-replicated -> multiply values directly
        ctx = (e_self * inv) * v
        v_sw = pltpu.roll(v, shift=HIDDEN, axis=1)
        ctx = ctx + (e_cross * inv) * v_sw
        ctx = ctx + (e_bias * inv) * V(vbi)
        return jnp.dot(ctx, wo, preferred_element_type=_F32) + V(boi)

    def mlp(x, w1, b1i, w2, b2i):
        h = _gelu(jnp.dot(x, w1, preferred_element_type=_F32) + V(b1i))
        return jnp.dot(h, w2, preferred_element_type=_F32) + V(b2i)

    # patch projection + (class token / positional / proj-bias) additive slab
    add0 = const_ref[0:SEQ_P, :]
    z0 = jnp.dot(patch_ref[...], M(M_PW), preferred_element_type=_F32) + add0

    # block 1: LN -> MSA -> residual (to z0)
    z1 = layer_norm(z0, V_LN1_G, V_LN1_B)
    z1s = mha(z1, qkv_ref[0:H2, :], M(M_O1),
              V_BQ1, V_BK1, V_BV1, V_KB1, V_VB1, V_BO1) + z0

    # block 2: LN -> MLP -> residual
    z2 = layer_norm(z1s, V_LN2_G, V_LN2_B)
    z2s = mlp(z2, M(M_MLP2_1), V_M2_B1, M(M_MLP2_2), V_M2_B2) + z1s

    # block 3: LN -> MSA -> residual; the reference adds z3 (the LN output) on purpose
    z3 = layer_norm(z2s, V_LN3_G, V_LN3_B)
    z3s = mha(z3, qkv_ref[H2:2 * H2, :], M(M_O3),
              V_BQ3, V_BK3, V_BV3, V_KB3, V_VB3, V_BO3) + z3

    # block 4: LN -> MLP -> residual
    z4 = layer_norm(z3s, V_LN4_G, V_LN4_B)
    z4s = mlp(z4, M(M_MLP4_1), V_M4_B1, M(M_MLP4_2), V_M4_B2) + z3s

    # final LN + mean over the 50 real tokens (padding rows masked via iota)
    z5 = layer_norm(z4s, V_LN5_G, V_LN5_B)
    ridx = jax.lax.broadcasted_iota(jnp.int32, (SEQ_P, H2), 0)
    z5m = jnp.where(ridx < SEQ, z5, 0.0)
    feat = jnp.sum(z5m, axis=0, keepdims=True) * (1.0 / SEQ)        # (1,128) lane-packed
    feat = jnp.broadcast_to(feat, (8, H2))

    # classification head + per-image softmax (real classes at lanes [0:10) & [64:74))
    h = _gelu(jnp.dot(feat, M(M_H1), preferred_element_type=_F32) + V(V_H_B1))
    logits = jnp.dot(h, M(M_H2), preferred_element_type=_F32) + V(V_H_B2)
    logits = logits - jnp.max(logits, axis=-1, keepdims=True)        # shift-invariant per image
    e = jnp.exp(logits)                                              # padded lanes -> 0
    ssum = jnp.dot(e, M(M_ONES), preferred_element_type=_F32)        # per-image sums, replicated
    out_ref[...] = e / ssum                                          # exact divide (tiny tile)


# ---- wrapper-side preparation (ordinary XLA ops) -------------------------------
def patchify(x):
    """torch.nn.functional.unfold(x, (4,4), stride=4).permute(0,2,1) flattened to
    (B*49, C*16); row = b*49 + row-major patch index, col = (c, kh, kw)."""
    b, c, _, _ = x.shape
    xr = x.reshape(b, c, GRID_P, PATCH, GRID_P, PATCH)
    xt = jnp.transpose(xr, (0, 2, 4, 1, 3, 5))
    return xt.reshape(b * NP, c * PATCH * PATCH)


def build_patch_slab(x):
    """(56,128) lane-packed patch slab: image b's patch features in lanes
    [64b, 64b+16); class-token row 0 and padding rows stay zero."""
    xp = patchify(x).astype(_F32).reshape(BATCH, NP, PATCH_DIM)
    slab = jnp.zeros((SEQ_P, H2), _F32)
    slab = slab.at[1:SEQ, 0:PATCH_DIM].set(xp[0])
    slab = slab.at[1:SEQ, HIDDEN:HIDDEN + PATCH_DIM].set(xp[1])
    return slab


def _build_add0(cls_tok, pos, pb):
    """(56,128) additive slab so that z0 = patches @ pw_packed + add0:
    class rows -> cls + pos[0]; patch rows -> pb + pos[1+p]; padding rows -> 0."""
    row0 = cls_tok + pos[0:1, :]
    patch_rows = pb + pos[1:, :]
    pad = jnp.zeros((SEQ_P - SEQ, HIDDEN), _F32)
    per_img = jnp.concatenate([row0, patch_rows, pad], axis=0)     # (56, 64)
    return jnp.concatenate([per_img, per_img], axis=1)             # (56, 128)


def _bd(w):
    """(64,64) -> (128,128) block-diagonal (same weight for both lane-packed images)."""
    n, m = w.shape
    out = jnp.zeros((2 * n, 2 * m), _F32)
    out = out.at[:n, :m].set(w)
    out = out.at[n:, m:].set(w)
    return out


def _pk(v):
    """(1,64) -> (1,128): same bias / gain for both lane-packed images."""
    return jnp.concatenate([v, v], axis=1)


def _split_msa(m):
    h = HIDDEN
    wq = m['w_in'][:, 0:h] * _ATTN_SCALE           # fold the 1/sqrt(hd) q-scale
    wk = m['w_in'][:, h:2 * h]
    wv = m['w_in'][:, 2 * h:3 * h]
    bq = m['b_in'][:, 0:h] * _ATTN_SCALE
    bk = m['b_in'][:, h:2 * h]
    bv = m['b_in'][:, 2 * h:3 * h]
    return wq, wk, wv, bq, bk, bv


def pack_params(p):
    """Pack all parameters into two VMEM slabs (order must match the M_* / V_*
    index constants used inside the kernel)."""
    m1, m3 = p['msa1'], p['msa3']
    wq1, wk1, wv1, bq1, bk1, bv1 = _split_msa(m1)
    wq3, wk3, wv3, bq3, bk3, bv3 = _split_msa(m3)

    # fused, block-diagonal QKV weights: (256, 384)
    qkv_slab = jnp.concatenate([
        jnp.concatenate([_bd(wq1), _bd(wk1), _bd(wv1)], axis=1),
        jnp.concatenate([_bd(wq3), _bd(wk3), _bd(wv3)], axis=1)], axis=0)

    # 128x128 matrices
    pw_p = (jnp.zeros((H2, H2), _F32)
            .at[0:PATCH_DIM, 0:HIDDEN].set(p['pw'])
            .at[HIDDEN:HIDDEN + PATCH_DIM, HIDDEN:].set(p['pw']))
    w2 = p['head']['w2']
    wh2_p = (jnp.zeros((H2, H2), _F32)
             .at[0:HIDDEN, 0:CLASSES].set(w2)
             .at[HIDDEN:, HIDDEN:HIDDEN + CLASSES].set(w2))
    idx = np.arange(H2)
    ones_bd = jnp.asarray((idx[:, None] // HIDDEN == idx[None, :] // HIDDEN)
                          .astype(np.float32))                      # per-image sum selector
    p_head = jnp.asarray((idx[:, None] // HD == idx[None, :] // HD)
                         .astype(np.float32))                       # per-head sum selector
    mats = [_bd(m1['w_out']), _bd(p['mlp2']['w1']), _bd(p['mlp2']['w2']),
            _bd(m3['w_out']), _bd(p['mlp4']['w1']), _bd(p['mlp4']['w2']),
            _bd(p['head']['w1']), wh2_p, pw_p, ones_bd, p_head]

    b2 = p['head']['b2']
    bh2_p = (jnp.full((1, H2), _NEG, _F32)
             .at[0, 0:CLASSES].set(b2[0])
             .at[0, HIDDEN:HIDDEN + CLASSES].set(b2[0]))
    vrows = [_pk(p['ln1']['g']), _pk(p['ln1']['b']),
             _pk(bq1), _pk(bk1), _pk(bv1), _pk(m1['bias_k']), _pk(m1['bias_v']), _pk(m1['b_out']),
             _pk(p['ln2']['g']), _pk(p['ln2']['b']), _pk(p['mlp2']['b1']), _pk(p['mlp2']['b2']),
             _pk(p['ln3']['g']), _pk(p['ln3']['b']),
             _pk(bq3), _pk(bk3), _pk(bv3), _pk(m3['bias_k']), _pk(m3['bias_v']), _pk(m3['b_out']),
             _pk(p['ln4']['g']), _pk(p['ln4']['b']), _pk(p['mlp4']['b1']), _pk(p['mlp4']['b2']),
             _pk(p['ln5']['g']), _pk(p['ln5']['b']), _pk(p['head']['b1']), bh2_p]
    vpad = jnp.zeros((N_VEC_ROWS - len(vrows), H2), _F32)

    add0 = _build_add0(p['cls'], p['pos'], p['pb'])                # (56, 128)

    const_slab = jnp.concatenate([add0] + mats + vrows + [vpad], axis=0)
    assert const_slab.shape == (CONST_ROWS, H2), const_slab.shape
    return qkv_slab, const_slab


@jax.jit
def vit_forward(x, packed):
    assert x.shape[0] == BATCH, "MHA couples exactly two images (batch_first=False quirk)"
    qkv_slab, const_slab = packed
    patch_slab = build_patch_slab(x)
    vmem = pl.BlockSpec(memory_space=pltpu.MemorySpace.VMEM)
    out = pl.pallas_call(
        vit_kernel,
        out_shape=jax.ShapeDtypeStruct((8, H2), _F32),
        in_specs=[vmem, vmem, vmem],
        out_specs=vmem,
    )(patch_slab, qkv_slab, const_slab)
    # unpack the lane-packed per-image class probabilities -> (2, 10)
    return jnp.stack([out[0, 0:CLASSES], out[0, HIDDEN:HIDDEN + CLASSES]], axis=0)


# ---- parameter construction ----------------------------------------------------
def make_params():
    key = jax.random.PRNGKey(0)
    ctr = [0]

    def rand(shape, scale=0.05):
        ctr[0] += 1
        return (scale * jax.random.normal(jax.random.fold_in(key, ctr[0]), shape)).astype(_F32)

    def ln():
        return dict(g=jnp.ones((1, HIDDEN), _F32), b=jnp.zeros((1, HIDDEN), _F32))

    def msa():
        # w_in is in_proj_weight.T (HIDDEN, 3*HIDDEN); columns = [q | k | v]
        return dict(w_in=rand((HIDDEN, 3 * HIDDEN)), b_in=rand((1, 3 * HIDDEN), 0.02),
                    bias_k=rand((1, HIDDEN)), bias_v=rand((1, HIDDEN)),
                    w_out=rand((HIDDEN, HIDDEN)), b_out=rand((1, HIDDEN), 0.02))

    def mlp():
        return dict(w1=rand((HIDDEN, HIDDEN)), b1=rand((1, HIDDEN), 0.02),
                    w2=rand((HIDDEN, HIDDEN)), b2=rand((1, HIDDEN), 0.02))

    return dict(
        cls=rand((1, HIDDEN), 1.0),                                 # encode_class
        pos=rand((SEQ, HIDDEN)),                                    # encode_positional table
        pw=rand((PATCH_DIM, HIDDEN)), pb=rand((1, HIDDEN), 0.02),   # encode_project
        ln1=ln(), msa1=msa(),
        ln2=ln(), mlp2=mlp(),
        ln3=ln(), msa3=msa(),
        ln4=ln(), mlp4=mlp(),
        ln5=ln(),
        head=dict(w1=rand((HIDDEN, HIDDEN)), b1=rand((1, HIDDEN), 0.02),
                  w2=rand((HIDDEN, CLASSES)), b2=rand((1, CLASSES), 0.02)),
    )


if __name__ == "__main__":
    x = jax.random.normal(jax.random.PRNGKey(0), (BATCH, CHANNELS, IMAGE, IMAGE), _F32)
    params = make_params()
    packed = pack_params(params)
    y = vit_forward(x, packed)
    y = jax.block_until_ready(y)
    assert y.shape == (BATCH, CLASSES)
    y_np = np.asarray(y)
    assert np.all(np.isfinite(y_np))
    row_sums = y_np.sum(axis=-1)
    assert np.allclose(row_sums, 1.0, atol=1e-3), row_sums
    print("KERNEL_OK")
</pallas_src>

<mosaic_0001>
module attributes {stable_mosaic.version = 11 : i64} {
  func.func @vit_kernel(%arg0: memref<56x128xf32, #tpu.memory_space<vmem>>, %arg1: memref<256x384xf32, #tpu.memory_space<vmem>>, %arg2: memref<1496x128xf32, #tpu.memory_space<vmem>>, %arg3: memref<8x128xf32, #tpu.memory_space<vmem>>) attributes {dimension_semantics = [], scalar_prefetch = 0 : i64, scratch_operands = 0 : i64, tpu.core_type = #tpu.core_type<tc>} {
    %c0 = arith.constant 0 : index
    %c0_0 = arith.constant 0 : index
    %0 = vector.load %arg2[%c0, %c0_0] : memref<1496x128xf32, #tpu.memory_space<vmem>>, vector<56x128xf32>
    %c0_1 = arith.constant 0 : index
    %c0_2 = arith.constant 0 : index
    %1 = vector.load %arg0[%c0_1, %c0_2] : memref<56x128xf32, #tpu.memory_space<vmem>>, vector<56x128xf32>
    %c1080 = arith.constant 1080 : index
    %c0_3 = arith.constant 0 : index
    %2 = vector.load %arg2[%c1080, %c0_3] : memref<1496x128xf32, #tpu.memory_space<vmem>>, vector<128x128xf32>
    %cst = arith.constant dense<0.000000e+00> : vector<56x128xf32>
    %3 = tpu.matmul %1, %2, %cst {dimension_numbers = #tpu.dot_dimension_numbers<[1], [0], [0], [1], [0, 0, 1, 1], [], []>} : vector<56x128xf32>, vector<128x128xf32>, vector<56x128xf32> -> vector<56x128xf32>
    %4 = arith.addf %3, %0 : vector<56x128xf32>
    %c1208 = arith.constant 1208 : index
    %c0_4 = arith.constant 0 : index
    %5 = vector.load %arg2[%c1208, %c0_4] : memref<1496x128xf32, #tpu.memory_space<vmem>>, vector<128x128xf32>
    %cst_5 = arith.constant dense<0.000000e+00> : vector<56x128xf32>
    %6 = tpu.matmul %4, %5, %cst_5 {dimension_numbers = #tpu.dot_dimension_numbers<[1], [0], [0], [1], [0, 0, 1, 1], [], []>} : vector<56x128xf32>, vector<128x128xf32>, vector<56x128xf32> -> vector<56x128xf32>
    %7 = arith.mulf %4, %4 : vector<56x128xf32>
    %cst_6 = arith.constant dense<0.000000e+00> : vector<56x128xf32>
    %8 = tpu.matmul %7, %5, %cst_6 {dimension_numbers = #tpu.dot_dimension_numbers<[1], [0], [0], [1], [0, 0, 1, 1], [], []>} : vector<56x128xf32>, vector<128x128xf32>, vector<56x128xf32> -> vector<56x128xf32>
    %cst_7 = arith.constant 1.562500e-02 : f32
    %9 = vector.broadcast %cst_7 : f32 to vector<56x128xf32>
    %10 = arith.mulf %6, %9 : vector<56x128xf32>
    %cst_8 = arith.constant 1.562500e-02 : f32
    %11 = vector.broadcast %cst_8 : f32 to vector<56x128xf32>
    %12 = arith.mulf %8, %11 : vector<56x128xf32>
    %13 = arith.mulf %10, %10 : vector<56x128xf32>
    %14 = arith.subf %12, %13 : vector<56x128xf32>
    %cst_9 = arith.constant 0.000000e+00 : f32
    %15 = vector.broadcast %cst_9 : f32 to vector<56x128xf32>
    %16 = arith.maximumf %14, %15 : vector<56x128xf32>
    %17 = arith.subf %4, %10 : vector<56x128xf32>
    %cst_10 = arith.constant 9.99999974E-6 : f32
    %18 = vector.broadcast %cst_10 : f32 to vector<56x128xf32>
    %19 = arith.addf %16, %18 : vector<56x128xf32>
    %20 = math.rsqrt %19 : vector<56x128xf32>
    %21 = arith.mulf %17, %20 : vector<56x128xf32>
    %c1464 = arith.constant 1464 : index
    %c0_11 = arith.constant 0 : index
    %22 = vector.load %arg2[%c1464, %c0_11] : memref<1496x128xf32, #tpu.memory_space<vmem>>, vector<1x128xf32>
    %23 = vector.broadcast %22 : vector<1x128xf32> to vector<56x128xf32>
    %24 = arith.mulf %21, %23 : vector<56x128xf32>
    %c1465 = arith.constant 1465 : index
    %c0_12 = arith.constant 0 : index
    %25 = vector.load %arg2[%c1465, %c0_12] : memref<1496x128xf32, #tpu.memory_space<vmem>>, vector<1x128xf32>
    %26 = vector.broadcast %25 : vector<1x128xf32> to vector<56x128xf32>
    %27 = arith.addf %24, %26 : vector<56x128xf32>
    %c0_13 = arith.constant 0 : index
    %c0_14 = arith.constant 0 : index
    %28 = vector.load %arg1[%c0_13, %c0_14] : memref<256x384xf32, #tpu.memory_space<vmem>>, vector<128x384xf32>
    %c56 = arith.constant 56 : index
    %c0_15 = arith.constant 0 : index
    %29 = vector.load %arg2[%c56, %c0_15] : memref<1496x128xf32, #tpu.memory_space<vmem>>, vector<128x128xf32>
    %c1336 = arith.constant 1336 : index
    %c0_16 = arith.constant 0 : index
    %30 = vector.load %arg2[%c1336, %c0_16] : memref<1496x128xf32, #tpu.memory_space<vmem>>, vector<128x128xf32>
    %cst_17 = arith.constant dense<0.000000e+00> : vector<56x384xf32>
    %31 = tpu.matmul %27, %28, %cst_17 {dimension_numbers = #tpu.dot_dimension_numbers<[1], [0], [0], [1], [0, 0, 1, 1], [], []>} : vector<56x128xf32>, vector<128x384xf32>, vector<56x384xf32> -> vector<56x384xf32>
    %32 = vector.extract_strided_slice %31 {offsets = [0, 0], sizes = [56, 128], strides = [1, 1]} : vector<56x384xf32> to vector<56x128xf32>
    %c1466 = arith.constant 1466 : index
    %c0_18 = arith.constant 0 : index
    %33 = vector.load %arg2[%c1466, %c0_18] : memref<1496x128xf32, #tpu.memory_space<vmem>>, vector<1x128xf32>
    %34 = vector.broadcast %33 : vector<1x128xf32> to vector<56x128xf32>
    %35 = arith.addf %32, %34 : vector<56x128xf32>
    %36 = vector.extract_strided_slice %31 {offsets = [0, 128], sizes = [56, 128], strides = [1, 1]} : vector<56x384xf32> to vector<56x128xf32>
    %c1467 = arith.constant 1467 : index
    %c0_19 = arith.constant 0 : index
    %37 = vector.load %arg2[%c1467, %c0_19] : memref<1496x128xf32, #tpu.memory_space<vmem>>, vector<1x128xf32>
    %38 = vector.broadcast %37 : vector<1x128xf32> to vector<56x128xf32>
    %39 = arith.addf %36, %38 : vector<56x128xf32>
    %40 = vector.extract_strided_slice %31 {offsets = [0, 256], sizes = [56, 128], strides = [1, 1]} : vector<56x384xf32> to vector<56x128xf32>
    %c1468 = arith.constant 1468 : index
    %c0_20 = arith.constant 0 : index
    %41 = vector.load %arg2[%c1468, %c0_20] : memref<1496x128xf32, #tpu.memory_space<vmem>>, vector<1x128xf32>
    %42 = vector.broadcast %41 : vector<1x128xf32> to vector<56x128xf32>
    %43 = arith.addf %40, %42 : vector<56x128xf32>
    %44 = arith.mulf %35, %39 : vector<56x128xf32>
    %cst_21 = arith.constant dense<0.000000e+00> : vector<56x128xf32>
    %45 = tpu.matmul %44, %30, %cst_21 {dimension_numbers = #tpu.dot_dimension_numbers<[1], [0], [0], [1], [0, 0, 1, 1], [], []>} : vector<56x128xf32>, vector<128x128xf32>, vector<56x128xf32> -> vector<56x128xf32>
    %c64_i32 = arith.constant 64 : i32
    %46 = tpu.dynamic_rotate %39 by %c64_i32 dim 1 : vector<56x128xf32>, i32 -> vector<56x128xf32>
    %47 = arith.mulf %35, %46 : vector<56x128xf32>
    %cst_22 = arith.constant dense<0.000000e+00> : vector<56x128xf32>
    %48 = tpu.matmul %47, %30, %cst_22 {dimension_numbers = #tpu.dot_dimension_numbers<[1], [0], [0], [1], [0, 0, 1, 1], [], []>} : vector<56x128xf32>, vector<128x128xf32>, vector<56x128xf32> -> vector<56x128xf32>
    %c1469 = arith.constant 1469 : index
    %c0_23 = arith.constant 0 : index
    %49 = vector.load %arg2[%c1469, %c0_23] : memref<1496x128xf32, #tpu.memory_space<vmem>>, vector<1x128xf32>
    %50 = vector.broadcast %49 : vector<1x128xf32> to vector<56x128xf32>
    %51 = arith.mulf %35, %50 : vector<56x128xf32>
    %cst_24 = arith.constant dense<0.000000e+00> : vector<56x128xf32>
    %52 = tpu.matmul %51, %30, %cst_24 {dimension_numbers = #tpu.dot_dimension_numbers<[1], [0], [0], [1], [0, 0, 1, 1], [], []>} : vector<56x128xf32>, vector<128x128xf32>, vector<56x128xf32> -> vector<56x128xf32>
    %53 = arith.maximumf %45, %48 : vector<56x128xf32>
    %54 = arith.maximumf %53, %52 : vector<56x128xf32>
    %55 = arith.subf %45, %54 : vector<56x128xf32>
    %56 = math.exp %55 : vector<56x128xf32>
    %57 = arith.subf %48, %54 : vector<56x128xf32>
    %58 = math.exp %57 : vector<56x128xf32>
    %59 = arith.subf %52, %54 : vector<56x128xf32>
    %60 = math.exp %59 : vector<56x128xf32>
    %61 = arith.addf %56, %58 : vector<56x128xf32>
    %62 = arith.addf %61, %60 : vector<56x128xf32>
    %63 = tpu.reciprocal %62 {approx = true} : vector<56x128xf32> -> vector<56x128xf32>
    %64 = arith.mulf %56, %63 : vector<56x128xf32>
    %65 = arith.mulf %64, %43 : vector<56x128xf32>
    %c64_i32_25 = arith.constant 64 : i32
    %66 = tpu.dynamic_rotate %43 by %c64_i32_25 dim 1 : vector<56x128xf32>, i32 -> vector<56x128xf32>
    %67 = arith.mulf %58, %63 : vector<56x128xf32>
    %68 = arith.mulf %67, %66 : vector<56x128xf32>
    %69 = arith.addf %65, %68 : vector<56x128xf32>
    %70 = arith.mulf %60, %63 : vector<56x128xf32>
    %c1470 = arith.constant 1470 : index
    %c0_26 = arith.constant 0 : index
    %71 = vector.load %arg2[%c1470, %c0_26] : memref<1496x128xf32, #tpu.memory_space<vmem>>, vector<1x128xf32>
    %72 = vector.broadcast %71 : vector<1x128xf32> to vector<56x128xf32>
    %73 = arith.mulf %70, %72 : vector<56x128xf32>
    %74 = arith.addf %69, %73 : vector<56x128xf32>
    %cst_27 = arith.constant dense<0.000000e+00> : vector<56x128xf32>
    %75 = tpu.matmul %74, %29, %cst_27 {dimension_numbers = #tpu.dot_dimension_numbers<[1], [0], [0], [1], [0, 0, 1, 1], [], []>} : vector<56x128xf32>, vector<128x128xf32>, vector<56x128xf32> -> vector<56x128xf32>
    %c1471 = arith.constant 1471 : index
    %c0_28 = arith.constant 0 : index
    %76 = vector.load %arg2[%c1471, %c0_28] : memref<1496x128xf32, #tpu.memory_space<vmem>>, vector<1x128xf32>
    %77 = vector.broadcast %76 : vector<1x128xf32> to vector<56x128xf32>
    %78 = arith.addf %75, %77 : vector<56x128xf32>
    %79 = arith.addf %78, %4 : vector<56x128xf32>
    %c1208_29 = arith.constant 1208 : index
    %c0_30 = arith.constant 0 : index
    %80 = vector.load %arg2[%c1208_29, %c0_30] : memref<1496x128xf32, #tpu.memory_space<vmem>>, vector<128x128xf32>
    %cst_31 = arith.constant dense<0.000000e+00> : vector<56x128xf32>
    %81 = tpu.matmul %79, %80, %cst_31 {dimension_numbers = #tpu.dot_dimension_numbers<[1], [0], [0], [1], [0, 0, 1, 1], [], []>} : vector<56x128xf32>, vector<128x128xf32>, vector<56x128xf32> -> vector<56x128xf32>
    %82 = arith.mulf %79, %79 : vector<56x128xf32>
    %cst_32 = arith.constant dense<0.000000e+00> : vector<56x128xf32>
    %83 = tpu.matmul %82, %80, %cst_32 {dimension_numbers = #tpu.dot_dimension_numbers<[1], [0], [0], [1], [0, 0, 1, 1], [], []>} : vector<56x128xf32>, vector<128x128xf32>, vector<56x128xf32> -> vector<56x128xf32>
    %cst_33 = arith.constant 1.562500e-02 : f32
    %84 = vector.broadcast %cst_33 : f32 to vector<56x128xf32>
    %85 = arith.mulf %81, %84 : vector<56x128xf32>
    %cst_34 = arith.constant 1.562500e-02 : f32
    %86 = vector.broadcast %cst_34 : f32 to vector<56x128xf32>
    %87 = arith.mulf %83, %86 : vector<56x128xf32>
    %88 = arith.mulf %85, %85 : vector<56x128xf32>
    %89 = arith.subf %87, %88 : vector<56x128xf32>
    %cst_35 = arith.constant 0.000000e+00 : f32
    %90 = vector.broadcast %cst_35 : f32 to vector<56x128xf32>
    %91 = arith.maximumf %89, %90 : vector<56x128xf32>
    %92 = arith.subf %79, %85 : vector<56x128xf32>
    %cst_36 = arith.constant 9.99999974E-6 : f32
    %93 = vector.broadcast %cst_36 : f32 to vector<56x128xf32>
    %94 = arith.addf %91, %93 : vector<56x128xf32>
    %95 = math.rsqrt %94 : vector<56x128xf32>
    %96 = arith.mulf %92, %95 : vector<56x128xf32>
    %c1472 = arith.constant 1472 : index
    %c0_37 = arith.constant 0 : index
    %97 = vector.load %arg2[%c1472, %c0_37] : memref<1496x128xf32, #tpu.memory_space<vmem>>, vector<1x128xf32>
    %98 = vector.broadcast %97 : vector<1x128xf32> to vector<56x128xf32>
    %99 = arith.mulf %96, %98 : vector<56x128xf32>
    %c1473 = arith.constant 1473 : index
    %c0_38 = arith.constant 0 : index
    %100 = vector.load %arg2[%c1473, %c0_38] : memref<1496x128xf32, #tpu.memory_space<vmem>>, vector<1x128xf32>
    %101 = vector.broadcast %100 : vector<1x128xf32> to vector<56x128xf32>
    %102 = arith.addf %99, %101 : vector<56x128xf32>
    %c184 = arith.constant 184 : index
    %c0_39 = arith.constant 0 : index
    %103 = vector.load %arg2[%c184, %c0_39] : memref<1496x128xf32, #tpu.memory_space<vmem>>, vector<128x128xf32>
    %c312 = arith.constant 312 : index
    %c0_40 = arith.constant 0 : index
    %104 = vector.load %arg2[%c312, %c0_40] : memref<1496x128xf32, #tpu.memory_space<vmem>>, vector<128x128xf32>
    %cst_41 = arith.constant dense<0.000000e+00> : vector<56x128xf32>
    %105 = tpu.matmul %102, %103, %cst_41 {dimension_numbers = #tpu.dot_dimension_numbers<[1], [0], [0], [1], [0, 0, 1, 1], [], []>} : vector<56x128xf32>, vector<128x128xf32>, vector<56x128xf32> -> vector<56x128xf32>
    %c1474 = arith.constant 1474 : index
    %c0_42 = arith.constant 0 : index
    %106 = vector.load %arg2[%c1474, %c0_42] : memref<1496x128xf32, #tpu.memory_space<vmem>>, vector<1x128xf32>
    %107 = vector.broadcast %106 : vector<1x128xf32> to vector<56x128xf32>
    %108 = arith.addf %105, %107 : vector<56x128xf32>
    %cst_43 = arith.constant 5.000000e-01 : f32
    %109 = vector.broadcast %cst_43 : f32 to vector<56x128xf32>
    %110 = arith.mulf %109, %108 : vector<56x128xf32>
    %cst_44 = arith.constant 0.707106769 : f32
    %111 = vector.broadcast %cst_44 : f32 to vector<56x128xf32>
    %112 = arith.mulf %108, %111 : vector<56x128xf32>
    %113 = math.absf %112 : vector<56x128xf32>
    %cst_45 = arith.constant 0.327591091 : f32
    %114 = vector.broadcast %cst_45 : f32 to vector<56x128xf32>
    %115 = arith.mulf %114, %113 : vector<56x128xf32>
    %cst_46 = arith.constant 1.000000e+00 : f32
    %116 = vector.broadcast %cst_46 : f32 to vector<56x128xf32>
    %117 = arith.addf %116, %115 : vector<56x128xf32>
    %118 = tpu.reciprocal %117 {approx = true} : vector<56x128xf32> -> vector<56x128xf32>
    %119 = arith.mulf %117, %118 : vector<56x128xf32>
    %cst_47 = arith.constant 2.000000e+00 : f32
    %120 = vector.broadcast %cst_47 : f32 to vector<56x128xf32>
    %121 = arith.subf %120, %119 : vector<56x128xf32>
    %122 = arith.mulf %118, %121 : vector<56x128xf32>
    %cst_48 = arith.constant 1.06140542 : f32
    %123 = vector.broadcast %cst_48 : f32 to vector<56x128xf32>
    %124 = arith.mulf %123, %122 : vector<56x128xf32>
    %cst_49 = arith.constant -1.45315206 : f32
    %125 = vector.broadcast %cst_49 : f32 to vector<56x128xf32>
    %126 = arith.addf %124, %125 : vector<56x128xf32>
    %127 = arith.mulf %126, %122 : vector<56x128xf32>
    %cst_50 = arith.constant 1.42141378 : f32
    %128 = vector.broadcast %cst_50 : f32 to vector<56x128xf32>
    %129 = arith.addf %127, %128 : vector<56x128xf32>
    %130 = arith.mulf %129, %122 : vector<56x128xf32>
    %cst_51 = arith.constant -0.284496725 : f32
    %131 = vector.broadcast %cst_51 : f32 to vector<56x128xf32>
    %132 = arith.addf %130, %131 : vector<56x128xf32>
    %133 = arith.mulf %132, %122 : vector<56x128xf32>
    %cst_52 = arith.constant 0.254829586 : f32
    %134 = vector.broadcast %cst_52 : f32 to vector<56x128xf32>
    %135 = arith.addf %133, %134 : vector<56x128xf32>
    %136 = arith.mulf %135, %122 : vector<56x128xf32>
    %cst_53 = arith.constant 0.000000e+00 : f32
    %137 = vector.broadcast %cst_53 : f32 to vector<56x128xf32>
    %138 = arith.subf %137, %113 : vector<56x128xf32>
    %139 = arith.mulf %138, %113 : vector<56x128xf32>
    %140 = math.exp %139 : vector<56x128xf32>
    %141 = arith.mulf %136, %140 : vector<56x128xf32>
    %cst_54 = arith.constant 1.000000e+00 : f32
    %142 = vector.broadcast %cst_54 : f32 to vector<56x128xf32>
    %143 = arith.subf %142, %141 : vector<56x128xf32>
    %cst_55 = arith.constant 0.000000e+00 : f32
    %144 = vector.broadcast %cst_55 : f32 to vector<56x128xf32>
    %145 = arith.cmpf oge, %112, %144 : vector<56x128xf32>
    %cst_56 = arith.constant 0.000000e+00 : f32
    %146 = vector.broadcast %cst_56 : f32 to vector<56x128xf32>
    %147 = arith.subf %146, %143 : vector<56x128xf32>
    %148 = arith.select %145, %143, %147 : vector<56x128xi1>, vector<56x128xf32>
    %cst_57 = arith.constant 1.000000e+00 : f32
    %149 = vector.broadcast %cst_57 : f32 to vector<56x128xf32>
    %150 = arith.addf %149, %148 : vector<56x128xf32>
    %151 = arith.mulf %110, %150 : vector<56x128xf32>
    %cst_58 = arith.constant dense<0.000000e+00> : vector<56x128xf32>
    %152 = tpu.matmul %151, %104, %cst_58 {dimension_numbers = #tpu.dot_dimension_numbers<[1], [0], [0], [1], [0, 0, 1, 1], [], []>} : vector<56x128xf32>, vector<128x128xf32>, vector<56x128xf32> -> vector<56x128xf32>
    %c1475 = arith.constant 1475 : index
    %c0_59 = arith.constant 0 : index
    %153 = vector.load %arg2[%c1475, %c0_59] : memref<1496x128xf32, #tpu.memory_space<vmem>>, vector<1x128xf32>
    %154 = vector.broadcast %153 : vector<1x128xf32> to vector<56x128xf32>
    %155 = arith.addf %152, %154 : vector<56x128xf32>
    %156 = arith.addf %155, %79 : vector<56x128xf32>
    %c1208_60 = arith.constant 1208 : index
    %c0_61 = arith.constant 0 : index
    %157 = vector.load %arg2[%c1208_60, %c0_61] : memref<1496x128xf32, #tpu.memory_space<vmem>>, vector<128x128xf32>
    %cst_62 = arith.constant dense<0.000000e+00> : vector<56x128xf32>
    %158 = tpu.matmul %156, %157, %cst_62 {dimension_numbers = #tpu.dot_dimension_numbers<[1], [0], [0], [1], [0, 0, 1, 1], [], []>} : vector<56x128xf32>, vector<128x128xf32>, vector<56x128xf32> -> vector<56x128xf32>
    %159 = arith.mulf %156, %156 : vector<56x128xf32>
    %cst_63 = arith.constant dense<0.000000e+00> : vector<56x128xf32>
    %160 = tpu.matmul %159, %157, %cst_63 {dimension_numbers = #tpu.dot_dimension_numbers<[1], [0], [0], [1], [0, 0, 1, 1], [], []>} : vector<56x128xf32>, vector<128x128xf32>, vector<56x128xf32> -> vector<56x128xf32>
    %cst_64 = arith.constant 1.562500e-02 : f32
    %161 = vector.broadcast %cst_64 : f32 to vector<56x128xf32>
    %162 = arith.mulf %158, %161 : vector<56x128xf32>
    %cst_65 = arith.constant 1.562500e-02 : f32
    %163 = vector.broadcast %cst_65 : f32 to vector<56x128xf32>
    %164 = arith.mulf %160, %163 : vector<56x128xf32>
    %165 = arith.mulf %162, %162 : vector<56x128xf32>
    %166 = arith.subf %164, %165 : vector<56x128xf32>
    %cst_66 = arith.constant 0.000000e+00 : f32
    %167 = vector.broadcast %cst_66 : f32 to vector<56x128xf32>
    %168 = arith.maximumf %166, %167 : vector<56x128xf32>
    %169 = arith.subf %156, %162 : vector<56x128xf32>
    %cst_67 = arith.constant 9.99999974E-6 : f32
    %170 = vector.broadcast %cst_67 : f32 to vector<56x128xf32>
    %171 = arith.addf %168, %170 : vector<56x128xf32>
    %172 = math.rsqrt %171 : vector<56x128xf32>
    %173 = arith.mulf %169, %172 : vector<56x128xf32>
    %c1476 = arith.constant 1476 : index
    %c0_68 = arith.constant 0 : index
    %174 = vector.load %arg2[%c1476, %c0_68] : memref<1496x128xf32, #tpu.memory_space<vmem>>, vector<1x128xf32>
    %175 = vector.broadcast %174 : vector<1x128xf32> to vector<56x128xf32>
    %176 = arith.mulf %173, %175 : vector<56x128xf32>
    %c1477 = arith.constant 1477 : index
    %c0_69 = arith.constant 0 : index
    %177 = vector.load %arg2[%c1477, %c0_69] : memref<1496x128xf32, #tpu.memory_space<vmem>>, vector<1x128xf32>
    %178 = vector.broadcast %177 : vector<1x128xf32> to vector<56x128xf32>
    %179 = arith.addf %176, %178 : vector<56x128xf32>
    %c128 = arith.constant 128 : index
    %c0_70 = arith.constant 0 : index
    %180 = vector.load %arg1[%c128, %c0_70] : memref<256x384xf32, #tpu.memory_space<vmem>>, vector<128x384xf32>
    %c440 = arith.constant 440 : index
    %c0_71 = arith.constant 0 : index
    %181 = vector.load %arg2[%c440, %c0_71] : memref<1496x128xf32, #tpu.memory_space<vmem>>, vector<128x128xf32>
    %c1336_72 = arith.constant 1336 : index
    %c0_73 = arith.constant 0 : index
    %182 = vector.load %arg2[%c1336_72, %c0_73] : memref<1496x128xf32, #tpu.memory_space<vmem>>, vector<128x128xf32>
    %cst_74 = arith.constant dense<0.000000e+00> : vector<56x384xf32>
    %183 = tpu.matmul %179, %180, %cst_74 {dimension_numbers = #tpu.dot_dimension_numbers<[1], [0], [0], [1], [0, 0, 1, 1], [], []>} : vector<56x128xf32>, vector<128x384xf32>, vector<56x384xf32> -> vector<56x384xf32>
    %184 = vector.extract_strided_slice %183 {offsets = [0, 0], sizes = [56, 128], strides = [1, 1]} : vector<56x384xf32> to vector<56x128xf32>
    %c1478 = arith.constant 1478 : index
    %c0_75 = arith.constant 0 : index
    %185 = vector.load %arg2[%c1478, %c0_75] : memref<1496x128xf32, #tpu.memory_space<vmem>>, vector<1x128xf32>
    %186 = vector.broadcast %185 : vector<1x128xf32> to vector<56x128xf32>
    %187 = arith.addf %184, %186 : vector<56x128xf32>
    %188 = vector.extract_strided_slice %183 {offsets = [0, 128], sizes = [56, 128], strides = [1, 1]} : vector<56x384xf32> to vector<56x128xf32>
    %c1479 = arith.constant 1479 : index
    %c0_76 = arith.constant 0 : index
    %189 = vector.load %arg2[%c1479, %c0_76] : memref<1496x128xf32, #tpu.memory_space<vmem>>, vector<1x128xf32>
    %190 = vector.broadcast %189 : vector<1x128xf32> to vector<56x128xf32>
    %191 = arith.addf %188, %190 : vector<56x128xf32>
    %192 = vector.extract_strided_slice %183 {offsets = [0, 256], sizes = [56, 128], strides = [1, 1]} : vector<56x384xf32> to vector<56x128xf32>
    %c1480 = arith.constant 1480 : index
    %c0_77 = arith.constant 0 : index
    %193 = vector.load %arg2[%c1480, %c0_77] : memref<1496x128xf32, #tpu.memory_space<vmem>>, vector<1x128xf32>
    %194 = vector.broadcast %193 : vector<1x128xf32> to vector<56x128xf32>
    %195 = arith.addf %192, %194 : vector<56x128xf32>
    %196 = arith.mulf %187, %191 : vector<56x128xf32>
    %cst_78 = arith.constant dense<0.000000e+00> : vector<56x128xf32>
    %197 = tpu.matmul %196, %182, %cst_78 {dimension_numbers = #tpu.dot_dimension_numbers<[1], [0], [0], [1], [0, 0, 1, 1], [], []>} : vector<56x128xf32>, vector<128x128xf32>, vector<56x128xf32> -> vector<56x128xf32>
    %c64_i32_79 = arith.constant 64 : i32
    %198 = tpu.dynamic_rotate %191 by %c64_i32_79 dim 1 : vector<56x128xf32>, i32 -> vector<56x128xf32>
    %199 = arith.mulf %187, %198 : vector<56x128xf32>
    %cst_80 = arith.constant dense<0.000000e+00> : vector<56x128xf32>
    %200 = tpu.matmul %199, %182, %cst_80 {dimension_numbers = #tpu.dot_dimension_numbers<[1], [0], [0], [1], [0, 0, 1, 1], [], []>} : vector<56x128xf32>, vector<128x128xf32>, vector<56x128xf32> -> vector<56x128xf32>
    %c1481 = arith.constant 1481 : index
    %c0_81 = arith.constant 0 : index
    %201 = vector.load %arg2[%c1481, %c0_81] : memref<1496x128xf32, #tpu.memory_space<vmem>>, vector<1x128xf32>
    %202 = vector.broadcast %201 : vector<1x128xf32> to vector<56x128xf32>
    %203 = arith.mulf %187, %202 : vector<56x128xf32>
    %cst_82 = arith.constant dense<0.000000e+00> : vector<56x128xf32>
    %204 = tpu.matmul %203, %182, %cst_82 {dimension_numbers = #tpu.dot_dimension_numbers<[1], [0], [0], [1], [0, 0, 1, 1], [], []>} : vector<56x128xf32>, vector<128x128xf32>, vector<56x128xf32> -> vector<56x128xf32>
    %205 = arith.maximumf %197, %200 : vector<56x128xf32>
    %206 = arith.maximumf %205, %204 : vector<56x128xf32>
    %207 = arith.subf %197, %206 : vector<56x128xf32>
    %208 = math.exp %207 : vector<56x128xf32>
    %209 = arith.subf %200, %206 : vector<56x128xf32>
    %210 = math.exp %209 : vector<56x128xf32>
    %211 = arith.subf %204, %206 : vector<56x128xf32>
    %212 = math.exp %211 : vector<56x128xf32>
    %213 = arith.addf %208, %210 : vector<56x128xf32>
    %214 = arith.addf %213, %212 : vector<56x128xf32>
    %215 = tpu.reciprocal %214 {approx = true} : vector<56x128xf32> -> vector<56x128xf32>
    %216 = arith.mulf %208, %215 : vector<56x128xf32>
    %217 = arith.mulf %216, %195 : vector<56x128xf32>
    %c64_i32_83 = arith.constant 64 : i32
    %218 = tpu.dynamic_rotate %195 by %c64_i32_83 dim 1 : vector<56x128xf32>, i32 -> vector<56x128xf32>
    %219 = arith.mulf %210, %215 : vector<56x128xf32>
    %220 = arith.mulf %219, %218 : vector<56x128xf32>
    %221 = arith.addf %217, %220 : vector<56x128xf32>
    %222 = arith.mulf %212, %215 : vector<56x128xf32>
    %c1482 = arith.constant 1482 : index
    %c0_84 = arith.constant 0 : index
    %223 = vector.load %arg2[%c1482, %c0_84] : memref<1496x128xf32, #tpu.memory_space<vmem>>, vector<1x128xf32>
    %224 = vector.broadcast %223 : vector<1x128xf32> to vector<56x128xf32>
    %225 = arith.mulf %222, %224 : vector<56x128xf32>
    %226 = arith.addf %221, %225 : vector<56x128xf32>
    %cst_85 = arith.constant dense<0.000000e+00> : vector<56x128xf32>
    %227 = tpu.matmul %226, %181, %cst_85 {dimension_numbers = #tpu.dot_dimension_numbers<[1], [0], [0], [1], [0, 0, 1, 1], [], []>} : vector<56x128xf32>, vector<128x128xf32>, vector<56x128xf32> -> vector<56x128xf32>
    %c1483 = arith.constant 1483 : index
    %c0_86 = arith.constant 0 : index
    %228 = vector.load %arg2[%c1483, %c0_86] : memref<1496x128xf32, #tpu.memory_space<vmem>>, vector<1x128xf32>
    %229 = vector.broadcast %228 : vector<1x128xf32> to vector<56x128xf32>
    %230 = arith.addf %227, %229 : vector<56x128xf32>
    %231 = arith.addf %230, %179 : vector<56x128xf32>
    %c1208_87 = arith.constant 1208 : index
    %c0_88 = arith.constant 0 : index
    %232 = vector.load %arg2[%c1208_87, %c0_88] : memref<1496x128xf32, #tpu.memory_space<vmem>>, vector<128x128xf32>
    %cst_89 = arith.constant dense<0.000000e+00> : vector<56x128xf32>
    %233 = tpu.matmul %231, %232, %cst_89 {dimension_numbers = #tpu.dot_dimension_numbers<[1], [0], [0], [1], [0, 0, 1, 1], [], []>} : vector<56x128xf32>, vector<128x128xf32>, vector<56x128xf32> -> vector<56x128xf32>
    %234 = arith.mulf %231, %231 : vector<56x128xf32>
    %cst_90 = arith.constant dense<0.000000e+00> : vector<56x128xf32>
    %235 = tpu.matmul %234, %232, %cst_90 {dimension_numbers = #tpu.dot_dimension_numbers<[1], [0], [0], [1], [0, 0, 1, 1], [], []>} : vector<56x128xf32>, vector<128x128xf32>, vector<56x128xf32> -> vector<56x128xf32>
    %cst_91 = arith.constant 1.562500e-02 : f32
    %236 = vector.broadcast %cst_91 : f32 to vector<56x128xf32>
    %237 = arith.mulf %233, %236 : vector<56x128xf32>
    %cst_92 = arith.constant 1.562500e-02 : f32
    %238 = vector.broadcast %cst_92 : f32 to vector<56x128xf32>
    %239 = arith.mulf %235, %238 : vector<56x128xf32>
    %240 = arith.mulf %237, %237 : vector<56x128xf32>
    %241 = arith.subf %239, %240 : vector<56x128xf32>
    %cst_93 = arith.constant 0.000000e+00 : f32
    %242 = vector.broadcast %cst_93 : f32 to vector<56x128xf32>
    %243 = arith.maximumf %241, %242 : vector<56x128xf32>
    %244 = arith.subf %231, %237 : vector<56x128xf32>
    %cst_94 = arith.constant 9.99999974E-6 : f32
    %245 = vector.broadcast %cst_94 : f32 to vector<56x128xf32>
    %246 = arith.addf %243, %245 : vector<56x128xf32>
    %247 = math.rsqrt %246 : vector<56x128xf32>
    %248 = arith.mulf %244, %247 : vector<56x128xf32>
    %c1484 = arith.constant 1484 : index
    %c0_95 = arith.constant 0 : index
    %249 = vector.load %arg2[%c1484, %c0_95] : memref<1496x128xf32, #tpu.memory_space<vmem>>, vector<1x128xf32>
    %250 = vector.broadcast %249 : vector<1x128xf32> to vector<56x128xf32>
    %251 = arith.mulf %248, %250 : vector<56x128xf32>
    %c1485 = arith.constant 1485 : index
    %c0_96 = arith.constant 0 : index
    %252 = vector.load %arg2[%c1485, %c0_96] : memref<1496x128xf32, #tpu.memory_space<vmem>>, vector<1x128xf32>
    %253 = vector.broadcast %252 : vector<1x128xf32> to vector<56x128xf32>
    %254 = arith.addf %251, %253 : vector<56x128xf32>
    %c568 = arith.constant 568 : index
    %c0_97 = arith.constant 0 : index
    %255 = vector.load %arg2[%c568, %c0_97] : memref<1496x128xf32, #tpu.memory_space<vmem>>, vector<128x128xf32>
    %c696 = arith.constant 696 : index
    %c0_98 = arith.constant 0 : index
    %256 = vector.load %arg2[%c696, %c0_98] : memref<1496x128xf32, #tpu.memory_space<vmem>>, vector<128x128xf32>
    %cst_99 = arith.constant dense<0.000000e+00> : vector<56x128xf32>
    %257 = tpu.matmul %254, %255, %cst_99 {dimension_numbers = #tpu.dot_dimension_numbers<[1], [0], [0], [1], [0, 0, 1, 1], [], []>} : vector<56x128xf32>, vector<128x128xf32>, vector<56x128xf32> -> vector<56x128xf32>
    %c1486 = arith.constant 1486 : index
    %c0_100 = arith.constant 0 : index
    %258 = vector.load %arg2[%c1486, %c0_100] : memref<1496x128xf32, #tpu.memory_space<vmem>>, vector<1x128xf32>
    %259 = vector.broadcast %258 : vector<1x128xf32> to vector<56x128xf32>
    %260 = arith.addf %257, %259 : vector<56x128xf32>
    %cst_101 = arith.constant 5.000000e-01 : f32
    %261 = vector.broadcast %cst_101 : f32 to vector<56x128xf32>
    %262 = arith.mulf %261, %260 : vector<56x128xf32>
    %cst_102 = arith.constant 0.707106769 : f32
    %263 = vector.broadcast %cst_102 : f32 to vector<56x128xf32>
    %264 = arith.mulf %260, %263 : vector<56x128xf32>
    %265 = math.absf %264 : vector<56x128xf32>
    %cst_103 = arith.constant 0.327591091 : f32
    %266 = vector.broadcast %cst_103 : f32 to vector<56x128xf32>
    %267 = arith.mulf %266, %265 : vector<56x128xf32>
    %cst_104 = arith.constant 1.000000e+00 : f32
    %268 = vector.broadcast %cst_104 : f32 to vector<56x128xf32>
    %269 = arith.addf %268, %267 : vector<56x128xf32>
    %270 = tpu.reciprocal %269 {approx = true} : vector<56x128xf32> -> vector<56x128xf32>
    %271 = arith.mulf %269, %270 : vector<56x128xf32>
    %cst_105 = arith.constant 2.000000e+00 : f32
    %272 = vector.broadcast %cst_105 : f32 to vector<56x128xf32>
    %273 = arith.subf %272, %271 : vector<56x128xf32>
    %274 = arith.mulf %270, %273 : vector<56x128xf32>
    %cst_106 = arith.constant 1.06140542 : f32
    %275 = vector.broadcast %cst_106 : f32 to vector<56x128xf32>
    %276 = arith.mulf %275, %274 : vector<56x128xf32>
    %cst_107 = arith.constant -1.45315206 : f32
    %277 = vector.broadcast %cst_107 : f32 to vector<56x128xf32>
    %278 = arith.addf %276, %277 : vector<56x128xf32>
    %279 = arith.mulf %278, %274 : vector<56x128xf32>
    %cst_108 = arith.constant 1.42141378 : f32
    %280 = vector.broadcast %cst_108 : f32 to vector<56x128xf32>
    %281 = arith.addf %279, %280 : vector<56x128xf32>
    %282 = arith.mulf %281, %274 : vector<56x128xf32>
    %cst_109 = arith.constant -0.284496725 : f32
    %283 = vector.broadcast %cst_109 : f32 to vector<56x128xf32>
    %284 = arith.addf %282, %283 : vector<56x128xf32>
    %285 = arith.mulf %284, %274 : vector<56x128xf32>
    %cst_110 = arith.constant 0.254829586 : f32
    %286 = vector.broadcast %cst_110 : f32 to vector<56x128xf32>
    %287 = arith.addf %285, %286 : vector<56x128xf32>
    %288 = arith.mulf %287, %274 : vector<56x128xf32>
    %cst_111 = arith.constant 0.000000e+00 : f32
    %289 = vector.broadcast %cst_111 : f32 to vector<56x128xf32>
    %290 = arith.subf %289, %265 : vector<56x128xf32>
    %291 = arith.mulf %290, %265 : vector<56x128xf32>
    %292 = math.exp %291 : vector<56x128xf32>
    %293 = arith.mulf %288, %292 : vector<56x128xf32>
    %cst_112 = arith.constant 1.000000e+00 : f32
    %294 = vector.broadcast %cst_112 : f32 to vector<56x128xf32>
    %295 = arith.subf %294, %293 : vector<56x128xf32>
    %cst_113 = arith.constant 0.000000e+00 : f32
    %296 = vector.broadcast %cst_113 : f32 to vector<56x128xf32>
    %297 = arith.cmpf oge, %264, %296 : vector<56x128xf32>
    %cst_114 = arith.constant 0.000000e+00 : f32
    %298 = vector.broadcast %cst_114 : f32 to vector<56x128xf32>
    %299 = arith.subf %298, %295 : vector<56x128xf32>
    %300 = arith.select %297, %295, %299 : vector<56x128xi1>, vector<56x128xf32>
    %cst_115 = arith.constant 1.000000e+00 : f32
    %301 = vector.broadcast %cst_115 : f32 to vector<56x128xf32>
    %302 = arith.addf %301, %300 : vector<56x128xf32>
    %303 = arith.mulf %262, %302 : vector<56x128xf32>
    %cst_116 = arith.constant dense<0.000000e+00> : vector<56x128xf32>
    %304 = tpu.matmul %303, %256, %cst_116 {dimension_numbers = #tpu.dot_dimension_numbers<[1], [0], [0], [1], [0, 0, 1, 1], [], []>} : vector<56x128xf32>, vector<128x128xf32>, vector<56x128xf32> -> vector<56x128xf32>
    %c1487 = arith.constant 1487 : index
    %c0_117 = arith.constant 0 : index
    %305 = vector.load %arg2[%c1487, %c0_117] : memref<1496x128xf32, #tpu.memory_space<vmem>>, vector<1x128xf32>
    %306 = vector.broadcast %305 : vector<1x128xf32> to vector<56x128xf32>
    %307 = arith.addf %304, %306 : vector<56x128xf32>
    %308 = arith.addf %307, %231 : vector<56x128xf32>
    %c1208_118 = arith.constant 1208 : index
    %c0_119 = arith.constant 0 : index
    %309 = vector.load %arg2[%c1208_118, %c0_119] : memref<1496x128xf32, #tpu.memory_space<vmem>>, vector<128x128xf32>
    %cst_120 = arith.constant dense<0.000000e+00> : vector<56x128xf32>
    %310 = tpu.matmul %308, %309, %cst_120 {dimension_numbers = #tpu.dot_dimension_numbers<[1], [0], [0], [1], [0, 0, 1, 1], [], []>} : vector<56x128xf32>, vector<128x128xf32>, vector<56x128xf32> -> vector<56x128xf32>
    %311 = arith.mulf %308, %308 : vector<56x128xf32>
    %cst_121 = arith.constant dense<0.000000e+00> : vector<56x128xf32>
    %312 = tpu.matmul %311, %309, %cst_121 {dimension_numbers = #tpu.dot_dimension_numbers<[1], [0], [0], [1], [0, 0, 1, 1], [], []>} : vector<56x128xf32>, vector<128x128xf32>, vector<56x128xf32> -> vector<56x128xf32>
    %cst_122 = arith.constant 1.562500e-02 : f32
    %313 = vector.broadcast %cst_122 : f32 to vector<56x128xf32>
    %314 = arith.mulf %310, %313 : vector<56x128xf32>
    %cst_123 = arith.constant 1.562500e-02 : f32
    %315 = vector.broadcast %cst_123 : f32 to vector<56x128xf32>
    %316 = arith.mulf %312, %315 : vector<56x128xf32>
    %317 = arith.mulf %314, %314 : vector<56x128xf32>
    %318 = arith.subf %316, %317 : vector<56x128xf32>
    %cst_124 = arith.constant 0.000000e+00 : f32
    %319 = vector.broadcast %cst_124 : f32 to vector<56x128xf32>
    %320 = arith.maximumf %318, %319 : vector<56x128xf32>
    %321 = arith.subf %308, %314 : vector<56x128xf32>
    %cst_125 = arith.constant 9.99999974E-6 : f32
    %322 = vector.broadcast %cst_125 : f32 to vector<56x128xf32>
    %323 = arith.addf %320, %322 : vector<56x128xf32>
    %324 = math.rsqrt %323 : vector<56x128xf32>
    %325 = arith.mulf %321, %324 : vector<56x128xf32>
    %c1488 = arith.constant 1488 : index
    %c0_126 = arith.constant 0 : index
    %326 = vector.load %arg2[%c1488, %c0_126] : memref<1496x128xf32, #tpu.memory_space<vmem>>, vector<1x128xf32>
    %327 = vector.broadcast %326 : vector<1x128xf32> to vector<56x128xf32>
    %328 = arith.mulf %325, %327 : vector<56x128xf32>
    %c1489 = arith.constant 1489 : index
    %c0_127 = arith.constant 0 : index
    %329 = vector.load %arg2[%c1489, %c0_127] : memref<1496x128xf32, #tpu.memory_space<vmem>>, vector<1x128xf32>
    %330 = vector.broadcast %329 : vector<1x128xf32> to vector<56x128xf32>
    %331 = arith.addf %328, %330 : vector<56x128xf32>
    %332 = tpu.iota {dimensions = array<i32: 0>} : vector<56x128xi32>
    %c50_i32 = arith.constant 50 : i32
    %333 = vector.broadcast %c50_i32 : i32 to vector<56x128xi32>
    %334 = arith.cmpi slt, %332, %333 : vector<56x128xi32>
    %cst_128 = arith.constant 0.000000e+00 : f32
    %335 = vector.broadcast %cst_128 : f32 to vector<56x128xf32>
    %336 = arith.select %334, %331, %335 : vector<56x128xi1>, vector<56x128xf32>
    %cst_129 = arith.constant dense<0.000000e+00> : vector<128xf32>
    %337 = vector.multi_reduction <add>, %336, %cst_129 [0] : vector<56x128xf32> to vector<128xf32>
    %338 = vector.shape_cast %337 : vector<128xf32> to vector<1x128xf32>
    %cst_130 = arith.constant 2.000000e-02 : f32
    %339 = vector.broadcast %cst_130 : f32 to vector<1x128xf32>
    %340 = arith.mulf %338, %339 : vector<1x128xf32>
    %341 = vector.shape_cast %340 : vector<1x128xf32> to vector<1x128xf32>
    %342 = vector.broadcast %341 : vector<1x128xf32> to vector<8x128xf32>
    %c824 = arith.constant 824 : index
    %c0_131 = arith.constant 0 : index
    %343 = vector.load %arg2[%c824, %c0_131] : memref<1496x128xf32, #tpu.memory_space<vmem>>, vector<128x128xf32>
    %cst_132 = arith.constant dense<0.000000e+00> : vector<8x128xf32>
    %344 = tpu.matmul %342, %343, %cst_132 {dimension_numbers = #tpu.dot_dimension_numbers<[1], [0], [0], [1], [0, 0, 1, 1], [], []>} : vector<8x128xf32>, vector<128x128xf32>, vector<8x128xf32> -> vector<8x128xf32>
    %c1490 = arith.constant 1490 : index
    %c0_133 = arith.constant 0 : index
    %345 = vector.load %arg2[%c1490, %c0_133] : memref<1496x128xf32, #tpu.memory_space<vmem>>, vector<1x128xf32>
    %346 = vector.broadcast %345 : vector<1x128xf32> to vector<8x128xf32>
    %347 = arith.addf %344, %346 : vector<8x128xf32>
    %cst_134 = arith.constant 5.000000e-01 : f32
    %348 = vector.broadcast %cst_134 : f32 to vector<8x128xf32>
    %349 = arith.mulf %348, %347 : vector<8x128xf32>
    %cst_135 = arith.constant 0.707106769 : f32
    %350 = vector.broadcast %cst_135 : f32 to vector<8x128xf32>
    %351 = arith.mulf %347, %350 : vector<8x128xf32>
    %352 = math.absf %351 : vector<8x128xf32>
    %cst_136 = arith.constant 0.327591091 : f32
    %353 = vector.broadcast %cst_136 : f32 to vector<8x128xf32>
    %354 = arith.mulf %353, %352 : vector<8x128xf32>
    %cst_137 = arith.constant 1.000000e+00 : f32
    %355 = vector.broadcast %cst_137 : f32 to vector<8x128xf32>
    %356 = arith.addf %355, %354 : vector<8x128xf32>
    %357 = tpu.reciprocal %356 {approx = true} : vector<8x128xf32> -> vector<8x128xf32>
    %358 = arith.mulf %356, %357 : vector<8x128xf32>
    %cst_138 = arith.constant 2.000000e+00 : f32
    %359 = vector.broadcast %cst_138 : f32 to vector<8x128xf32>
    %360 = arith.subf %359, %358 : vector<8x128xf32>
    %361 = arith.mulf %357, %360 : vector<8x128xf32>
    %cst_139 = arith.constant 1.06140542 : f32
    %362 = vector.broadcast %cst_139 : f32 to vector<8x128xf32>
    %363 = arith.mulf %362, %361 : vector<8x128xf32>
    %cst_140 = arith.constant -1.45315206 : f32
    %364 = vector.broadcast %cst_140 : f32 to vector<8x128xf32>
    %365 = arith.addf %363, %364 : vector<8x128xf32>
    %366 = arith.mulf %365, %361 : vector<8x128xf32>
    %cst_141 = arith.constant 1.42141378 : f32
    %367 = vector.broadcast %cst_141 : f32 to vector<8x128xf32>
    %368 = arith.addf %366, %367 : vector<8x128xf32>
    %369 = arith.mulf %368, %361 : vector<8x128xf32>
    %cst_142 = arith.constant -0.284496725 : f32
    %370 = vector.broadcast %cst_142 : f32 to vector<8x128xf32>
    %371 = arith.addf %369, %370 : vector<8x128xf32>
    %372 = arith.mulf %371, %361 : vector<8x128xf32>
    %cst_143 = arith.constant 0.254829586 : f32
    %373 = vector.broadcast %cst_143 : f32 to vector<8x128xf32>
    %374 = arith.addf %372, %373 : vector<8x128xf32>
    %375 = arith.mulf %374, %361 : vector<8x128xf32>
    %cst_144 = arith.constant 0.000000e+00 : f32
    %376 = vector.broadcast %cst_144 : f32 to vector<8x128xf32>
    %377 = arith.subf %376, %352 : vector<8x128xf32>
    %378 = arith.mulf %377, %352 : vector<8x128xf32>
    %379 = math.exp %378 : vector<8x128xf32>
    %380 = arith.mulf %375, %379 : vector<8x128xf32>
    %cst_145 = arith.constant 1.000000e+00 : f32
    %381 = vector.broadcast %cst_145 : f32 to vector<8x128xf32>
    %382 = arith.subf %381, %380 : vector<8x128xf32>
    %cst_146 = arith.constant 0.000000e+00 : f32
    %383 = vector.broadcast %cst_146 : f32 to vector<8x128xf32>
    %384 = arith.cmpf oge, %351, %383 : vector<8x128xf32>
    %cst_147 = arith.constant 0.000000e+00 : f32
    %385 = vector.broadcast %cst_147 : f32 to vector<8x128xf32>
    %386 = arith.subf %385, %382 : vector<8x128xf32>
    %387 = arith.select %384, %382, %386 : vector<8x128xi1>, vector<8x128xf32>
    %cst_148 = arith.constant 1.000000e+00 : f32
    %388 = vector.broadcast %cst_148 : f32 to vector<8x128xf32>
    %389 = arith.addf %388, %387 : vector<8x128xf32>
    %390 = arith.mulf %349, %389 : vector<8x128xf32>
    %c952 = arith.constant 952 : index
    %c0_149 = arith.constant 0 : index
    %391 = vector.load %arg2[%c952, %c0_149] : memref<1496x128xf32, #tpu.memory_space<vmem>>, vector<128x128xf32>
    %cst_150 = arith.constant dense<0.000000e+00> : vector<8x128xf32>
    %392 = tpu.matmul %390, %391, %cst_150 {dimension_numbers = #tpu.dot_dimension_numbers<[1], [0], [0], [1], [0, 0, 1, 1], [], []>} : vector<8x128xf32>, vector<128x128xf32>, vector<8x128xf32> -> vector<8x128xf32>
    %c1491 = arith.constant 1491 : index
    %c0_151 = arith.constant 0 : index
    %393 = vector.load %arg2[%c1491, %c0_151] : memref<1496x128xf32, #tpu.memory_space<vmem>>, vector<1x128xf32>
    %394 = vector.broadcast %393 : vector<1x128xf32> to vector<8x128xf32>
    %395 = arith.addf %392, %394 : vector<8x128xf32>
    %cst_152 = arith.constant dense<0xFF800000> : vector<8xf32>
    %396 = vector.multi_reduction <maximumf>, %395, %cst_152 [1] : vector<8x128xf32> to vector<8xf32>
    %397 = vector.shape_cast %396 : vector<8xf32> to vector<8x1xf32>
    %398 = vector.broadcast %397 : vector<8x1xf32> to vector<8x128xf32>
    %399 = arith.subf %395, %398 : vector<8x128xf32>
    %400 = math.exp %399 : vector<8x128xf32>
    %c1208_153 = arith.constant 1208 : index
    %c0_154 = arith.constant 0 : index
    %401 = vector.load %arg2[%c1208_153, %c0_154] : memref<1496x128xf32, #tpu.memory_space<vmem>>, vector<128x128xf32>
    %cst_155 = arith.constant dense<0.000000e+00> : vector<8x128xf32>
    %402 = tpu.matmul %400, %401, %cst_155 {dimension_numbers = #tpu.dot_dimension_numbers<[1], [0], [0], [1], [0, 0, 1, 1], [], []>} : vector<8x128xf32>, vector<128x128xf32>, vector<8x128xf32> -> vector<8x128xf32>
    %403 = arith.divf %400, %402 : vector<8x128xf32>
    %c0_156 = arith.constant 0 : index
    %c0_157 = arith.constant 0 : index
    %404 = vector.load %arg3[%c0_156, %c0_157] : memref<8x128xf32, #tpu.memory_space<vmem>>, vector<8x128xf32>
    tpu.vector_store %arg3[%c0_156, %c0_157], %403 {strides = array<i32>} : memref<8x128xf32, #tpu.memory_space<vmem>>, vector<8x128xf32>,
    return
  }
}

</mosaic_0001>

<llo_original>
// kernel: vit_forward.1
$region0: #{vit_forward.1}
  #allocation0 [shape = 'u32[]', space=smem, size = 0x4, offset = 0x4, fixed_abs, tag = 'smem constant byte address 0x4 - core index']
  #allocation1 [shape = 'u32[144,128]{1,0:T(1,128)}', space=vmem, size = 0x12000, scoped, tag = 'internal scratch']
  %s0 = inlined_call_operand.vmem [shape: f32[56,128], index: 0, kind: input, shape index: {}]
  %s1 = inlined_call_operand.vmem [shape: f32[256,384], index: 1, kind: input, shape index: {}]
  %s2 = inlined_call_operand.vmem [shape: f32[1496,128], index: 2, kind: input, shape index: {}]
  %s3 = inlined_call_operand.vmem [shape: f32[8,128], index: 3, kind: output, shape index: {}]
  %s4 = sld [smem:[#allocation0]]
  $region22: #{vit_forward.1} parent=0
    _
  %s6 = ssub.s32 1, %s4
  %s7 = scalar_select 0, %s6, %s4
  // Predicated region
  $region2: #{vit_forward.1} parent=0 // pred_check
    _
  $region3: #{vit_forward.1} parent=0 // pred_check_branch
    %9 = sbr.rel (0) target = $region5
  $region4: #{vit_forward.1} parent=0 // pred_region
    _
  $region5: #{vit_forward.1} parent=0 // pred_fallthru
    _
  // Predicated region
  $region6: #{vit_forward.1} parent=0 // pred_check
    _
  $region7: #{vit_forward.1} parent=0 // pred_check_branch
    %11 = sbr.rel (0) target = $region9
  $region8: #{vit_forward.1} parent=0 // pred_region
    _
  $region9: #{vit_forward.1} parent=0 // pred_fallthru
    _
  // Predicated region
  $region10: #{vit_forward.1} parent=0 // pred_check
    _
  $region11: #{vit_forward.1} parent=0 // pred_check_branch
    %13 = sbr.rel (0) target = $region13
  $region12: #{vit_forward.1} parent=0 // pred_region
    _
  $region13: #{vit_forward.1} parent=0 // pred_fallthru
    _
  %v14 = vld [vmem:[%s2] sm:$0xff]
  %v15 = vld [vmem:[%s2 + $0x8] sm:$0xff]
  %v16 = vld [vmem:[%s2 + $0x10] sm:$0xff]
  %v17 = vld [vmem:[%s2 + $0x18] sm:$0xff]
  %v18 = vld [vmem:[%s2 + $0x20] sm:$0xff]
  %v19 = vld [vmem:[%s2 + $0x28] sm:$0xff]
  %v20 = vld [vmem:[%s2 + $0x30] sm:$0xff]
  %v21 = vld [vmem:[%s0] sm:$0xff]
  %v22 = vld [vmem:[%s0 + $0x8] sm:$0xff]
  %v23 = vld [vmem:[%s0 + $0x10] sm:$0xff]
  %v24 = vld [vmem:[%s0 + $0x18] sm:$0xff]
  %v25 = vld [vmem:[%s0 + $0x20] sm:$0xff]
  %v26 = vld [vmem:[%s0 + $0x28] sm:$0xff]
  %v27 = vld [vmem:[%s0 + $0x30] sm:$0xff]
  %v28 = vld [vmem:[%s2 + $0x438] sm:$0xff]
  %v29 = vld [vmem:[%s2 + $0x440] sm:$0xff]
  %v30 = vld [vmem:[%s2 + $0x448] sm:$0xff]
  %v31 = vld [vmem:[%s2 + $0x450] sm:$0xff]
  %v32 = vld [vmem:[%s2 + $0x458] sm:$0xff]
  %v33 = vld [vmem:[%s2 + $0x460] sm:$0xff]
  %v34 = vld [vmem:[%s2 + $0x468] sm:$0xff]
  %v35 = vld [vmem:[%s2 + $0x470] sm:$0xff]
  %v36 = vld [vmem:[%s2 + $0x478] sm:$0xff]
  %v37 = vld [vmem:[%s2 + $0x480] sm:$0xff]
  %v38 = vld [vmem:[%s2 + $0x488] sm:$0xff]
  %v39 = vld [vmem:[%s2 + $0x490] sm:$0xff]
  %v40 = vld [vmem:[%s2 + $0x498] sm:$0xff]
  %v41 = vld [vmem:[%s2 + $0x4a0] sm:$0xff]
  %v42 = vld [vmem:[%s2 + $0x4a8] sm:$0xff]
  %v43 = vld [vmem:[%s2 + $0x4b0] sm:$0xff]
  %44 = vmatprep.subr.mxu0 0.0
  %45 = vmatpush1.msra.mxu0 %v43
  %46 = vmatprep.subr.mxu0 0.0
  %47 = vmatpush1.msra.mxu0 %v42
  %48 = vmatprep.subr.mxu0 0.0
  %49 = vmatpush1.msra.mxu0 %v41
  %50 = vmatprep.subr.mxu0 0.0
  %51 = vmatpush1.msra.mxu0 %v40
  %52 = vmatprep.subr.mxu0 0.0
  %53 = vmatpush1.msra.mxu0 %v39
  %54 = vmatprep.subr.mxu0 0.0
  %55 = vmatpush1.msra.mxu0 %v38
  %56 = vmatprep.subr.mxu0 0.0
  %57 = vmatpush1.msra.mxu0 %v37
  %58 = vmatprep.subr.mxu0 0.0
  %59 = vmatpush1.msra.mxu0 %v36
  %60 = vmatprep.subr.mxu0 0.0
  %61 = vmatpush1.msra.mxu0 %v35
  %62 = vmatprep.subr.mxu0 0.0
  %63 = vmatpush1.msra.mxu0 %v34
  %64 = vmatprep.subr.mxu0 0.0
  %65 = vmatpush1.msra.mxu0 %v33
  %66 = vmatprep.subr.mxu0 0.0
  %67 = vmatpush1.msra.mxu0 %v32
  %68 = vmatprep.subr.mxu0 0.0
  %69 = vmatpush1.msra.mxu0 %v31
  %70 = vmatprep.subr.mxu0 0.0
  %71 = vmatpush1.msra.mxu0 %v30
  %72 = vmatprep.subr.mxu0 0.0
  %73 = vmatpush1.msra.mxu0 %v29
  %74 = vmatprep.subr.mxu0 0.0
  %75 = vmatpush1.msra.mxu0 %v28
  %76 = vmatprep.subr.mxu0 0.0
  %77 = vmatpush2.msra.mxu0 0.0
  %78 = vmatprep.subr.mxu0 0.0
  %79 = vmatpush2.msra.mxu0 0.0
  %80 = vmatprep.subr.mxu0 0.0
  %81 = vmatpush2.msra.mxu0 0.0
  %82 = vmatprep.subr.mxu0 0.0
  %83 = vmatpush2.msra.mxu0 0.0
  %84 = vmatprep.subr.mxu0 0.0
  %85 = vmatpush2.msra.mxu0 0.0
  %86 = vmatprep.subr.mxu0 0.0
  %87 = vmatpush2.msra.mxu0 0.0
  %88 = vmatprep.subr.mxu0 0.0
  %89 = vmatpush2.msra.mxu0 0.0
  %90 = vmatprep.subr.mxu0 0.0
  %91 = vmatpush2.msra.mxu0 0.0
  %92 = vmatprep.subr.mxu0 0.0
  %93 = vmatpush2.msra.mxu0 0.0
  %94 = vmatprep.subr.mxu0 0.0
  %95 = vmatpush2.msra.mxu0 0.0
  %96 = vmatprep.subr.mxu0 0.0
  %97 = vmatpush2.msra.mxu0 0.0
  %98 = vmatprep.subr.mxu0 0.0
  %99 = vmatpush2.msra.mxu0 0.0
  %100 = vmatprep.subr.mxu0 0.0
  %101 = vmatpush2.msra.mxu0 0.0
  %102 = vmatprep.subr.mxu0 0.0
  %103 = vmatpush2.msra.mxu0 0.0
  %104 = vmatprep.subr.mxu0 0.0
  %105 = vmatpush2.msra.mxu0 0.0
  %106 = vmatprep.subr.mxu0 0.0
  %107 = vmatpush2.msra.mxu0 0.0
  %108 = vmatprep.mubr.f32.mxu0 0.0
  %109 = vmatmul.mubr.f32.gmra.mxu0 %v21
  %v110 = vpop.f32.mrf.mxu0
  %v111 = vadd.f32 %v14, %v110
  %v112 = vpop.f32.mrf.mxu0
  %113 = vmatprep.mubr.f32.mxu0 0.0
  %114 = vmatmul.mubr.f32.gmra.mxu0 %v22
  %v115 = vpop.f32.mrf.mxu0
  %v116 = vadd.f32 %v15, %v115
  %v117 = vpop.f32.mrf.mxu0
  %118 = vmatprep.mubr.f32.mxu0 0.0
  %119 = vmatmul.mubr.f32.gmra.mxu0 %v23
  %v120 = vpop.f32.mrf.mxu0
  %v121 = vadd.f32 %v16, %v120
  %v122 = vpop.f32.mrf.mxu0
  %123 = vmatprep.mubr.f32.mxu0 0.0
  %124 = vmatmul.mubr.f32.gmra.mxu0 %v24
  %v125 = vpop.f32.mrf.mxu0
  %v126 = vadd.f32 %v17, %v125
  %v127 = vpop.f32.mrf.mxu0
  %128 = vmatprep.mubr.f32.mxu0 0.0
  %129 = vmatmul.mubr.f32.gmra.mxu0 %v25
  %v130 = vpop.f32.mrf.mxu0
  %v131 = vadd.f32 %v18, %v130
  %v132 = vpop.f32.mrf.mxu0
  %133 = vmatprep.mubr.f32.mxu0 0.0
  %134 = vmatmul.mubr.f32.gmra.mxu0 %v26
  %v135 = vpop.f32.mrf.mxu0
  %v136 = vadd.f32 %v19, %v135
  %v137 = vpop.f32.mrf.mxu0
  %138 = vmatprep.mubr.f32.mxu0 0.0
  %139 = vmatmul.mubr.f32.gmra.mxu0 %v27
  %v140 = vpop.f32.mrf.mxu0
  %v141 = vadd.f32 %v20, %v140
  %v142 = vpop.f32.mrf.mxu0
  %143 = vdwg.mxu0
  %v144 = vld [vmem:[%s2 + $0x4b8] sm:$0xff]
  %v145 = vld [vmem:[%s2 + $0x4c0] sm:$0xff]
  %v146 = vld [vmem:[%s2 + $0x4c8] sm:$0xff]
  %v147 = vld [vmem:[%s2 + $0x4d0] sm:$0xff]
  %v148 = vld [vmem:[%s2 + $0x4d8] sm:$0xff]
  %v149 = vld [vmem:[%s2 + $0x4e0] sm:$0xff]
  %v150 = vld [vmem:[%s2 + $0x4e8] sm:$0xff]
  %v151 = vld [vmem:[%s2 + $0x4f0] sm:$0xff]
  %v152 = vld [vmem:[%s2 + $0x4f8] sm:$0xff]
  %v153 = vld [vmem:[%s2 + $0x500] sm:$0xff]
  %v154 = vld [vmem:[%s2 + $0x508] sm:$0xff]
  %v155 = vld [vmem:[%s2 + $0x510] sm:$0xff]
  %v156 = vld [vmem:[%s2 + $0x518] sm:$0xff]
  %v157 = vld [vmem:[%s2 + $0x520] sm:$0xff]
  %v158 = vld [vmem:[%s2 + $0x528] sm:$0xff]
  %v159 = vld [vmem:[%s2 + $0x530] sm:$0xff]
  %160 = vmatprep.subr.mxu0 0.0
  %161 = vmatpush1.msra.mxu0 %v159
  %162 = vmatprep.subr.mxu0 0.0
  %163 = vmatpush1.msra.mxu0 %v158
  %164 = vmatprep.subr.mxu0 0.0
  %165 = vmatpush1.msra.mxu0 %v157
  %166 = vmatprep.subr.mxu0 0.0
  %167 = vmatpush1.msra.mxu0 %v156
  %168 = vmatprep.subr.mxu0 0.0
  %169 = vmatpush1.msra.mxu0 %v155
  %170 = vmatprep.subr.mxu0 0.0
  %171 = vmatpush1.msra.mxu0 %v154
  %172 = vmatprep.subr.mxu0 0.0
  %173 = vmatpush1.msra.mxu0 %v153
  %174 = vmatprep.subr.mxu0 0.0
  %175 = vmatpush1.msra.mxu0 %v152
  %176 = vmatprep.subr.mxu0 0.0
  %177 = vmatpush1.msra.mxu0 %v151
  %178 = vmatprep.subr.mxu0 0.0
  %179 = vmatpush1.msra.mxu0 %v150
  %180 = vmatprep.subr.mxu0 0.0
  %181 = vmatpush1.msra.mxu0 %v149
  %182 = vmatprep.subr.mxu0 0.0
  %183 = vmatpush1.msra.mxu0 %v148
  %184 = vmatprep.subr.mxu0 0.0
  %185 = vmatpush1.msra.mxu0 %v147
  %186 = vmatprep.subr.mxu0 0.0
  %187 = vmatpush1.msra.mxu0 %v146
  %188 = vmatprep.subr.mxu0 0.0
  %189 = vmatpush1.msra.mxu0 %v145
  %190 = vmatprep.subr.mxu0 0.0
  %191 = vmatpush1.msra.mxu0 %v144
  %192 = vmatprep.subr.mxu0 0.0
  %193 = vmatpush2.msra.mxu0 0.0
  %194 = vmatprep.subr.mxu0 0.0
  %195 = vmatpush2.msra.mxu0 0.0
  %196 = vmatprep.subr.mxu0 0.0
  %197 = vmatpush2.msra.mxu0 0.0
  %198 = vmatprep.subr.mxu0 0.0
  %199 = vmatpush2.msra.mxu0 0.0
  %200 = vmatprep.subr.mxu0 0.0
  %201 = vmatpush2.msra.mxu0 0.0
  %202 = vmatprep.subr.mxu0 0.0
  %203 = vmatpush2.msra.mxu0 0.0
  %204 = vmatprep.subr.mxu0 0.0
  %205 = vmatpush2.msra.mxu0 0.0
  %206 = vmatprep.subr.mxu0 0.0
  %207 = vmatpush2.msra.mxu0 0.0
  %208 = vmatprep.subr.mxu0 0.0
  %209 = vmatpush2.msra.mxu0 0.0
  %210 = vmatprep.subr.mxu0 0.0
  %211 = vmatpush2.msra.mxu0 0.0
  %212 = vmatprep.subr.mxu0 0.0
  %213 = vmatpush2.msra.mxu0 0.0
  %214 = vmatprep.subr.mxu0 0.0
  %215 = vmatpush2.msra.mxu0 0.0
  %216 = vmatprep.subr.mxu0 0.0
  %217 = vmatpush2.msra.mxu0 0.0
  %218 = vmatprep.subr.mxu0 0.0
  %219 = vmatpush2.msra.mxu0 0.0
  %220 = vmatprep.subr.mxu0 0.0
  %221 = vmatpush2.msra.mxu0 0.0
  %222 = vmatprep.subr.mxu0 0.0
  %223 = vmatpush2.msra.mxu0 0.0
  %224 = vmatprep.mubr.f32.mxu0 0.0
  %225 = vmatmul.mubr.f32.gmra.mxu0 %v111
  %v226 = vpop.f32.mrf.mxu0
  %v227 = vadd.f32 0.0, %v226
  %v228 = vpop.f32.mrf.mxu0
  %229 = vmatprep.mubr.f32.mxu0 0.0
  %230 = vmatmul.mubr.f32.gmra.mxu0 %v116
  %v231 = vpop.f32.mrf.mxu0
  %v232 = vadd.f32 0.0, %v231
  %v233 = vpop.f32.mrf.mxu0
  %234 = vmatprep.mubr.f32.mxu0 0.0
  %235 = vmatmul.mubr.f32.gmra.mxu0 %v121
  %v236 = vpop.f32.mrf.mxu0
  %v237 = vadd.f32 0.0, %v236
  %v238 = vpop.f32.mrf.mxu0
  %239 = vmatprep.mubr.f32.mxu0 0.0
  %240 = vmatmul.mubr.f32.gmra.mxu0 %v126
  %v241 = vpop.f32.mrf.mxu0
  %v242 = vadd.f32 0.0, %v241
  %v243 = vpop.f32.mrf.mxu0
  %244 = vmatprep.mubr.f32.mxu0 0.0
  %245 = vmatmul.mubr.f32.gmra.mxu0 %v131
  %v246 = vpop.f32.mrf.mxu0
  %v247 = vadd.f32 0.0, %v246
  %v248 = vpop.f32.mrf.mxu0
  %249 = vmatprep.mubr.f32.mxu0 0.0
  %250 = vmatmul.mubr.f32.gmra.mxu0 %v136
  %v251 = vpop.f32.mrf.mxu0
  %v252 = vadd.f32 0.0, %v251
  %v253 = vpop.f32.mrf.mxu0
  %254 = vmatprep.mubr.f32.mxu0 0.0
  %255 = vmatmul.mubr.f32.gmra.mxu0 %v141
  %v256 = vpop.f32.mrf.mxu0
  %v257 = vadd.f32 0.0, %v256
  %v258 = vpop.f32.mrf.mxu0
  %259 = vdwg.mxu0
  %v260 = vmul.f32 %v111, %v111
  %v261 = vmul.f32 %v116, %v116
  %v262 = vmul.f32 %v121, %v121
  %v263 = vmul.f32 %v126, %v126
  %v264 = vmul.f32 %v131, %v131
  %v265 = vmul.f32 %v136, %v136
  %v266 = vmul.f32 %v141, %v141
  %267 = vmatprep.subr.mxu0 0.0
  %268 = vmatpush1.msra.mxu0 %v159
  %269 = vmatprep.subr.mxu0 0.0
  %270 = vmatpush1.msra.mxu0 %v158
  %271 = vmatprep.subr.mxu0 0.0
  %272 = vmatpush1.msra.mxu0 %v157
  %273 = vmatprep.subr.mxu0 0.0
  %274 = vmatpush1.msra.mxu0 %v156
  %275 = vmatprep.subr.mxu0 0.0
  %276 = vmatpush1.msra.mxu0 %v155
  %277 = vmatprep.subr.mxu0 0.0
  %278 = vmatpush1.msra.mxu0 %v154
  %279 = vmatprep.subr.mxu0 0.0
  %280 = vmatpush1.msra.mxu0 %v153
  %281 = vmatprep.subr.mxu0 0.0
  %282 = vmatpush1.msra.mxu0 %v152
  %283 = vmatprep.subr.mxu0 0.0
  %284 = vmatpush1.msra.mxu0 %v151
  %285 = vmatprep.subr.mxu0 0.0
  %286 = vmatpush1.msra.mxu0 %v150
  %287 = vmatprep.subr.mxu0 0.0
  %288 = vmatpush1.msra.mxu0 %v149
  %289 = vmatprep.subr.mxu0 0.0
  %290 = vmatpush1.msra.mxu0 %v148
  %291 = vmatprep.subr.mxu0 0.0
  %292 = vmatpush1.msra.mxu0 %v147
  %293 = vmatprep.subr.mxu0 0.0
  %294 = vmatpush1.msra.mxu0 %v146
  %295 = vmatprep.subr.mxu0 0.0
  %296 = vmatpush1.msra.mxu0 %v145
  %297 = vmatprep.subr.mxu0 0.0
  %298 = vmatpush1.msra.mxu0 %v144
  %299 = vmatprep.subr.mxu0 0.0
  %300 = vmatpush2.msra.mxu0 0.0
  %301 = vmatprep.subr.mxu0 0.0
  %302 = vmatpush2.msra.mxu0 0.0
  %303 = vmatprep.subr.mxu0 0.0
  %304 = vmatpush2.msra.mxu0 0.0
  %305 = vmatprep.subr.mxu0 0.0
  %306 = vmatpush2.msra.mxu0 0.0
  %307 = vmatprep.subr.mxu0 0.0
  %308 = vmatpush2.msra.mxu0 0.0
  %309 = vmatprep.subr.mxu0 0.0
  %310 = vmatpush2.msra.mxu0 0.0
  %311 = vmatprep.subr.mxu0 0.0
  %312 = vmatpush2.msra.mxu0 0.0
  %313 = vmatprep.subr.mxu0 0.0
  %314 = vmatpush2.msra.mxu0 0.0
  %315 = vmatprep.subr.mxu0 0.0
  %316 = vmatpush2.msra.mxu0 0.0
  %317 = vmatprep.subr.mxu0 0.0
  %318 = vmatpush2.msra.mxu0 0.0
  %319 = vmatprep.subr.mxu0 0.0
  %320 = vmatpush2.msra.mxu0 0.0
  %321 = vmatprep.subr.mxu0 0.0
  %322 = vmatpush2.msra.mxu0 0.0
  %323 = vmatprep.subr.mxu0 0.0
  %324 = vmatpush2.msra.mxu0 0.0
  %325 = vmatprep.subr.mxu0 0.0
  %326 = vmatpush2.msra.mxu0 0.0
  %327 = vmatprep.subr.mxu0 0.0
  %328 = vmatpush2.msra.mxu0 0.0
  %329 = vmatprep.subr.mxu0 0.0
  %330 = vmatpush2.msra.mxu0 0.0
  %331 = vmatprep.mubr.f32.mxu0 0.0
  %332 = vmatmul.mubr.f32.gmra.mxu0 %v260
  %v333 = vpop.f32.mrf.mxu0
  %v334 = vadd.f32 0.0, %v333
  %v335 = vpop.f32.mrf.mxu0
  %336 = vmatprep.mubr.f32.mxu0 0.0
  %337 = vmatmul.mubr.f32.gmra.mxu0 %v261
  %v338 = vpop.f32.mrf.mxu0
  %v339 = vadd.f32 0.0, %v338
  %v340 = vpop.f32.mrf.mxu0
  %341 = vmatprep.mubr.f32.mxu0 0.0
  %342 = vmatmul.mubr.f32.gmra.mxu0 %v262
  %v343 = vpop.f32.mrf.mxu0
  %v344 = vadd.f32 0.0, %v343
  %v345 = vpop.f32.mrf.mxu0
  %346 = vmatprep.mubr.f32.mxu0 0.0
  %347 = vmatmul.mubr.f32.gmra.mxu0 %v263
  %v348 = vpop.f32.mrf.mxu0
  %v349 = vadd.f32 0.0, %v348
  %v350 = vpop.f32.mrf.mxu0
  %351 = vmatprep.mubr.f32.mxu0 0.0
  %352 = vmatmul.mubr.f32.gmra.mxu0 %v264
  %v353 = vpop.f32.mrf.mxu0
  %v354 = vadd.f32 0.0, %v353
  %v355 = vpop.f32.mrf.mxu0
  %356 = vmatprep.mubr.f32.mxu0 0.0
  %357 = vmatmul.mubr.f32.gmra.mxu0 %v265
  %v358 = vpop.f32.mrf.mxu0
  %v359 = vadd.f32 0.0, %v358
  %v360 = vpop.f32.mrf.mxu0
  %361 = vmatprep.mubr.f32.mxu0 0.0
  %362 = vmatmul.mubr.f32.gmra.mxu0 %v266
  %v363 = vpop.f32.mrf.mxu0
  %v364 = vadd.f32 0.0, %v363
  %v365 = vpop.f32.mrf.mxu0
  %366 = vdwg.mxu0
  %v367 = vmul.f32 %v227, 0.015625
  %v368 = vmul.f32 %v232, 0.015625
  %v369 = vmul.f32 %v237, 0.015625
  %v370 = vmul.f32 %v242, 0.015625
  %v371 = vmul.f32 %v247, 0.015625
  %v372 = vmul.f32 %v252, 0.015625
  %v373 = vmul.f32 %v257, 0.015625
  %v374 = vmul.f32 %v334, 0.015625
  %v375 = vmul.f32 %v339, 0.015625
  %v376 = vmul.f32 %v344, 0.015625
  %v377 = vmul.f32 %v349, 0.015625
  %v378 = vmul.f32 %v354, 0.015625
  %v379 = vmul.f32 %v359, 0.015625
  %v380 = vmul.f32 %v364, 0.015625
  %v381 = vmul.f32 %v367, %v367
  %v382 = vmul.f32 %v368, %v368
  %v383 = vmul.f32 %v369, %v369
  %v384 = vmul.f32 %v370, %v370
  %v385 = vmul.f32 %v371, %v371
  %v386 = vmul.f32 %v372, %v372
  %v387 = vmul.f32 %v373, %v373
  %v388 = vsub.f32 %v374, %v381
  %v389 = vsub.f32 %v375, %v382
  %v390 = vsub.f32 %v376, %v383
  %v391 = vsub.f32 %v377, %v384
  %v392 = vsub.f32 %v378, %v385
  %v393 = vsub.f32 %v379, %v386
  %v394 = vsub.f32 %v380, %v387
  %v395 = vmax.f32 %v388, 0.0
  %v396 = vmax.f32 %v389, 0.0
  %v397 = vmax.f32 %v390, 0.0
  %v398 = vmax.f32 %v391, 0.0
  %v399 = vmax.f32 %v392, 0.0
  %v400 = vmax.f32 %v393, 0.0
  %v401 = vmax.f32 %v394, 0.0
  %v402 = vsub.f32 %v111, %v367
  %v403 = vsub.f32 %v116, %v368
  %v404 = vsub.f32 %v121, %v369
  %v405 = vsub.f32 %v126, %v370
  %v406 = vsub.f32 %v131, %v371
  %v407 = vsub.f32 %v136, %v372
  %v408 = vsub.f32 %v141, %v373
  %v409 = vadd.f32 %v395, 1e-05
  %v410 = vadd.f32 %v396, 1e-05
  %v411 = vadd.f32 %v397, 1e-05
  %v412 = vadd.f32 %v398, 1e-05
  %v413 = vadd.f32 %v399, 1e-05
  %v414 = vadd.f32 %v400, 1e-05
  %v415 = vadd.f32 %v401, 1e-05
  %v416 = vrsqrt.pop %v409
  %v417 = vrsqrt.pop %v410
  %v418 = vrsqrt.pop %v411
  %v419 = vrsqrt.pop %v412
  %v420 = vrsqrt.pop %v413
  %v421 = vrsqrt.pop %v414
  %v422 = vrsqrt.pop %v415
  %v423 = vmul.f32 %v402, %v416
  %v424 = vmul.f32 %v403, %v417
  %v425 = vmul.f32 %v404, %v418
  %v426 = vmul.f32 %v405, %v419
  %v427 = vmul.f32 %v406, %v420
  %v428 = vmul.f32 %v407, %v421
  %v429 = vmul.f32 %v408, %v422
  %v430 = vld [vmem:[%s2 + $0x5b8] sm:$0x1]
  %v431 = vlaneseq
  %v432 = vshrl.u32 %v431, 7
  %v433 = vsub.s32 0, %v432
  %v434 = vrot.slane %v430, %v433
  %v435 = vmul.f32 %v423, %v434
  %v436 = vmul.f32 %v424, %v434
  %v437 = vmul.f32 %v425, %v434
  %v438 = vmul.f32 %v426, %v434
  %v439 = vmul.f32 %v427, %v434
  %v440 = vmul.f32 %v428, %v434
  %v441 = vmul.f32 %v429, %v434
  %v442 = vld [vmem:[%s2 + $0x5b9] sm:$0x1]
  %v443 = vlaneseq
  %v444 = vshrl.u32 %v443, 7
  %v445 = vsub.s32 0, %v444
  %v446 = vrot.slane %v442, %v445
  %v447 = vadd.f32 %v435, %v446
  %v448 = vadd.f32 %v436, %v446
  %v449 = vadd.f32 %v437, %v446
  %v450 = vadd.f32 %v438, %v446
  %v451 = vadd.f32 %v439, %v446
  %v452 = vadd.f32 %v440, %v446
  %v453 = vadd.f32 %v441, %v446
  %v454 = vld [vmem:[%s1] sm:$0xff]
  %v455 = vld [vmem:[%s1 + $0x8] sm:$0xff]
  %v456 = vld [vmem:[%s1 + $0x10] sm:$0xff]
  %v457 = vld [vmem:[%s1 + $0x18] sm:$0xff]
  %v458 = vld [vmem:[%s1 + $0x20] sm:$0xff]
  %v459 = vld [vmem:[%s1 + $0x28] sm:$0xff]
  %v460 = vld [vmem:[%s1 + $0x30] sm:$0xff]
  %v461 = vld [vmem:[%s1 + $0x38] sm:$0xff]
  %v462 = vld [vmem:[%s1 + $0x40] sm:$0xff]
  %v463 = vld [vmem:[%s1 + $0x48] sm:$0xff]
  %v464 = vld [vmem:[%s1 + $0x50] sm:$0xff]
  %v465 = vld [vmem:[%s1 + $0x58] sm:$0xff]
  %v466 = vld [vmem:[%s1 + $0x60] sm:$0xff]
  %v467 = vld [vmem:[%s1 + $0x68] sm:$0xff]
  %v468 = vld [vmem:[%s1 + $0x70] sm:$0xff]
  %v469 = vld [vmem:[%s1 + $0x78] sm:$0xff]
  %v470 = vld [vmem:[%s1 + $0x80] sm:$0xff]
  %v471 = vld [vmem:[%s1 + $0x88] sm:$0xff]
  %v472 = vld [vmem:[%s1 + $0x90] sm:$0xff]
  %v473 = vld [vmem:[%s1 + $0x98] sm:$0xff]
  %v474 = vld [vmem:[%s1 + $0xa0] sm:$0xff]
  %v475 = vld [vmem:[%s1 + $0xa8] sm:$0xff]
  %v476 = vld [vmem:[%s1 + $0xb0] sm:$0xff]
  %v477 = vld [vmem:[%s1 + $0xb8] sm:$0xff]
  %v478 = vld [vmem:[%s1 + $0xc0] sm:$0xff]
  %v479 = vld [vmem:[%s1 + $0xc8] sm:$0xff]
  %v480 = vld [vmem:[%s1 + $0xd0] sm:$0xff]
  %v481 = vld [vmem:[%s1 + $0xd8] sm:$0xff]
  %v482 = vld [vmem:[%s1 + $0xe0] sm:$0xff]
  %v483 = vld [vmem:[%s1 + $0xe8] sm:$0xff]
  %v484 = vld [vmem:[%s1 + $0xf0] sm:$0xff]
  %v485 = vld [vmem:[%s1 + $0xf8] sm:$0xff]
  %v486 = vld [vmem:[%s1 + $0x100] sm:$0xff]
  %v487 = vld [vmem:[%s1 + $0x108] sm:$0xff]
  %v488 = vld [vmem:[%s1 + $0x110] sm:$0xff]
  %v489 = vld [vmem:[%s1 + $0x118] sm:$0xff]
  %v490 = vld [vmem:[%s1 + $0x120] sm:$0xff]
  %v491 = vld [vmem:[%s1 + $0x128] sm:$0xff]
  %v492 = vld [vmem:[%s1 + $0x130] sm:$0xff]
  %v493 = vld [vmem:[%s1 + $0x138] sm:$0xff]
  %v494 = vld [vmem:[%s1 + $0x140] sm:$0xff]
  %v495 = vld [vmem:[%s1 + $0x148] sm:$0xff]
  %v496 = vld [vmem:[%s1 + $0x150] sm:$0xff]
  %v497 = vld [vmem:[%s1 + $0x158] sm:$0xff]
  %v498 = vld [vmem:[%s1 + $0x160] sm:$0xff]
  %v499 = vld [vmem:[%s1 + $0x168] sm:$0xff]
  %v500 = vld [vmem:[%s1 + $0x170] sm:$0xff]
  %v501 = vld [vmem:[%s1 + $0x178] sm:$0xff]
  %v502 = vld [vmem:[%s2 + $0x38] sm:$0xff]
  %v503 = vld [vmem:[%s2 + $0x40] sm:$0xff]
  %v504 = vld [vmem:[%s2 + $0x48] sm:$0xff]
  %v505 = vld [vmem:[%s2 + $0x50] sm:$0xff]
  %v506 = vld [vmem:[%s2 + $0x58] sm:$0xff]
  %v507 = vld [vmem:[%s2 + $0x60] sm:$0xff]
  %v508 = vld [vmem:[%s2 + $0x68] sm:$0xff]
  %v509 = vld [vmem:[%s2 + $0x70] sm:$0xff]
  %v510 = vld [vmem:[%s2 + $0x78] sm:$0xff]
  %v511 = vld [vmem:[%s2 + $0x80] sm:$0xff]
  %v512 = vld [vmem:[%s2 + $0x88] sm:$0xff]
  %v513 = vld [vmem:[%s2 + $0x90] sm:$0xff]
  %v514 = vld [vmem:[%s2 + $0x98] sm:$0xff]
  %v515 = vld [vmem:[%s2 + $0xa0] sm:$0xff]
  %v516 = vld [vmem:[%s2 + $0xa8] sm:$0xff]
  %v517 = vld [vmem:[%s2 + $0xb0] sm:$0xff]
  %v518 = vld [vmem:[%s2 + $0x538] sm:$0xff]
  %v519 = vld [vmem:[%s2 + $0x540] sm:$0xff]
  %v520 = vld [vmem:[%s2 + $0x548] sm:$0xff]
  %v521 = vld [vmem:[%s2 + $0x550] sm:$0xff]
  %v522 = vld [vmem:[%s2 + $0x558] sm:$0xff]
  %v523 = vld [vmem:[%s2 + $0x560] sm:$0xff]
  %v524 = vld [vmem:[%s2 + $0x568] sm:$0xff]
  %v525 = vld [vmem:[%s2 + $0x570] sm:$0xff]
  %v526 = vld [vmem:[%s2 + $0x578] sm:$0xff]
  %v527 = vld [vmem:[%s2 + $0x580] sm:$0xff]
  %v528 = vld [vmem:[%s2 + $0x588] sm:$0xff]
  %v529 = vld [vmem:[%s2 + $0x590] sm:$0xff]
  %v530 = vld [vmem:[%s2 + $0x598] sm:$0xff]
  %v531 = vld [vmem:[%s2 + $0x5a0] sm:$0xff]
  %v532 = vld [vmem:[%s2 + $0x5a8] sm:$0xff]
  %v533 = vld [vmem:[%s2 + $0x5b0] sm:$0xff]
  %534 = vmatprep.subr.mxu0 %v500
  %535 = vmatpush1.msra.mxu0 %v499
  %536 = vmatprep.subr.mxu0 %v497
  %537 = vmatpush1.msra.mxu0 %v496
  %538 = vmatprep.subr.mxu0 %v494
  %539 = vmatpush1.msra.mxu0 %v493
  %540 = vmatprep.subr.mxu0 %v491
  %541 = vmatpush1.msra.mxu0 %v490
  %542 = vmatprep.subr.mxu0 %v488
  %543 = vmatpush1.msra.mxu0 %v487
  %544 = vmatprep.subr.mxu0 %v485
  %545 = vmatpush1.msra.mxu0 %v484
  %546 = vmatprep.subr.mxu0 %v482
  %547 = vmatpush1.msra.mxu0 %v481
  %548 = vmatprep.subr.mxu0 %v479
  %549 = vmatpush1.msra.mxu0 %v478
  %550 = vmatprep.subr.mxu0 %v476
  %551 = vmatpush1.msra.mxu0 %v475
  %552 = vmatprep.subr.mxu0 %v473
  %553 = vmatpush1.msra.mxu0 %v472
  %554 = vmatprep.subr.mxu0 %v470
  %555 = vmatpush1.msra.mxu0 %v469
  %556 = vmatprep.subr.mxu0 %v467
  %557 = vmatpush1.msra.mxu0 %v466
  %558 = vmatprep.subr.mxu0 %v464
  %559 = vmatpush1.msra.mxu0 %v463
  %560 = vmatprep.subr.mxu0 %v461
  %561 = vmatpush1.msra.mxu0 %v460
  %562 = vmatprep.subr.mxu0 %v458
  %563 = vmatpush1.msra.mxu0 %v457
  %564 = vmatprep.subr.mxu0 %v455
  %565 = vmatpush1.msra.mxu0 %v454
  %566 = vmatprep.subr.mxu0 0.0
  %567 = vmatpush2.msra.mxu0 0.0
  %568 = vmatprep.subr.mxu0 0.0
  %569 = vmatpush2.msra.mxu0 0.0
  %570 = vmatprep.subr.mxu0 0.0
  %571 = vmatpush2.msra.mxu0 0.0
  %572 = vmatprep.subr.mxu0 0.0
  %573 = vmatpush2.msra.mxu0 0.0
  %574 = vmatprep.subr.mxu0 0.0
  %575 = vmatpush2.msra.mxu0 0.0
  %576 = vmatprep.subr.mxu0 0.0
  %577 = vmatpush2.msra.mxu0 0.0
  %578 = vmatprep.subr.mxu0 0.0
  %579 = vmatpush2.msra.mxu0 0.0
  %580 = vmatprep.subr.mxu0 0.0
  %581 = vmatpush2.msra.mxu0 0.0
  %582 = vmatprep.subr.mxu0 0.0
  %583 = vmatpush2.msra.mxu0 0.0
  %584 = vmatprep.subr.mxu0 0.0
  %585 = vmatpush2.msra.mxu0 0.0
  %586 = vmatprep.subr.mxu0 0.0
  %587 = vmatpush2.msra.mxu0 0.0
  %588 = vmatprep.subr.mxu0 0.0
  %589 = vmatpush2.msra.mxu0 0.0
  %590 = vmatprep.subr.mxu0 0.0
  %591 = vmatpush2.msra.mxu0 0.0
  %592 = vmatprep.subr.mxu0 0.0
  %593 = vmatpush2.msra.mxu0 0.0
  %594 = vmatprep.subr.mxu0 0.0
  %595 = vmatpush2.msra.mxu0 0.0
  %596 = vmatprep.subr.mxu0 0.0
  %597 = vmatpush2.msra.mxu0 0.0
  %598 = vmatprep.mubr.f32.mxu0 0.0
  %599 = vmatmul.mubr.f32.gmra.mxu0 %v447
  %v600 = vpop.f32.mrf.mxu0
  %v601 = vadd.f32 0.0, %v600
  %v602 = vpop.f32.mrf.mxu0
  %v603 = vadd.f32 0.0, %v602
  %604 = vmatprep.mubr.f32.mxu0 0.0
  %605 = vmatmul.mubr.f32.gmra.mxu0 %v448
  %v606 = vpop.f32.mrf.mxu0
  %v607 = vadd.f32 0.0, %v606
  %v608 = vpop.f32.mrf.mxu0
  %v609 = vadd.f32 0.0, %v608
  %610 = vmatprep.mubr.f32.mxu0 0.0
  %611 = vmatmul.mubr.f32.gmra.mxu0 %v449
  %v612 = vpop.f32.mrf.mxu0
  %v613 = vadd.f32 0.0, %v612
  %v614 = vpop.f32.mrf.mxu0
  %v615 = vadd.f32 0.0, %v614
  %616 = vmatprep.mubr.f32.mxu0 0.0
  %617 = vmatmul.mubr.f32.gmra.mxu0 %v450
  %v618 = vpop.f32.mrf.mxu0
  %v619 = vadd.f32 0.0, %v618
  %v620 = vpop.f32.mrf.mxu0
  %v621 = vadd.f32 0.0, %v620
  %622 = vmatprep.mubr.f32.mxu0 0.0
  %623 = vmatmul.mubr.f32.gmra.mxu0 %v451
  %v624 = vpop.f32.mrf.mxu0
  %v625 = vadd.f32 0.0, %v624
  %v626 = vpop.f32.mrf.mxu0
  %v627 = vadd.f32 0.0, %v626
  %628 = vmatprep.mubr.f32.mxu0 0.0
  %629 = vmatmul.mubr.f32.gmra.mxu0 %v452
  %v630 = vpop.f32.mrf.mxu0
  %v631 = vadd.f32 0.0, %v630
  %v632 = vpop.f32.mrf.mxu0
  %v633 = vadd.f32 0.0, %v632
  %634 = vmatprep.mubr.f32.mxu0 0.0
  %635 = vmatmul.mubr.f32.gmra.mxu0 %v453
  %v636 = vpop.f32.mrf.mxu0
  %v637 = vadd.f32 0.0, %v636
  %v638 = vpop.f32.mrf.mxu0
  %v639 = vadd.f32 0.0, %v638
  %640 = vdwg.mxu0
  %641 = vmatprep.subr.mxu0 0.0
  %642 = vmatpush1.msra.mxu0 %v501
  %643 = vmatprep.subr.mxu0 0.0
  %644 = vmatpush1.msra.mxu0 %v498
  %645 = vmatprep.subr.mxu0 0.0
  %646 = vmatpush1.msra.mxu0 %v495
  %647 = vmatprep.subr.mxu0 0.0
  %648 = vmatpush1.msra.mxu0 %v492
  %649 = vmatprep.subr.mxu0 0.0
  %650 = vmatpush1.msra.mxu0 %v489
  %651 = vmatprep.subr.mxu0 0.0
  %652 = vmatpush1.msra.mxu0 %v486
  %653 = vmatprep.subr.mxu0 0.0
  %654 = vmatpush1.msra.mxu0 %v483
  %655 = vmatprep.subr.mxu0 0.0
  %656 = vmatpush1.msra.mxu0 %v480
  %657 = vmatprep.subr.mxu0 0.0
  %658 = vmatpush1.msra.mxu0 %v477
  %659 = vmatprep.subr.mxu0 0.0
  %660 = vmatpush1.msra.mxu0 %v474
  %661 = vmatprep.subr.mxu0 0.0
  %662 = vmatpush1.msra.mxu0 %v471
  %663 = vmatprep.subr.mxu0 0.0
  %664 = vmatpush1.msra.mxu0 %v468
  %665 = vmatprep.subr.mxu0 0.0
  %666 = vmatpush1.msra.mxu0 %v465
  %667 = vmatprep.subr.mxu0 0.0
  %668 = vmatpush1.msra.mxu0 %v462
  %669 = vmatprep.subr.mxu0 0.0
  %670 = vmatpush1.msra.mxu0 %v459
  %671 = vmatprep.subr.mxu0 0.0
  %672 = vmatpush1.msra.mxu0 %v456
  %673 = vmatprep.subr.mxu0 0.0
  %674 = vmatpush2.msra.mxu0 0.0
  %675 = vmatprep.subr.mxu0 0.0
  %676 = vmatpush2.msra.mxu0 0.0
  %677 = vmatprep.subr.mxu0 0.0
  %678 = vmatpush2.msra.mxu0 0.0
  %679 = vmatprep.subr.mxu0 0.0
  %680 = vmatpush2.msra.mxu0 0.0
  %681 = vmatprep.subr.mxu0 0.0
  %682 = vmatpush2.msra.mxu0 0.0
  %683 = vmatprep.subr.mxu0 0.0
  %684 = vmatpush2.msra.mxu0 0.0
  %685 = vmatprep.subr.mxu0 0.0
  %686 = vmatpush2.msra.mxu0 0.0
  %687 = vmatprep.subr.mxu0 0.0
  %688 = vmatpush2.msra.mxu0 0.0
  %689 = vmatprep.subr.mxu0 0.0
  %690 = vmatpush2.msra.mxu0 0.0
  %691 = vmatprep.subr.mxu0 0.0
  %692 = vmatpush2.msra.mxu0 0.0
  %693 = vmatprep.subr.mxu0 0.0
  %694 = vmatpush2.msra.mxu0 0.0
  %695 = vmatprep.subr.mxu0 0.0
  %696 = vmatpush2.msra.mxu0 0.0
  %697 = vmatprep.subr.mxu0 0.0
  %698 = vmatpush2.msra.mxu0 0.0
  %699 = vmatprep.subr.mxu0 0.0
  %700 = vmatpush2.msra.mxu0 0.0
  %701 = vmatprep.subr.mxu0 0.0
  %702 = vmatpush2.msra.mxu0 0.0
  %703 = vmatprep.subr.mxu0 0.0
  %704 = vmatpush2.msra.mxu0 0.0
  %705 = vmatprep.mubr.f32.mxu0 0.0
  %706 = vmatmul.mubr.f32.gmra.mxu0 %v447
  %v707 = vpop.f32.mrf.mxu0
  %v708 = vadd.f32 0.0, %v707
  %v709 = vpop.f32.mrf.mxu0
  %710 = vmatprep.mubr.f32.mxu0 0.0
  %711 = vmatmul.mubr.f32.gmra.mxu0 %v448
  %v712 = vpop.f32.mrf.mxu0
  %v713 = vadd.f32 0.0, %v712
  %v714 = vpop.f32.mrf.mxu0
  %715 = vmatprep.mubr.f32.mxu0 0.0
  %716 = vmatmul.mubr.f32.gmra.mxu0 %v449
  %v717 = vpop.f32.mrf.mxu0
  %v718 = vadd.f32 0.0, %v717
  %v719 = vpop.f32.mrf.mxu0
  %720 = vmatprep.mubr.f32.mxu0 0.0
  %721 = vmatmul.mubr.f32.gmra.mxu0 %v450
  %v722 = vpop.f32.mrf.mxu0
  %v723 = vadd.f32 0.0, %v722
  %v724 = vpop.f32.mrf.mxu0
  %725 = vmatprep.mubr.f32.mxu0 0.0
  %726 = vmatmul.mubr.f32.gmra.mxu0 %v451
  %v727 = vpop.f32.mrf.mxu0
  %v728 = vadd.f32 0.0, %v727
  %v729 = vpop.f32.mrf.mxu0
  %730 = vmatprep.mubr.f32.mxu0 0.0
  %731 = vmatmul.mubr.f32.gmra.mxu0 %v452
  %v732 = vpop.f32.mrf.mxu0
  %v733 = vadd.f32 0.0, %v732
  %v734 = vpop.f32.mrf.mxu0
  %735 = vmatprep.mubr.f32.mxu0 0.0
  %736 = vmatmul.mubr.f32.gmra.mxu0 %v453
  %v737 = vpop.f32.mrf.mxu0
  %v738 = vadd.f32 0.0, %v737
  %v739 = vpop.f32.mrf.mxu0
  %740 = vdwg.mxu0
  %v741 = vld [vmem:[%s2 + $0x5ba] sm:$0x1]
  %v742 = vlaneseq
  %v743 = vshrl.u32 %v742, 7
  %v744 = vsub.s32 0, %v743
  %v745 = vrot.slane %v741, %v744
  %v746 = vadd.f32 %v601, %v745
  %v747 = vadd.f32 %v607, %v745
  %v748 = vadd.f32 %v613, %v745
  %v749 = vadd.f32 %v619, %v745
  %v750 = vadd.f32 %v625, %v745
  %v751 = vadd.f32 %v631, %v745
  %v752 = vadd.f32 %v637, %v745
  %v753 = vld [vmem:[%s2 + $0x5bb] sm:$0x1]
  %v754 = vlaneseq
  %v755 = vshrl.u32 %v754, 7
  %v756 = vsub.s32 0, %v755
  %v757 = vrot.slane %v753, %v756
  %v758 = vadd.f32 %v603, %v757
  %v759 = vadd.f32 %v609, %v757
  %v760 = vadd.f32 %v615, %v757
  %v761 = vadd.f32 %v621, %v757
  %v762 = vadd.f32 %v627, %v757
  %v763 = vadd.f32 %v633, %v757
  %v764 = vadd.f32 %v639, %v757
  %v765 = vld [vmem:[%s2 + $0x5bc] sm:$0x1]
  %v766 = vlaneseq
  %v767 = vshrl.u32 %v766, 7
  %v768 = vsub.s32 0, %v767
  %v769 = vrot.slane %v765, %v768
  %v770 = vadd.f32 %v708, %v769
  %v771 = vadd.f32 %v713, %v769
  %v772 = vadd.f32 %v718, %v769
  %v773 = vadd.f32 %v723, %v769
  %v774 = vadd.f32 %v728, %v769
  %v775 = vadd.f32 %v733, %v769
  %v776 = vadd.f32 %v738, %v769
  %v777 = vmul.f32 %v746, %v758
  %v778 = vmul.f32 %v747, %v759
  %v779 = vmul.f32 %v748, %v760
  %v780 = vmul.f32 %v749, %v761
  %v781 = vmul.f32 %v750, %v762
  %v782 = vmul.f32 %v751, %v763
  %v783 = vmul.f32 %v752, %v764
  %784 = vmatprep.subr.mxu0 0.0
  %785 = vmatpush1.msra.mxu0 %v533
  %786 = vmatprep.subr.mxu0 0.0
  %787 = vmatpush1.msra.mxu0 %v532
  %788 = vmatprep.subr.mxu0 0.0
  %789 = vmatpush1.msra.mxu0 %v531
  %790 = vmatprep.subr.mxu0 0.0
  %791 = vmatpush1.msra.mxu0 %v530
  %792 = vmatprep.subr.mxu0 0.0
  %793 = vmatpush1.msra.mxu0 %v529
  %794 = vmatprep.subr.mxu0 0.0
  %795 = vmatpush1.msra.mxu0 %v528
  %796 = vmatprep.subr.mxu0 0.0
  %797 = vmatpush1.msra.mxu0 %v527
  %798 = vmatprep.subr.mxu0 0.0
  %799 = vmatpush1.msra.mxu0 %v526
  %800 = vmatprep.subr.mxu0 0.0
  %801 = vmatpush1.msra.mxu0 %v525
  %802 = vmatprep.subr.mxu0 0.0
  %803 = vmatpush1.msra.mxu0 %v524
  %804 = vmatprep.subr.mxu0 0.0
  %805 = vmatpush1.msra.mxu0 %v523
  %806 = vmatprep.subr.mxu0 0.0
  %807 = vmatpush1.msra.mxu0 %v522
  %808 = vmatprep.subr.mxu0 0.0
  %809 = vmatpush1.msra.mxu0 %v521
  %810 = vmatprep.subr.mxu0 0.0
  %811 = vmatpush1.msra.mxu0 %v520
  %812 = vmatprep.subr.mxu0 0.0
  %813 = vmatpush1.msra.mxu0 %v519
  %814 = vmatprep.subr.mxu0 0.0
  %815 = vmatpush1.msra.mxu0 %v518
  %816 = vmatprep.subr.mxu0 0.0
  %817 = vmatpush2.msra.mxu0 0.0
  %818 = vmatprep.subr.mxu0 0.0
  %819 = vmatpush2.msra.mxu0 0.0
  %820 = vmatprep.subr.mxu0 0.0
  %821 = vmatpush2.msra.mxu0 0.0
  %822 = vmatprep.subr.mxu0 0.0
  %823 = vmatpush2.msra.mxu0 0.0
  %824 = vmatprep.subr.mxu0 0.0
  %825 = vmatpush2.msra.mxu0 0.0
  %826 = vmatprep.subr.mxu0 0.0
  %827 = vmatpush2.msra.mxu0 0.0
  %828 = vmatprep.subr.mxu0 0.0
  %829 = vmatpush2.msra.mxu0 0.0
  %830 = vmatprep.subr.mxu0 0.0
  %831 = vmatpush2.msra.mxu0 0.0
  %832 = vmatprep.subr.mxu0 0.0
  %833 = vmatpush2.msra.mxu0 0.0
  %834 = vmatprep.subr.mxu0 0.0
  %835 = vmatpush2.msra.mxu0 0.0
  %836 = vmatprep.subr.mxu0 0.0
  %837 = vmatpush2.msra.mxu0 0.0
  %838 = vmatprep.subr.mxu0 0.0
  %839 = vmatpush2.msra.mxu0 0.0
  %840 = vmatprep.subr.mxu0 0.0
  %841 = vmatpush2.msra.mxu0 0.0
  %842 = vmatprep.subr.mxu0 0.0
  %843 = vmatpush2.msra.mxu0 0.0
  %844 = vmatprep.subr.mxu0 0.0
  %845 = vmatpush2.msra.mxu0 0.0
  %846 = vmatprep.subr.mxu0 0.0
  %847 = vmatpush2.msra.mxu0 0.0
  %848 = vmatprep.mubr.f32.mxu0 0.0
  %849 = vmatmul.mubr.f32.gmra.mxu0 %v777
  %v850 = vpop.f32.mrf.mxu0
  %v851 = vadd.f32 0.0, %v850
  %v852 = vpop.f32.mrf.mxu0
  %853 = vmatprep.mubr.f32.mxu0 0.0
  %854 = vmatmul.mubr.f32.gmra.mxu0 %v778
  %v855 = vpop.f32.mrf.mxu0
  %v856 = vadd.f32 0.0, %v855
  %v857 = vpop.f32.mrf.mxu0
  %858 = vmatprep.mubr.f32.mxu0 0.0
  %859 = vmatmul.mubr.f32.gmra.mxu0 %v779
  %v860 = vpop.f32.mrf.mxu0
  %v861 = vadd.f32 0.0, %v860
  %v862 = vpop.f32.mrf.mxu0
  %863 = vmatprep.mubr.f32.mxu0 0.0
  %864 = vmatmul.mubr.f32.gmra.mxu0 %v780
  %v865 = vpop.f32.mrf.mxu0
  %v866 = vadd.f32 0.0, %v865
  %v867 = vpop.f32.mrf.mxu0
  %868 = vmatprep.mubr.f32.mxu0 0.0
  %869 = vmatmul.mubr.f32.gmra.mxu0 %v781
  %v870 = vpop.f32.mrf.mxu0
  %v871 = vadd.f32 0.0, %v870
  %v872 = vpop.f32.mrf.mxu0
  %873 = vmatprep.mubr.f32.mxu0 0.0
  %874 = vmatmul.mubr.f32.gmra.mxu0 %v782
  %v875 = vpop.f32.mrf.mxu0
  %v876 = vadd.f32 0.0, %v875
  %v877 = vpop.f32.mrf.mxu0
  %878 = vmatprep.mubr.f32.mxu0 0.0
  %879 = vmatmul.mubr.f32.gmra.mxu0 %v783
  %v880 = vpop.f32.mrf.mxu0
  %v881 = vadd.f32 0.0, %v880
  %v882 = vpop.f32.mrf.mxu0
  %883 = vdwg.mxu0
  %884 = vrot.lane.b32.xlu0 %v758, 64
  %v885 = vpop.permute.xlu0 %884
  %886 = vrot.lane.b32.xlu0 %v759, 64
  %v887 = vpop.permute.xlu0 %886
  %888 = vrot.lane.b32.xlu0 %v760, 64
  %v889 = vpop.permute.xlu0 %888
  %890 = vrot.lane.b32.xlu0 %v761, 64
  %v891 = vpop.permute.xlu0 %890
  %892 = vrot.lane.b32.xlu0 %v762, 64
  %v893 = vpop.permute.xlu0 %892
  %894 = vrot.lane.b32.xlu0 %v763, 64
  %v895 = vpop.permute.xlu0 %894
  %896 = vrot.lane.b32.xlu0 %v764, 64
  %v897 = vpop.permute.xlu0 %896
  %v898 = vmul.f32 %v746, %v885
  %v899 = vmul.f32 %v747, %v887
  %v900 = vmul.f32 %v748, %v889
  %v901 = vmul.f32 %v749, %v891
  %v902 = vmul.f32 %v750, %v893
  %v903 = vmul.f32 %v751, %v895
  %v904 = vmul.f32 %v752, %v897
  %905 = vmatprep.subr.mxu0 0.0
  %906 = vmatpush1.msra.mxu0 %v533
  %907 = vmatprep.subr.mxu0 0.0
  %908 = vmatpush1.msra.mxu0 %v532
  %909 = vmatprep.subr.mxu0 0.0
  %910 = vmatpush1.msra.mxu0 %v531
  %911 = vmatprep.subr.mxu0 0.0
  %912 = vmatpush1.msra.mxu0 %v530
  %913 = vmatprep.subr.mxu0 0.0
  %914 = vmatpush1.msra.mxu0 %v529
  %915 = vmatprep.subr.mxu0 0.0
  %916 = vmatpush1.msra.mxu0 %v528
  %917 = vmatprep.subr.mxu0 0.0
  %918 = vmatpush1.msra.mxu0 %v527
  %919 = vmatprep.subr.mxu0 0.0
  %920 = vmatpush1.msra.mxu0 %v526
  %921 = vmatprep.subr.mxu0 0.0
  %922 = vmatpush1.msra.mxu0 %v525
  %923 = vmatprep.subr.mxu0 0.0
  %924 = vmatpush1.msra.mxu0 %v524
  %925 = vmatprep.subr.mxu0 0.0
  %926 = vmatpush1.msra.mxu0 %v523
  %927 = vmatprep.subr.mxu0 0.0
  %928 = vmatpush1.msra.mxu0 %v522
  %929 = vmatprep.subr.mxu0 0.0
  %930 = vmatpush1.msra.mxu0 %v521
  %931 = vmatprep.subr.mxu0 0.0
  %932 = vmatpush1.msra.mxu0 %v520
  %933 = vmatprep.subr.mxu0 0.0
  %934 = vmatpush1.msra.mxu0 %v519
  %935 = vmatprep.subr.mxu0 0.0
  %936 = vmatpush1.msra.mxu0 %v518
  %937 = vmatprep.subr.mxu0 0.0
  %938 = vmatpush2.msra.mxu0 0.0
  %939 = vmatprep.subr.mxu0 0.0
  %940 = vmatpush2.msra.mxu0 0.0
  %941 = vmatprep.subr.mxu0 0.0
  %942 = vmatpush2.msra.mxu0 0.0
  %943 = vmatprep.subr.mxu0 0.0
  %944 = vmatpush2.msra.mxu0 0.0
  %945 = vmatprep.subr.mxu0 0.0
  %946 = vmatpush2.msra.mxu0 0.0
  %947 = vmatprep.subr.mxu0 0.0
  %948 = vmatpush2.msra.mxu0 0.0
  %949 = vmatprep.subr.mxu0 0.0
  %950 = vmatpush2.msra.mxu0 0.0
  %951 = vmatprep.subr.mxu0 0.0
  %952 = vmatpush2.msra.mxu0 0.0
  %953 = vmatprep.subr.mxu0 0.0
  %954 = vmatpush2.msra.mxu0 0.0
  %955 = vmatprep.subr.mxu0 0.0
  %956 = vmatpush2.msra.mxu0 0.0
  %957 = vmatprep.subr.mxu0 0.0
  %958 = vmatpush2.msra.mxu0 0.0
  %959 = vmatprep.subr.mxu0 0.0
  %960 = vmatpush2.msra.mxu0 0.0
  %961 = vmatprep.subr.mxu0 0.0
  %962 = vmatpush2.msra.mxu0 0.0
  %963 = vmatprep.subr.mxu0 0.0
  %964 = vmatpush2.msra.mxu0 0.0
  %965 = vmatprep.subr.mxu0 0.0
  %966 = vmatpush2.msra.mxu0 0.0
  %967 = vmatprep.subr.mxu0 0.0
  %968 = vmatpush2.msra.mxu0 0.0
  %969 = vmatprep.mubr.f32.mxu0 0.0
  %970 = vmatmul.mubr.f32.gmra.mxu0 %v898
  %v971 = vpop.f32.mrf.mxu0
  %v972 = vadd.f32 0.0, %v971
  %v973 = vpop.f32.mrf.mxu0
  %974 = vmatprep.mubr.f32.mxu0 0.0
  %975 = vmatmul.mubr.f32.gmra.mxu0 %v899
  %v976 = vpop.f32.mrf.mxu0
  %v977 = vadd.f32 0.0, %v976
  %v978 = vpop.f32.mrf.mxu0
  %979 = vmatprep.mubr.f32.mxu0 0.0
  %980 = vmatmul.mubr.f32.gmra.mxu0 %v900
  %v981 = vpop.f32.mrf.mxu0
  %v982 = vadd.f32 0.0, %v981
  %v983 = vpop.f32.mrf.mxu0
  %984 = vmatprep.mubr.f32.mxu0 0.0
  %985 = vmatmul.mubr.f32.gmra.mxu0 %v901
  %v986 = vpop.f32.mrf.mxu0
  %v987 = vadd.f32 0.0, %v986
  %v988 = vpop.f32.mrf.mxu0
  %989 = vmatprep.mubr.f32.mxu0 0.0
  %990 = vmatmul.mubr.f32.gmra.mxu0 %v902
  %v991 = vpop.f32.mrf.mxu0
  %v992 = vadd.f32 0.0, %v991
  %v993 = vpop.f32.mrf.mxu0
  %994 = vmatprep.mubr.f32.mxu0 0.0
  %995 = vmatmul.mubr.f32.gmra.mxu0 %v903
  %v996 = vpop.f32.mrf.mxu0
  %v997 = vadd.f32 0.0, %v996
  %v998 = vpop.f32.mrf.mxu0
  %999 = vmatprep.mubr.f32.mxu0 0.0
  %1000 = vmatmul.mubr.f32.gmra.mxu0 %v904
  %v1001 = vpop.f32.mrf.mxu0
  %v1002 = vadd.f32 0.0, %v1001
  %v1003 = vpop.f32.mrf.mxu0
  %1004 = vdwg.mxu0
  %v1005 = vld [vmem:[%s2 + $0x5bd] sm:$0x1]
  %v1006 = vlaneseq
  %v1007 = vshrl.u32 %v1006, 7
  %v1008 = vsub.s32 0, %v1007
  %v1009 = vrot.slane %v1005, %v1008
  %v1010 = vmul.f32 %v746, %v1009
  %v1011 = vmul.f32 %v747, %v1009
  %v1012 = vmul.f32 %v748, %v1009
  %v1013 = vmul.f32 %v749, %v1009
  %v1014 = vmul.f32 %v750, %v1009
  %v1015 = vmul.f32 %v751, %v1009
  %v1016 = vmul.f32 %v752, %v1009
  %1017 = vmatprep.subr.mxu0 0.0
  %1018 = vmatpush1.msra.mxu0 %v533
  %1019 = vmatprep.subr.mxu0 0.0
  %1020 = vmatpush1.msra.mxu0 %v532
  %1021 = vmatprep.subr.mxu0 0.0
  %1022 = vmatpush1.msra.mxu0 %v531
  %1023 = vmatprep.subr.mxu0 0.0
  %1024 = vmatpush1.msra.mxu0 %v530
  %1025 = vmatprep.subr.mxu0 0.0
  %1026 = vmatpush1.msra.mxu0 %v529
  %1027 = vmatprep.subr.mxu0 0.0
  %1028 = vmatpush1.msra.mxu0 %v528
  %1029 = vmatprep.subr.mxu0 0.0
  %1030 = vmatpush1.msra.mxu0 %v527
  %1031 = vmatprep.subr.mxu0 0.0
  %1032 = vmatpush1.msra.mxu0 %v526
  %1033 = vmatprep.subr.mxu0 0.0
  %1034 = vmatpush1.msra.mxu0 %v525
  %1035 = vmatprep.subr.mxu0 0.0
  %1036 = vmatpush1.msra.mxu0 %v524
  %1037 = vmatprep.subr.mxu0 0.0
  %1038 = vmatpush1.msra.mxu0 %v523
  %1039 = vmatprep.subr.mxu0 0.0
  %1040 = vmatpush1.msra.mxu0 %v522
  %1041 = vmatprep.subr.mxu0 0.0
  %1042 = vmatpush1.msra.mxu0 %v521
  %1043 = vmatprep.subr.mxu0 0.0
  %1044 = vmatpush1.msra.mxu0 %v520
  %1045 = vmatprep.subr.mxu0 0.0
  %1046 = vmatpush1.msra.mxu0 %v519
  %1047 = vmatprep.subr.mxu0 0.0
  %1048 = vmatpush1.msra.mxu0 %v518
  %1049 = vmatprep.subr.mxu0 0.0
  %1050 = vmatpush2.msra.mxu0 0.0
  %1051 = vmatprep.subr.mxu0 0.0
  %1052 = vmatpush2.msra.mxu0 0.0
  %1053 = vmatprep.subr.mxu0 0.0
  %1054 = vmatpush2.msra.mxu0 0.0
  %1055 = vmatprep.subr.mxu0 0.0
  %1056 = vmatpush2.msra.mxu0 0.0
  %1057 = vmatprep.subr.mxu0 0.0
  %1058 = vmatpush2.msra.mxu0 0.0
  %1059 = vmatprep.subr.mxu0 0.0
  %1060 = vmatpush2.msra.mxu0 0.0
  %1061 = vmatprep.subr.mxu0 0.0
  %1062 = vmatpush2.msra.mxu0 0.0
  %1063 = vmatprep.subr.mxu0 0.0
  %1064 = vmatpush2.msra.mxu0 0.0
  %1065 = vmatprep.subr.mxu0 0.0
  %1066 = vmatpush2.msra.mxu0 0.0
  %1067 = vmatprep.subr.mxu0 0.0
  %1068 = vmatpush2.msra.mxu0 0.0
  %1069 = vmatprep.subr.mxu0 0.0
  %1070 = vmatpush2.msra.mxu0 0.0
  %1071 = vmatprep.subr.mxu0 0.0
  %1072 = vmatpush2.msra.mxu0 0.0
  %1073 = vmatprep.subr.mxu0 0.0
  %1074 = vmatpush2.msra.mxu0 0.0
  %1075 = vmatprep.subr.mxu0 0.0
  %1076 = vmatpush2.msra.mxu0 0.0
  %1077 = vmatprep.subr.mxu0 0.0
  %1078 = vmatpush2.msra.mxu0 0.0
  %1079 = vmatprep.subr.mxu0 0.0
  %1080 = vmatpush2.msra.mxu0 0.0
  %1081 = vmatprep.mubr.f32.mxu0 0.0
  %1082 = vmatmul.mubr.f32.gmra.mxu0 %v1010
  %v1083 = vpop.f32.mrf.mxu0
  %v1084 = vadd.f32 0.0, %v1083
  %v1085 = vpop.f32.mrf.mxu0
  %1086 = vmatprep.mubr.f32.mxu0 0.0
  %1087 = vmatmul.mubr.f32.gmra.mxu0 %v1011
  %v1088 = vpop.f32.mrf.mxu0
  %v1089 = vadd.f32 0.0, %v1088
  %v1090 = vpop.f32.mrf.mxu0
  %1091 = vmatprep.mubr.f32.mxu0 0.0
  %1092 = vmatmul.mubr.f32.gmra.mxu0 %v1012
  %v1093 = vpop.f32.mrf.mxu0
  %v1094 = vadd.f32 0.0, %v1093
  %v1095 = vpop.f32.mrf.mxu0
  %1096 = vmatprep.mubr.f32.mxu0 0.0
  %1097 = vmatmul.mubr.f32.gmra.mxu0 %v1013
  %v1098 = vpop.f32.mrf.mxu0
  %v1099 = vadd.f32 0.0, %v1098
  %v1100 = vpop.f32.mrf.mxu0
  %1101 = vmatprep.mubr.f32.mxu0 0.0
  %1102 = vmatmul.mubr.f32.gmra.mxu0 %v1014
  %v1103 = vpop.f32.mrf.mxu0
  %v1104 = vadd.f32 0.0, %v1103
  %v1105 = vpop.f32.mrf.mxu0
  %1106 = vmatprep.mubr.f32.mxu0 0.0
  %1107 = vmatmul.mubr.f32.gmra.mxu0 %v1015
  %v1108 = vpop.f32.mrf.mxu0
  %v1109 = vadd.f32 0.0, %v1108
  %v1110 = vpop.f32.mrf.mxu0
  %1111 = vmatprep.mubr.f32.mxu0 0.0
  %1112 = vmatmul.mubr.f32.gmra.mxu0 %v1016
  %v1113 = vpop.f32.mrf.mxu0
  %v1114 = vadd.f32 0.0, %v1113
  %v1115 = vpop.f32.mrf.mxu0
  %1116 = vdwg.mxu0
  %v1117 = vmax.f32 %v851, %v972
  %v1118 = vmax.f32 %v856, %v977
  %v1119 = vmax.f32 %v861, %v982
  %v1120 = vmax.f32 %v866, %v987
  %v1121 = vmax.f32 %v871, %v992
  %v1122 = vmax.f32 %v876, %v997
  %v1123 = vmax.f32 %v881, %v1002
  %v1124 = vmax.f32 %v1117, %v1084
  %v1125 = vmax.f32 %v1118, %v1089
  %v1126 = vmax.f32 %v1119, %v1094
  %v1127 = vmax.f32 %v1120, %v1099
  %v1128 = vmax.f32 %v1121, %v1104
  %v1129 = vmax.f32 %v1122, %v1109
  %v1130 = vmax.f32 %v1123, %v1114
  %v1131 = vsub.f32 %v851, %v1124
  %v1132 = vsub.f32 %v856, %v1125
  %v1133 = vsub.f32 %v861, %v1126
  %v1134 = vsub.f32 %v866, %v1127
  %v1135 = vsub.f32 %v871, %v1128
  %v1136 = vsub.f32 %v876, %v1129
  %v1137 = vsub.f32 %v881, %v1130
  %v1138 = vmul.f32 %v1131, 1.442695
  %v1139 = vpow.pop %v1138
  %v1140 = vmul.f32 %v1132, 1.442695
  %v1141 = vpow.pop %v1140
  %v1142 = vmul.f32 %v1133, 1.442695
  %v1143 = vpow.pop %v1142
  %v1144 = vmul.f32 %v1134, 1.442695
  %v1145 = vpow.pop %v1144
  %v1146 = vmul.f32 %v1135, 1.442695
  %v1147 = vpow.pop %v1146
  %v1148 = vmul.f32 %v1136, 1.442695
  %v1149 = vpow.pop %v1148
  %v1150 = vmul.f32 %v1137, 1.442695
  %v1151 = vpow.pop %v1150
  %v1152 = vsub.f32 %v972, %v1124
  %v1153 = vsub.f32 %v977, %v1125
  %v1154 = vsub.f32 %v982, %v1126
  %v1155 = vsub.f32 %v987, %v1127
  %v1156 = vsub.f32 %v992, %v1128
  %v1157 = vsub.f32 %v997, %v1129
  %v1158 = vsub.f32 %v1002, %v1130
  %v1159 = vmul.f32 %v1152, 1.442695
  %v1160 = vpow.pop %v1159
  %v1161 = vmul.f32 %v1153, 1.442695
  %v1162 = vpow.pop %v1161
  %v1163 = vmul.f32 %v1154, 1.442695
  %v1164 = vpow.pop %v1163
  %v1165 = vmul.f32 %v1155, 1.442695
  %v1166 = vpow.pop %v1165
  %v1167 = vmul.f32 %v1156, 1.442695
  %v1168 = vpow.pop %v1167
  %v1169 = vmul.f32 %v1157, 1.442695
  %v1170 = vpow.pop %v1169
  %v1171 = vmul.f32 %v1158, 1.442695
  %v1172 = vpow.pop %v1171
  %v1173 = vsub.f32 %v1084, %v1124
  %v1174 = vsub.f32 %v1089, %v1125
  %v1175 = vsub.f32 %v1094, %v1126
  %v1176 = vsub.f32 %v1099, %v1127
  %v1177 = vsub.f32 %v1104, %v1128
  %v1178 = vsub.f32 %v1109, %v1129
  %v1179 = vsub.f32 %v1114, %v1130
  %v1180 = vmul.f32 %v1173, 1.442695
  %v1181 = vpow.pop %v1180
  %v1182 = vmul.f32 %v1174, 1.442695
  %v1183 = vpow.pop %v1182
  %v1184 = vmul.f32 %v1175, 1.442695
  %v1185 = vpow.pop %v1184
  %v1186 = vmul.f32 %v1176, 1.442695
  %v1187 = vpow.pop %v1186
  %v1188 = vmul.f32 %v1177, 1.442695
  %v1189 = vpow.pop %v1188
  %v1190 = vmul.f32 %v1178, 1.442695
  %v1191 = vpow.pop %v1190
  %v1192 = vmul.f32 %v1179, 1.442695
  %v1193 = vpow.pop %v1192
  %v1194 = vadd.f32 %v1139, %v1160
  %v1195 = vadd.f32 %v1141, %v1162
  %v1196 = vadd.f32 %v1143, %v1164
  %v1197 = vadd.f32 %v1145, %v1166
  %v1198 = vadd.f32 %v1147, %v1168
  %v1199 = vadd.f32 %v1149, %v1170
  %v1200 = vadd.f32 %v1151, %v1172
  %v1201 = vadd.f32 %v1194, %v1181
  %v1202 = vadd.f32 %v1195, %v1183
  %v1203 = vadd.f32 %v1196, %v1185
  %v1204 = vadd.f32 %v1197, %v1187
  %v1205 = vadd.f32 %v1198, %v1189
  %v1206 = vadd.f32 %v1199, %v1191
  %v1207 = vadd.f32 %v1200, %v1193
  %v1208 = vrcp.pop %v1201
  %v1209 = vrcp.pop %v1202
  %v1210 = vrcp.pop %v1203
  %v1211 = vrcp.pop %v1204
  %v1212 = vrcp.pop %v1205
  %v1213 = vrcp.pop %v1206
  %v1214 = vrcp.pop %v1207
  %v1215 = vmul.f32 %v1139, %v1208
  %v1216 = vmul.f32 %v1141, %v1209
  %v1217 = vmul.f32 %v1143, %v1210
  %v1218 = vmul.f32 %v1145, %v1211
  %v1219 = vmul.f32 %v1147, %v1212
  %v1220 = vmul.f32 %v1149, %v1213
  %v1221 = vmul.f32 %v1151, %v1214
  %v1222 = vmul.f32 %v1215, %v770
  %v1223 = vmul.f32 %v1216, %v771
  %v1224 = vmul.f32 %v1217, %v772
  %v1225 = vmul.f32 %v1218, %v773
  %v1226 = vmul.f32 %v1219, %v774
  %v1227 = vmul.f32 %v1220, %v775
  %v1228 = vmul.f32 %v1221, %v776
  %1229 = vrot.lane.b32.xlu0 %v770, 64
  %v1230 = vpop.permute.xlu0 %1229
  %1231 = vrot.lane.b32.xlu0 %v771, 64
  %v1232 = vpop.permute.xlu0 %1231
  %1233 = vrot.lane.b32.xlu0 %v772, 64
  %v1234 = vpop.permute.xlu0 %1233
  %1235 = vrot.lane.b32.xlu0 %v773, 64
  %v1236 = vpop.permute.xlu0 %1235
  %1237 = vrot.lane.b32.xlu0 %v774, 64
  %v1238 = vpop.permute.xlu0 %1237
  %1239 = vrot.lane.b32.xlu0 %v775, 64
  %v1240 = vpop.permute.xlu0 %1239
  %1241 = vrot.lane.b32.xlu0 %v776, 64
  %v1242 = vpop.permute.xlu0 %1241
  %v1243 = vmul.f32 %v1160, %v1208
  %v1244 = vmul.f32 %v1162, %v1209
  %v1245 = vmul.f32 %v1164, %v1210
  %v1246 = vmul.f32 %v1166, %v1211
  %v1247 = vmul.f32 %v1168, %v1212
  %v1248 = vmul.f32 %v1170, %v1213
  %v1249 = vmul.f32 %v1172, %v1214
  %v1250 = vmul.f32 %v1243, %v1230
  %v1251 = vmul.f32 %v1244, %v1232
  %v1252 = vmul.f32 %v1245, %v1234
  %v1253 = vmul.f32 %v1246, %v1236
  %v1254 = vmul.f32 %v1247, %v1238
  %v1255 = vmul.f32 %v1248, %v1240
  %v1256 = vmul.f32 %v1249, %v1242
  %v1257 = vadd.f32 %v1222, %v1250
  %v1258 = vadd.f32 %v1223, %v1251
  %v1259 = vadd.f32 %v1224, %v1252
  %v1260 = vadd.f32 %v1225, %v1253
  %v1261 = vadd.f32 %v1226, %v1254
  %v1262 = vadd.f32 %v1227, %v1255
  %v1263 = vadd.f32 %v1228, %v1256
  %v1264 = vmul.f32 %v1181, %v1208
  %v1265 = vmul.f32 %v1183, %v1209
  %v1266 = vmul.f32 %v1185, %v1210
  %v1267 = vmul.f32 %v1187, %v1211
  %v1268 = vmul.f32 %v1189, %v1212
  %v1269 = vmul.f32 %v1191, %v1213
  %v1270 = vmul.f32 %v1193, %v1214
  %v1271 = vld [vmem:[%s2 + $0x5be] sm:$0x1]
  %v1272 = vlaneseq
  %v1273 = vshrl.u32 %v1272, 7
  %v1274 = vsub.s32 0, %v1273
  %v1275 = vrot.slane %v1271, %v1274
  %v1276 = vmul.f32 %v1264, %v1275
  %v1277 = vmul.f32 %v1265, %v1275
  %v1278 = vmul.f32 %v1266, %v1275
  %v1279 = vmul.f32 %v1267, %v1275
  %v1280 = vmul.f32 %v1268, %v1275
  %v1281 = vmul.f32 %v1269, %v1275
  %v1282 = vmul.f32 %v1270, %v1275
  %v1283 = vadd.f32 %v1257, %v1276
  %v1284 = vadd.f32 %v1258, %v1277
  %v1285 = vadd.f32 %v1259, %v1278
  %v1286 = vadd.f32 %v1260, %v1279
  %v1287 = vadd.f32 %v1261, %v1280
  %v1288 = vadd.f32 %v1262, %v1281
  %v1289 = vadd.f32 %v1263, %v1282
  %v1290 = vld [vmem:[%s2 + $0x5bf] sm:$0x1]
  %v1291 = vlaneseq
  %v1292 = vshrl.u32 %v1291, 7
  %v1293 = vsub.s32 0, %v1292
  %v1294 = vrot.slane %v1290, %v1293
  %1295 = vmatprep.subr.mxu0 0.0
  %1296 = vmatpush1.msra.mxu0 %v517
  %1297 = vmatprep.subr.mxu0 0.0
  %1298 = vmatpush1.msra.mxu0 %v516
  %1299 = vmatprep.subr.mxu0 0.0
  %1300 = vmatpush1.msra.mxu0 %v515
  %1301 = vmatprep.subr.mxu0 0.0
  %1302 = vmatpush1.msra.mxu0 %v514
  %1303 = vmatprep.subr.mxu0 0.0
  %1304 = vmatpush1.msra.mxu0 %v513
  %1305 = vmatprep.subr.mxu0 0.0
  %1306 = vmatpush1.msra.mxu0 %v512
  %1307 = vmatprep.subr.mxu0 0.0
  %1308 = vmatpush1.msra.mxu0 %v511
  %1309 = vmatprep.subr.mxu0 0.0
  %1310 = vmatpush1.msra.mxu0 %v510
  %1311 = vmatprep.subr.mxu0 0.0
  %1312 = vmatpush1.msra.mxu0 %v509
  %1313 = vmatprep.subr.mxu0 0.0
  %1314 = vmatpush1.msra.mxu0 %v508
  %1315 = vmatprep.subr.mxu0 0.0
  %1316 = vmatpush1.msra.mxu0 %v507
  %1317 = vmatprep.subr.mxu0 0.0
  %1318 = vmatpush1.msra.mxu0 %v506
  %1319 = vmatprep.subr.mxu0 0.0
  %1320 = vmatpush1.msra.mxu0 %v505
  %1321 = vmatprep.subr.mxu0 0.0
  %1322 = vmatpush1.msra.mxu0 %v504
  %1323 = vmatprep.subr.mxu0 0.0
  %1324 = vmatpush1.msra.mxu0 %v503
  %1325 = vmatprep.subr.mxu0 0.0
  %1326 = vmatpush1.msra.mxu0 %v502
  %1327 = vmatprep.subr.mxu0 0.0
  %1328 = vmatpush2.msra.mxu0 0.0
  %1329 = vmatprep.subr.mxu0 0.0
  %1330 = vmatpush2.msra.mxu0 0.0
  %1331 = vmatprep.subr.mxu0 0.0
  %1332 = vmatpush2.msra.mxu0 0.0
  %1333 = vmatprep.subr.mxu0 0.0
  %1334 = vmatpush2.msra.mxu0 0.0
  %1335 = vmatprep.subr.mxu0 0.0
  %1336 = vmatpush2.msra.mxu0 0.0
  %1337 = vmatprep.subr.mxu0 0.0
  %1338 = vmatpush2.msra.mxu0 0.0
  %1339 = vmatprep.subr.mxu0 0.0
  %1340 = vmatpush2.msra.mxu0 0.0
  %1341 = vmatprep.subr.mxu0 0.0
  %1342 = vmatpush2.msra.mxu0 0.0
  %1343 = vmatprep.subr.mxu0 0.0
  %1344 = vmatpush2.msra.mxu0 0.0
  %1345 = vmatprep.subr.mxu0 0.0
  %1346 = vmatpush2.msra.mxu0 0.0
  %1347 = vmatprep.subr.mxu0 0.0
  %1348 = vmatpush2.msra.mxu0 0.0
  %1349 = vmatprep.subr.mxu0 0.0
  %1350 = vmatpush2.msra.mxu0 0.0
  %1351 = vmatprep.subr.mxu0 0.0
  %1352 = vmatpush2.msra.mxu0 0.0
  %1353 = vmatprep.subr.mxu0 0.0
  %1354 = vmatpush2.msra.mxu0 0.0
  %1355 = vmatprep.subr.mxu0 0.0
  %1356 = vmatpush2.msra.mxu0 0.0
  %1357 = vmatprep.subr.mxu0 0.0
  %1358 = vmatpush2.msra.mxu0 0.0
  %1359 = vmatprep.mubr.f32.mxu0 0.0
  %1360 = vmatmul.mubr.f32.gmra.mxu0 %v1283
  %v1361 = vpop.f32.mrf.mxu0
  %v1362 = vadd.f32 %v1294, %v1361
  %v1363 = vpop.f32.mrf.mxu0
  %1364 = vmatprep.mubr.f32.mxu0 0.0
  %1365 = vmatmul.mubr.f32.gmra.mxu0 %v1284
  %v1366 = vpop.f32.mrf.mxu0
  %v1367 = vadd.f32 %v1294, %v1366
  %v1368 = vpop.f32.mrf.mxu0
  %1369 = vmatprep.mubr.f32.mxu0 0.0
  %1370 = vmatmul.mubr.f32.gmra.mxu0 %v1285
  %v1371 = vpop.f32.mrf.mxu0
  %v1372 = vadd.f32 %v1294, %v1371
  %v1373 = vpop.f32.mrf.mxu0
  %1374 = vmatprep.mubr.f32.mxu0 0.0
  %1375 = vmatmul.mubr.f32.gmra.mxu0 %v1286
  %v1376 = vpop.f32.mrf.mxu0
  %v1377 = vadd.f32 %v1294, %v1376
  %v1378 = vpop.f32.mrf.mxu0
  %1379 = vmatprep.mubr.f32.mxu0 0.0
  %1380 = vmatmul.mubr.f32.gmra.mxu0 %v1287
  %v1381 = vpop.f32.mrf.mxu0
  %v1382 = vadd.f32 %v1294, %v1381
  %v1383 = vpop.f32.mrf.mxu0
  %1384 = vmatprep.mubr.f32.mxu0 0.0
  %1385 = vmatmul.mubr.f32.gmra.mxu0 %v1288
  %v1386 = vpop.f32.mrf.mxu0
  %v1387 = vadd.f32 %v1294, %v1386
  %v1388 = vpop.f32.mrf.mxu0
  %1389 = vmatprep.mubr.f32.mxu0 0.0
  %1390 = vmatmul.mubr.f32.gmra.mxu0 %v1289
  %v1391 = vpop.f32.mrf.mxu0
  %v1392 = vadd.f32 %v1294, %v1391
  %v1393 = vpop.f32.mrf.mxu0
  %1394 = vdwg.mxu0
  %v1395 = vadd.f32 %v1362, %v111
  %v1396 = vadd.f32 %v1367, %v116
  %v1397 = vadd.f32 %v1372, %v121
  %v1398 = vadd.f32 %v1377, %v126
  %v1399 = vadd.f32 %v1382, %v131
  %v1400 = vadd.f32 %v1387, %v136
  %v1401 = vadd.f32 %v1392, %v141
  %1402 = vmatprep.subr.mxu0 0.0
  %1403 = vmatpush1.msra.mxu0 %v159
  %1404 = vmatprep.subr.mxu0 0.0
  %1405 = vmatpush1.msra.mxu0 %v158
  %1406 = vmatprep.subr.mxu0 0.0
  %1407 = vmatpush1.msra.mxu0 %v157
  %1408 = vmatprep.subr.mxu0 0.0
  %1409 = vmatpush1.msra.mxu0 %v156
  %1410 = vmatprep.subr.mxu0 0.0
  %1411 = vmatpush1.msra.mxu0 %v155
  %1412 = vmatprep.subr.mxu0 0.0
  %1413 = vmatpush1.msra.mxu0 %v154
  %1414 = vmatprep.subr.mxu0 0.0
  %1415 = vmatpush1.msra.mxu0 %v153
  %1416 = vmatprep.subr.mxu0 0.0
  %1417 = vmatpush1.msra.mxu0 %v152
  %1418 = vmatprep.subr.mxu0 0.0
  %1419 = vmatpush1.msra.mxu0 %v151
  %1420 = vmatprep.subr.mxu0 0.0
  %1421 = vmatpush1.msra.mxu0 %v150
  %1422 = vmatprep.subr.mxu0 0.0
  %1423 = vmatpush1.msra.mxu0 %v149
  %1424 = vmatprep.subr.mxu0 0.0
  %1425 = vmatpush1.msra.mxu0 %v148
  %1426 = vmatprep.subr.mxu0 0.0
  %1427 = vmatpush1.msra.mxu0 %v147
  %1428 = vmatprep.subr.mxu0 0.0
  %1429 = vmatpush1.msra.mxu0 %v146
  %1430 = vmatprep.subr.mxu0 0.0
  %1431 = vmatpush1.msra.mxu0 %v145
  %1432 = vmatprep.subr.mxu0 0.0
  %1433 = vmatpush1.msra.mxu0 %v144
  %1434 = vmatprep.subr.mxu0 0.0
  %1435 = vmatpush2.msra.mxu0 0.0
  %1436 = vmatprep.subr.mxu0 0.0
  %1437 = vmatpush2.msra.mxu0 0.0
  %1438 = vmatprep.subr.mxu0 0.0
  %1439 = vmatpush2.msra.mxu0 0.0
  %1440 = vmatprep.subr.mxu0 0.0
  %1441 = vmatpush2.msra.mxu0 0.0
  %1442 = vmatprep.subr.mxu0 0.0
  %1443 = vmatpush2.msra.mxu0 0.0
  %1444 = vmatprep.subr.mxu0 0.0
  %1445 = vmatpush2.msra.mxu0 0.0
  %1446 = vmatprep.subr.mxu0 0.0
  %1447 = vmatpush2.msra.mxu0 0.0
  %1448 = vmatprep.subr.mxu0 0.0
  %1449 = vmatpush2.msra.mxu0 0.0
  %1450 = vmatprep.subr.mxu0 0.0
  %1451 = vmatpush2.msra.mxu0 0.0
  %1452 = vmatprep.subr.mxu0 0.0
  %1453 = vmatpush2.msra.mxu0 0.0
  %1454 = vmatprep.subr.mxu0 0.0
  %1455 = vmatpush2.msra.mxu0 0.0
  %1456 = vmatprep.subr.mxu0 0.0
  %1457 = vmatpush2.msra.mxu0 0.0
  %1458 = vmatprep.subr.mxu0 0.0
  %1459 = vmatpush2.msra.mxu0 0.0
  %1460 = vmatprep.subr.mxu0 0.0
  %1461 = vmatpush2.msra.mxu0 0.0
  %1462 = vmatprep.subr.mxu0 0.0
  %1463 = vmatpush2.msra.mxu0 0.0
  %1464 = vmatprep.subr.mxu0 0.0
  %1465 = vmatpush2.msra.mxu0 0.0
  %1466 = vmatprep.mubr.f32.mxu0 0.0
  %1467 = vmatmul.mubr.f32.gmra.mxu0 %v1395
  %v1468 = vpop.f32.mrf.mxu0
  %v1469 = vadd.f32 0.0, %v1468
  %v1470 = vpop.f32.mrf.mxu0
  %1471 = vmatprep.mubr.f32.mxu0 0.0
  %1472 = vmatmul.mubr.f32.gmra.mxu0 %v1396
  %v1473 = vpop.f32.mrf.mxu0
  %v1474 = vadd.f32 0.0, %v1473
  %v1475 = vpop.f32.mrf.mxu0
  %1476 = vmatprep.mubr.f32.mxu0 0.0
  %1477 = vmatmul.mubr.f32.gmra.mxu0 %v1397
  %v1478 = vpop.f32.mrf.mxu0
  %v1479 = vadd.f32 0.0, %v1478
  %v1480 = vpop.f32.mrf.mxu0
  %1481 = vmatprep.mubr.f32.mxu0 0.0
  %1482 = vmatmul.mubr.f32.gmra.mxu0 %v1398
  %v1483 = vpop.f32.mrf.mxu0
  %v1484 = vadd.f32 0.0, %v1483
  %v1485 = vpop.f32.mrf.mxu0
  %1486 = vmatprep.mubr.f32.mxu0 0.0
  %1487 = vmatmul.mubr.f32.gmra.mxu0 %v1399
  %v1488 = vpop.f32.mrf.mxu0
  %v1489 = vadd.f32 0.0, %v1488
  %v1490 = vpop.f32.mrf.mxu0
  %1491 = vmatprep.mubr.f32.mxu0 0.0
  %1492 = vmatmul.mubr.f32.gmra.mxu0 %v1400
  %v1493 = vpop.f32.mrf.mxu0
  %v1494 = vadd.f32 0.0, %v1493
  %v1495 = vpop.f32.mrf.mxu0
  %1496 = vmatprep.mubr.f32.mxu0 0.0
  %1497 = vmatmul.mubr.f32.gmra.mxu0 %v1401
  %v1498 = vpop.f32.mrf.mxu0
  %v1499 = vadd.f32 0.0, %v1498
  %v1500 = vpop.f32.mrf.mxu0
  %1501 = vdwg.mxu0
  %v1502 = vmul.f32 %v1395, %v1395
  %v1503 = vmul.f32 %v1396, %v1396
  %v1504 = vmul.f32 %v1397, %v1397
  %v1505 = vmul.f32 %v1398, %v1398
  %v1506 = vmul.f32 %v1399, %v1399
  %v1507 = vmul.f32 %v1400, %v1400
  %v1508 = vmul.f32 %v1401, %v1401
  %1509 = vmatprep.subr.mxu0 0.0
  %1510 = vmatpush1.msra.mxu0 %v159
  %1511 = vmatprep.subr.mxu0 0.0
  %1512 = vmatpush1.msra.mxu0 %v158
  %1513 = vmatprep.subr.mxu0 0.0
  %1514 = vmatpush1.msra.mxu0 %v157
  %1515 = vmatprep.subr.mxu0 0.0
  %1516 = vmatpush1.msra.mxu0 %v156
  %1517 = vmatprep.subr.mxu0 0.0
  %1518 = vmatpush1.msra.mxu0 %v155
  %1519 = vmatprep.subr.mxu0 0.0
  %1520 = vmatpush1.msra.mxu0 %v154
  %1521 = vmatprep.subr.mxu0 0.0
  %1522 = vmatpush1.msra.mxu0 %v153
  %1523 = vmatprep.subr.mxu0 0.0
  %1524 = vmatpush1.msra.mxu0 %v152
  %1525 = vmatprep.subr.mxu0 0.0
  %1526 = vmatpush1.msra.mxu0 %v151
  %1527 = vmatprep.subr.mxu0 0.0
  %1528 = vmatpush1.msra.mxu0 %v150
  %1529 = vmatprep.subr.mxu0 0.0
  %1530 = vmatpush1.msra.mxu0 %v149
  %1531 = vmatprep.subr.mxu0 0.0
  %1532 = vmatpush1.msra.mxu0 %v148
  %1533 = vmatprep.subr.mxu0 0.0
  %1534 = vmatpush1.msra.mxu0 %v147
  %1535 = vmatprep.subr.mxu0 0.0
  %1536 = vmatpush1.msra.mxu0 %v146
  %1537 = vmatprep.subr.mxu0 0.0
  %1538 = vmatpush1.msra.mxu0 %v145
  %1539 = vmatprep.subr.mxu0 0.0
  %1540 = vmatpush1.msra.mxu0 %v144
  %1541 = vmatprep.subr.mxu0 0.0
  %1542 = vmatpush2.msra.mxu0 0.0
  %1543 = vmatprep.subr.mxu0 0.0
  %1544 = vmatpush2.msra.mxu0 0.0
  %1545 = vmatprep.subr.mxu0 0.0
  %1546 = vmatpush2.msra.mxu0 0.0
  %1547 = vmatprep.subr.mxu0 0.0
  %1548 = vmatpush2.msra.mxu0 0.0
  %1549 = vmatprep.subr.mxu0 0.0
  %1550 = vmatpush2.msra.mxu0 0.0
  %1551 = vmatprep.subr.mxu0 0.0
  %1552 = vmatpush2.msra.mxu0 0.0
  %1553 = vmatprep.subr.mxu0 0.0
  %1554 = vmatpush2.msra.mxu0 0.0
  %1555 = vmatprep.subr.mxu0 0.0
  %1556 = vmatpush2.msra.mxu0 0.0
  %1557 = vmatprep.subr.mxu0 0.0
  %1558 = vmatpush2.msra.mxu0 0.0
  %1559 = vmatprep.subr.mxu0 0.0
  %1560 = vmatpush2.msra.mxu0 0.0
  %1561 = vmatprep.subr.mxu0 0.0
  %1562 = vmatpush2.msra.mxu0 0.0
  %1563 = vmatprep.subr.mxu0 0.0
  %1564 = vmatpush2.msra.mxu0 0.0
  %1565 = vmatprep.subr.mxu0 0.0
  %1566 = vmatpush2.msra.mxu0 0.0
  %1567 = vmatprep.subr.mxu0 0.0
  %1568 = vmatpush2.msra.mxu0 0.0
  %1569 = vmatprep.subr.mxu0 0.0
  %1570 = vmatpush2.msra.mxu0 0.0
  %1571 = vmatprep.subr.mxu0 0.0
  %1572 = vmatpush2.msra.mxu0 0.0
  %1573 = vmatprep.mubr.f32.mxu0 0.0
  %1574 = vmatmul.mubr.f32.gmra.mxu0 %v1502
  %v1575 = vpop.f32.mrf.mxu0
  %v1576 = vadd.f32 0.0, %v1575
  %v1577 = vpop.f32.mrf.mxu0
  %1578 = vmatprep.mubr.f32.mxu0 0.0
  %1579 = vmatmul.mubr.f32.gmra.mxu0 %v1503
  %v1580 = vpop.f32.mrf.mxu0
  %v1581 = vadd.f32 0.0, %v1580
  %v1582 = vpop.f32.mrf.mxu0
  %1583 = vmatprep.mubr.f32.mxu0 0.0
  %1584 = vmatmul.mubr.f32.gmra.mxu0 %v1504
  %v1585 = vpop.f32.mrf.mxu0
  %v1586 = vadd.f32 0.0, %v1585
  %v1587 = vpop.f32.mrf.mxu0
  %1588 = vmatprep.mubr.f32.mxu0 0.0
  %1589 = vmatmul.mubr.f32.gmra.mxu0 %v1505
  %v1590 = vpop.f32.mrf.mxu0
  %v1591 = vadd.f32 0.0, %v1590
  %v1592 = vpop.f32.mrf.mxu0
  %1593 = vmatprep.mubr.f32.mxu0 0.0
  %1594 = vmatmul.mubr.f32.gmra.mxu0 %v1506
  %v1595 = vpop.f32.mrf.mxu0
  %v1596 = vadd.f32 0.0, %v1595
  %v1597 = vpop.f32.mrf.mxu0
  %1598 = vmatprep.mubr.f32.mxu0 0.0
  %1599 = vmatmul.mubr.f32.gmra.mxu0 %v1507
  %v1600 = vpop.f32.mrf.mxu0
  %v1601 = vadd.f32 0.0, %v1600
  %v1602 = vpop.f32.mrf.mxu0
  %1603 = vmatprep.mubr.f32.mxu0 0.0
  %1604 = vmatmul.mubr.f32.gmra.mxu0 %v1508
  %v1605 = vpop.f32.mrf.mxu0
  %v1606 = vadd.f32 0.0, %v1605
  %v1607 = vpop.f32.mrf.mxu0
  %1608 = vdwg.mxu0
  %v1609 = vmul.f32 %v1469, 0.015625
  %v1610 = vmul.f32 %v1474, 0.015625
  %v1611 = vmul.f32 %v1479, 0.015625
  %v1612 = vmul.f32 %v1484, 0.015625
  %v1613 = vmul.f32 %v1489, 0.015625
  %v1614 = vmul.f32 %v1494, 0.015625
  %v1615 = vmul.f32 %v1499, 0.015625
  %v1616 = vmul.f32 %v1576, 0.015625
  %v1617 = vmul.f32 %v1581, 0.015625
  %v1618 = vmul.f32 %v1586, 0.015625
  %v1619 = vmul.f32 %v1591, 0.015625
  %v1620 = vmul.f32 %v1596, 0.015625
  %v1621 = vmul.f32 %v1601, 0.015625
  %v1622 = vmul.f32 %v1606, 0.015625
  %v1623 = vmul.f32 %v1609, %v1609
  %v1624 = vmul.f32 %v1610, %v1610
  %v1625 = vmul.f32 %v1611, %v1611
  %v1626 = vmul.f32 %v1612, %v1612
  %v1627 = vmul.f32 %v1613, %v1613
  %v1628 = vmul.f32 %v1614, %v1614
  %v1629 = vmul.f32 %v1615, %v1615
  %v1630 = vsub.f32 %v1616, %v1623
  %v1631 = vsub.f32 %v1617, %v1624
  %v1632 = vsub.f32 %v1618, %v1625
  %v1633 = vsub.f32 %v1619, %v1626
  %v1634 = vsub.f32 %v1620, %v1627
  %v1635 = vsub.f32 %v1621, %v1628
  %v1636 = vsub.f32 %v1622, %v1629
  %v1637 = vmax.f32 %v1630, 0.0
  %v1638 = vmax.f32 %v1631, 0.0
  %v1639 = vmax.f32 %v1632, 0.0
  %v1640 = vmax.f32 %v1633, 0.0
  %v1641 = vmax.f32 %v1634, 0.0
  %v1642 = vmax.f32 %v1635, 0.0
  %v1643 = vmax.f32 %v1636, 0.0
  %v1644 = vsub.f32 %v1395, %v1609
  %v1645 = vsub.f32 %v1396, %v1610
  %v1646 = vsub.f32 %v1397, %v1611
  %v1647 = vsub.f32 %v1398, %v1612
  %v1648 = vsub.f32 %v1399, %v1613
  %v1649 = vsub.f32 %v1400, %v1614
  %v1650 = vsub.f32 %v1401, %v1615
  %v1651 = vadd.f32 %v1637, 1e-05
  %v1652 = vadd.f32 %v1638, 1e-05
  %v1653 = vadd.f32 %v1639, 1e-05
  %v1654 = vadd.f32 %v1640, 1e-05
  %v1655 = vadd.f32 %v1641, 1e-05
  %v1656 = vadd.f32 %v1642, 1e-05
  %v1657 = vadd.f32 %v1643, 1e-05
  %v1658 = vrsqrt.pop %v1651
  %v1659 = vrsqrt.pop %v1652
  %v1660 = vrsqrt.pop %v1653
  %v1661 = vrsqrt.pop %v1654
  %v1662 = vrsqrt.pop %v1655
  %v1663 = vrsqrt.pop %v1656
  %v1664 = vrsqrt.pop %v1657
  %v1665 = vmul.f32 %v1644, %v1658
  %v1666 = vmul.f32 %v1645, %v1659
  %v1667 = vmul.f32 %v1646, %v1660
  %v1668 = vmul.f32 %v1647, %v1661
  %v1669 = vmul.f32 %v1648, %v1662
  %v1670 = vmul.f32 %v1649, %v1663
  %v1671 = vmul.f32 %v1650, %v1664
  %v1672 = vld [vmem:[%s2 + $0x5c0] sm:$0x1]
  %v1673 = vlaneseq
  %v1674 = vshrl.u32 %v1673, 7
  %v1675 = vsub.s32 0, %v1674
  %v1676 = vrot.slane %v1672, %v1675
  %v1677 = vmul.f32 %v1665, %v1676
  %v1678 = vmul.f32 %v1666, %v1676
  %v1679 = vmul.f32 %v1667, %v1676
  %v1680 = vmul.f32 %v1668, %v1676
  %v1681 = vmul.f32 %v1669, %v1676
  %v1682 = vmul.f32 %v1670, %v1676
  %v1683 = vmul.f32 %v1671, %v1676
  %v1684 = vld [vmem:[%s2 + $0x5c1] sm:$0x1]
  %v1685 = vlaneseq
  %v1686 = vshrl.u32 %v1685, 7
  %v1687 = vsub.s32 0, %v1686
  %v1688 = vrot.slane %v1684, %v1687
  %v1689 = vadd.f32 %v1677, %v1688
  %v1690 = vadd.f32 %v1678, %v1688
  %v1691 = vadd.f32 %v1679, %v1688
  %v1692 = vadd.f32 %v1680, %v1688
  %v1693 = vadd.f32 %v1681, %v1688
  %v1694 = vadd.f32 %v1682, %v1688
  %v1695 = vadd.f32 %v1683, %v1688
  %v1696 = vld [vmem:[%s2 + $0xb8] sm:$0xff]
  %v1697 = vld [vmem:[%s2 + $0xc0] sm:$0xff]
  %v1698 = vld [vmem:[%s2 + $0xc8] sm:$0xff]
  %v1699 = vld [vmem:[%s2 + $0xd0] sm:$0xff]
  %v1700 = vld [vmem:[%s2 + $0xd8] sm:$0xff]
  %v1701 = vld [vmem:[%s2 + $0xe0] sm:$0xff]
  %v1702 = vld [vmem:[%s2 + $0xe8] sm:$0xff]
  %v1703 = vld [vmem:[%s2 + $0xf0] sm:$0xff]
  %v1704 = vld [vmem:[%s2 + $0xf8] sm:$0xff]
  %v1705 = vld [vmem:[%s2 + $0x100] sm:$0xff]
  %v1706 = vld [vmem:[%s2 + $0x108] sm:$0xff]
  %v1707 = vld [vmem:[%s2 + $0x110] sm:$0xff]
  %v1708 = vld [vmem:[%s2 + $0x118] sm:$0xff]
  %v1709 = vld [vmem:[%s2 + $0x120] sm:$0xff]
  %v1710 = vld [vmem:[%s2 + $0x128] sm:$0xff]
  %v1711 = vld [vmem:[%s2 + $0x130] sm:$0xff]
  %v1712 = vld [vmem:[%s2 + $0x138] sm:$0xff]
  %v1713 = vld [vmem:[%s2 + $0x140] sm:$0xff]
  %v1714 = vld [vmem:[%s2 + $0x148] sm:$0xff]
  %v1715 = vld [vmem:[%s2 + $0x150] sm:$0xff]
  %v1716 = vld [vmem:[%s2 + $0x158] sm:$0xff]
  %v1717 = vld [vmem:[%s2 + $0x160] sm:$0xff]
  %v1718 = vld [vmem:[%s2 + $0x168] sm:$0xff]
  %v1719 = vld [vmem:[%s2 + $0x170] sm:$0xff]
  %v1720 = vld [vmem:[%s2 + $0x178] sm:$0xff]
  %v1721 = vld [vmem:[%s2 + $0x180] sm:$0xff]
  %v1722 = vld [vmem:[%s2 + $0x188] sm:$0xff]
  %v1723 = vld [vmem:[%s2 + $0x190] sm:$0xff]
  %v1724 = vld [vmem:[%s2 + $0x198] sm:$0xff]
  %v1725 = vld [vmem:[%s2 + $0x1a0] sm:$0xff]
  %v1726 = vld [vmem:[%s2 + $0x1a8] sm:$0xff]
  %v1727 = vld [vmem:[%s2 + $0x1b0] sm:$0xff]
  %v1728 = vld [vmem:[%s2 + $0x5c2] sm:$0x1]
  %v1729 = vlaneseq
  %v1730 = vshrl.u32 %v1729, 7
  %v1731 = vsub.s32 0, %v1730
  %v1732 = vrot.slane %v1728, %v1731
  %1733 = vmatprep.subr.mxu0 0.0
  %1734 = vmatpush1.msra.mxu0 %v1711
  %1735 = vmatprep.subr.mxu0 0.0
  %1736 = vmatpush1.msra.mxu0 %v1710
  %1737 = vmatprep.subr.mxu0 0.0
  %1738 = vmatpush1.msra.mxu0 %v1709
  %1739 = vmatprep.subr.mxu0 0.0
  %1740 = vmatpush1.msra.mxu0 %v1708
  %1741 = vmatprep.subr.mxu0 0.0
  %1742 = vmatpush1.msra.mxu0 %v1707
  %1743 = vmatprep.subr.mxu0 0.0
  %1744 = vmatpush1.msra.mxu0 %v1706
  %1745 = vmatprep.subr.mxu0 0.0
  %1746 = vmatpush1.msra.mxu0 %v1705
  %1747 = vmatprep.subr.mxu0 0.0
  %1748 = vmatpush1.msra.mxu0 %v1704
  %1749 = vmatprep.subr.mxu0 0.0
  %1750 = vmatpush1.msra.mxu0 %v1703
  %1751 = vmatprep.subr.mxu0 0.0
  %1752 = vmatpush1.msra.mxu0 %v1702
  %1753 = vmatprep.subr.mxu0 0.0
  %1754 = vmatpush1.msra.mxu0 %v1701
  %1755 = vmatprep.subr.mxu0 0.0
  %1756 = vmatpush1.msra.mxu0 %v1700
  %1757 = vmatprep.subr.mxu0 0.0
  %1758 = vmatpush1.msra.mxu0 %v1699
  %1759 = vmatprep.subr.mxu0 0.0
  %1760 = vmatpush1.msra.mxu0 %v1698
  %1761 = vmatprep.subr.mxu0 0.0
  %1762 = vmatpush1.msra.mxu0 %v1697
  %1763 = vmatprep.subr.mxu0 0.0
  %1764 = vmatpush1.msra.mxu0 %v1696
  %1765 = vmatprep.subr.mxu0 0.0
  %1766 = vmatpush2.msra.mxu0 0.0
  %1767 = vmatprep.subr.mxu0 0.0
  %1768 = vmatpush2.msra.mxu0 0.0
  %1769 = vmatprep.subr.mxu0 0.0
  %1770 = vmatpush2.msra.mxu0 0.0
  %1771 = vmatprep.subr.mxu0 0.0
  %1772 = vmatpush2.msra.mxu0 0.0
  %1773 = vmatprep.subr.mxu0 0.0
  %1774 = vmatpush2.msra.mxu0 0.0
  %1775 = vmatprep.subr.mxu0 0.0
  %1776 = vmatpush2.msra.mxu0 0.0
  %1777 = vmatprep.subr.mxu0 0.0
  %1778 = vmatpush2.msra.mxu0 0.0
  %1779 = vmatprep.subr.mxu0 0.0
  %1780 = vmatpush2.msra.mxu0 0.0
  %1781 = vmatprep.subr.mxu0 0.0
  %1782 = vmatpush2.msra.mxu0 0.0
  %1783 = vmatprep.subr.mxu0 0.0
  %1784 = vmatpush2.msra.mxu0 0.0
  %1785 = vmatprep.subr.mxu0 0.0
  %1786 = vmatpush2.msra.mxu0 0.0
  %1787 = vmatprep.subr.mxu0 0.0
  %1788 = vmatpush2.msra.mxu0 0.0
  %1789 = vmatprep.subr.mxu0 0.0
  %1790 = vmatpush2.msra.mxu0 0.0
  %1791 = vmatprep.subr.mxu0 0.0
  %1792 = vmatpush2.msra.mxu0 0.0
  %1793 = vmatprep.subr.mxu0 0.0
  %1794 = vmatpush2.msra.mxu0 0.0
  %1795 = vmatprep.subr.mxu0 0.0
  %1796 = vmatpush2.msra.mxu0 0.0
  %1797 = vmatprep.mubr.f32.mxu0 0.0
  %1798 = vmatmul.mubr.f32.gmra.mxu0 %v1689
  %v1799 = vpop.f32.mrf.mxu0
  %v1800 = vadd.f32 %v1732, %v1799
  %v1801 = vpop.f32.mrf.mxu0
  %1802 = vmatprep.mubr.f32.mxu0 0.0
  %1803 = vmatmul.mubr.f32.gmra.mxu0 %v1690
  %v1804 = vpop.f32.mrf.mxu0
  %v1805 = vadd.f32 %v1732, %v1804
  %v1806 = vpop.f32.mrf.mxu0
  %1807 = vmatprep.mubr.f32.mxu0 0.0
  %1808 = vmatmul.mubr.f32.gmra.mxu0 %v1691
  %v1809 = vpop.f32.mrf.mxu0
  %v1810 = vadd.f32 %v1732, %v1809
  %v1811 = vpop.f32.mrf.mxu0
  %1812 = vmatprep.mubr.f32.mxu0 0.0
  %1813 = vmatmul.mubr.f32.gmra.mxu0 %v1692
  %v1814 = vpop.f32.mrf.mxu0
  %v1815 = vadd.f32 %v1732, %v1814
  %v1816 = vpop.f32.mrf.mxu0
  %1817 = vmatprep.mubr.f32.mxu0 0.0
  %1818 = vmatmul.mubr.f32.gmra.mxu0 %v1693
  %v1819 = vpop.f32.mrf.mxu0
  %v1820 = vadd.f32 %v1732, %v1819
  %v1821 = vpop.f32.mrf.mxu0
  %1822 = vmatprep.mubr.f32.mxu0 0.0
  %1823 = vmatmul.mubr.f32.gmra.mxu0 %v1694
  %v1824 = vpop.f32.mrf.mxu0
  %v1825 = vadd.f32 %v1732, %v1824
  %v1826 = vpop.f32.mrf.mxu0
  %1827 = vmatprep.mubr.f32.mxu0 0.0
  %1828 = vmatmul.mubr.f32.gmra.mxu0 %v1695
  %v1829 = vpop.f32.mrf.mxu0
  %v1830 = vadd.f32 %v1732, %v1829
  %v1831 = vpop.f32.mrf.mxu0
  %1832 = vdwg.mxu0
  %v1833 = vmul.f32 %v1800, 0.5
  %v1834 = vmul.f32 %v1805, 0.5
  %v1835 = vmul.f32 %v1810, 0.5
  %v1836 = vmul.f32 %v1815, 0.5
  %v1837 = vmul.f32 %v1820, 0.5
  %v1838 = vmul.f32 %v1825, 0.5
  %v1839 = vmul.f32 %v1830, 0.5
  %v1840 = vmul.f32 %v1800, 0.70710677
  %v1841 = vmul.f32 %v1805, 0.70710677
  %v1842 = vmul.f32 %v1810, 0.70710677
  %v1843 = vmul.f32 %v1815, 0.70710677
  %v1844 = vmul.f32 %v1820, 0.70710677
  %v1845 = vmul.f32 %v1825, 0.70710677
  %v1846 = vmul.f32 %v1830, 0.70710677
  %v1847 = vand.u32 2147483647, %v1840
  %v1848 = vand.u32 2147483647, %v1841
  %v1849 = vand.u32 2147483647, %v1842
  %v1850 = vand.u32 2147483647, %v1843
  %v1851 = vand.u32 2147483647, %v1844
  %v1852 = vand.u32 2147483647, %v1845
  %v1853 = vand.u32 2147483647, %v1846
  %v1854 = vmul.f32 %v1847, 0.3275911
  %v1855 = vmul.f32 %v1848, 0.3275911
  %v1856 = vmul.f32 %v1849, 0.3275911
  %v1857 = vmul.f32 %v1850, 0.3275911
  %v1858 = vmul.f32 %v1851, 0.3275911
  %v1859 = vmul.f32 %v1852, 0.3275911
  %v1860 = vmul.f32 %v1853, 0.3275911
  %v1861 = vadd.f32 %v1854, 1.0
  %v1862 = vadd.f32 %v1855, 1.0
  %v1863 = vadd.f32 %v1856, 1.0
  %v1864 = vadd.f32 %v1857, 1.0
  %v1865 = vadd.f32 %v1858, 1.0
  %v1866 = vadd.f32 %v1859, 1.0
  %v1867 = vadd.f32 %v1860, 1.0
  %v1868 = vrcp.pop %v1861
  %v1869 = vrcp.pop %v1862
  %v1870 = vrcp.pop %v1863
  %v1871 = vrcp.pop %v1864
  %v1872 = vrcp.pop %v1865
  %v1873 = vrcp.pop %v1866
  %v1874 = vrcp.pop %v1867
  %v1875 = vmul.f32 %v1861, %v1868
  %v1876 = vmul.f32 %v1862, %v1869
  %v1877 = vmul.f32 %v1863, %v1870
  %v1878 = vmul.f32 %v1864, %v1871
  %v1879 = vmul.f32 %v1865, %v1872
  %v1880 = vmul.f32 %v1866, %v1873
  %v1881 = vmul.f32 %v1867, %v1874
  %v1882 = vsub.f32 2.0, %v1875
  %v1883 = vsub.f32 2.0, %v1876
  %v1884 = vsub.f32 2.0, %v1877
  %v1885 = vsub.f32 2.0, %v1878
  %v1886 = vsub.f32 2.0, %v1879
  %v1887 = vsub.f32 2.0, %v1880
  %v1888 = vsub.f32 2.0, %v1881
  %v1889 = vmul.f32 %v1868, %v1882
  %v1890 = vmul.f32 %v1869, %v1883
  %v1891 = vmul.f32 %v1870, %v1884
  %v1892 = vmul.f32 %v1871, %v1885
  %v1893 = vmul.f32 %v1872, %v1886
  %v1894 = vmul.f32 %v1873, %v1887
  %v1895 = vmul.f32 %v1874, %v1888
  %v1896 = vmul.f32 %v1889, 1.0614054
  %v1897 = vmul.f32 %v1890, 1.0614054
  %v1898 = vmul.f32 %v1891, 1.0614054
  %v1899 = vmul.f32 %v1892, 1.0614054
  %v1900 = vmul.f32 %v1893, 1.0614054
  %v1901 = vmul.f32 %v1894, 1.0614054
  %v1902 = vmul.f32 %v1895, 1.0614054
  %v1903 = vadd.f32 %v1896, -1.4531521
  %v1904 = vadd.f32 %v1897, -1.4531521
  %v1905 = vadd.f32 %v1898, -1.4531521
  %v1906 = vadd.f32 %v1899, -1.4531521
  %v1907 = vadd.f32 %v1900, -1.4531521
  %v1908 = vadd.f32 %v1901, -1.4531521
  %v1909 = vadd.f32 %v1902, -1.4531521
  %v1910 = vmul.f32 %v1903, %v1889
  %v1911 = vmul.f32 %v1904, %v1890
  %v1912 = vmul.f32 %v1905, %v1891
  %v1913 = vmul.f32 %v1906, %v1892
  %v1914 = vmul.f32 %v1907, %v1893
  %v1915 = vmul.f32 %v1908, %v1894
  %v1916 = vmul.f32 %v1909, %v1895
  %v1917 = vadd.f32 %v1910, 1.4214138
  %v1918 = vadd.f32 %v1911, 1.4214138
  %v1919 = vadd.f32 %v1912, 1.4214138
  %v1920 = vadd.f32 %v1913, 1.4214138
  %v1921 = vadd.f32 %v1914, 1.4214138
  %v1922 = vadd.f32 %v1915, 1.4214138
  %v1923 = vadd.f32 %v1916, 1.4214138
  %v1924 = vmul.f32 %v1917, %v1889
  %v1925 = vmul.f32 %v1918, %v1890
  %v1926 = vmul.f32 %v1919, %v1891
  %v1927 = vmul.f32 %v1920, %v1892
  %v1928 = vmul.f32 %v1921, %v1893
  %v1929 = vmul.f32 %v1922, %v1894
  %v1930 = vmul.f32 %v1923, %v1895
  %v1931 = vadd.f32 %v1924, -0.28449672
  %v1932 = vadd.f32 %v1925, -0.28449672
  %v1933 = vadd.f32 %v1926, -0.28449672
  %v1934 = vadd.f32 %v1927, -0.28449672
  %v1935 = vadd.f32 %v1928, -0.28449672
  %v1936 = vadd.f32 %v1929, -0.28449672
  %v1937 = vadd.f32 %v1930, -0.28449672
  %v1938 = vmul.f32 %v1931, %v1889
  %v1939 = vmul.f32 %v1932, %v1890
  %v1940 = vmul.f32 %v1933, %v1891
  %v1941 = vmul.f32 %v1934, %v1892
  %v1942 = vmul.f32 %v1935, %v1893
  %v1943 = vmul.f32 %v1936, %v1894
  %v1944 = vmul.f32 %v1937, %v1895
  %v1945 = vadd.f32 %v1938, 0.2548296
  %v1946 = vadd.f32 %v1939, 0.2548296
  %v1947 = vadd.f32 %v1940, 0.2548296
  %v1948 = vadd.f32 %v1941, 0.2548296
  %v1949 = vadd.f32 %v1942, 0.2548296
  %v1950 = vadd.f32 %v1943, 0.2548296
  %v1951 = vadd.f32 %v1944, 0.2548296
  %v1952 = vmul.f32 %v1945, %v1889
  %v1953 = vmul.f32 %v1946, %v1890
  %v1954 = vmul.f32 %v1947, %v1891
  %v1955 = vmul.f32 %v1948, %v1892
  %v1956 = vmul.f32 %v1949, %v1893
  %v1957 = vmul.f32 %v1950, %v1894
  %v1958 = vmul.f32 %v1951, %v1895
  %v1959 = vsub.f32 0.0, %v1847
  %v1960 = vsub.f32 0.0, %v1848
  %v1961 = vsub.f32 0.0, %v1849
  %v1962 = vsub.f32 0.0, %v1850
  %v1963 = vsub.f32 0.0, %v1851
  %v1964 = vsub.f32 0.0, %v1852
  %v1965 = vsub.f32 0.0, %v1853
  %v1966 = vmul.f32 %v1959, %v1847
  %v1967 = vmul.f32 %v1960, %v1848
  %v1968 = vmul.f32 %v1961, %v1849
  %v1969 = vmul.f32 %v1962, %v1850
  %v1970 = vmul.f32 %v1963, %v1851
  %v1971 = vmul.f32 %v1964, %v1852
  %v1972 = vmul.f32 %v1965, %v1853
  %v1973 = vmul.f32 %v1966, 1.442695
  %v1974 = vpow.pop %v1973
  %v1975 = vmul.f32 %v1967, 1.442695
  %v1976 = vpow.pop %v1975
  %v1977 = vmul.f32 %v1968, 1.442695
  %v1978 = vpow.pop %v1977
  %v1979 = vmul.f32 %v1969, 1.442695
  %v1980 = vpow.pop %v1979
  %v1981 = vmul.f32 %v1970, 1.442695
  %v1982 = vpow.pop %v1981
  %v1983 = vmul.f32 %v1971, 1.442695
  %v1984 = vpow.pop %v1983
  %v1985 = vmul.f32 %v1972, 1.442695
  %v1986 = vpow.pop %v1985
  %v1987 = vmul.f32 %v1952, %v1974
  %v1988 = vmul.f32 %v1953, %v1976
  %v1989 = vmul.f32 %v1954, %v1978
  %v1990 = vmul.f32 %v1955, %v1980
  %v1991 = vmul.f32 %v1956, %v1982
  %v1992 = vmul.f32 %v1957, %v1984
  %v1993 = vmul.f32 %v1958, %v1986
  %v1994 = vsub.f32 1.0, %v1987
  %v1995 = vsub.f32 1.0, %v1988
  %v1996 = vsub.f32 1.0, %v1989
  %v1997 = vsub.f32 1.0, %v1990
  %v1998 = vsub.f32 1.0, %v1991
  %v1999 = vsub.f32 1.0, %v1992
  %v2000 = vsub.f32 1.0, %v1993
  %vm2001 = vcmp.ge.f32.partialorder %v1840, 0.0
  %vm2002 = vcmp.ge.f32.partialorder %v1841, 0.0
  %vm2003 = vcmp.ge.f32.partialorder %v1842, 0.0
  %vm2004 = vcmp.ge.f32.partialorder %v1843, 0.0
  %vm2005 = vcmp.ge.f32.partialorder %v1844, 0.0
  %vm2006 = vcmp.ge.f32.partialorder %v1845, 0.0
  %vm2007 = vcmp.ge.f32.partialorder %v1846, 0.0
  %v2008 = vsub.f32 0.0, %v1994
  %v2009 = vsub.f32 0.0, %v1995
  %v2010 = vsub.f32 0.0, %v1996
  %v2011 = vsub.f32 0.0, %v1997
  %v2012 = vsub.f32 0.0, %v1998
  %v2013 = vsub.f32 0.0, %v1999
  %v2014 = vsub.f32 0.0, %v2000
  %v2015 = vsel %vm2001, %v1994, %v2008
  %v2016 = vsel %vm2002, %v1995, %v2009
  %v2017 = vsel %vm2003, %v1996, %v2010
  %v2018 = vsel %vm2004, %v1997, %v2011
  %v2019 = vsel %vm2005, %v1998, %v2012
  %v2020 = vsel %vm2006, %v1999, %v2013
  %v2021 = vsel %vm2007, %v2000, %v2014
  %v2022 = vadd.f32 %v2015, 1.0
  %v2023 = vadd.f32 %v2016, 1.0
  %v2024 = vadd.f32 %v2017, 1.0
  %v2025 = vadd.f32 %v2018, 1.0
  %v2026 = vadd.f32 %v2019, 1.0
  %v2027 = vadd.f32 %v2020, 1.0
  %v2028 = vadd.f32 %v2021, 1.0
  %v2029 = vmul.f32 %v1833, %v2022
  %v2030 = vmul.f32 %v1834, %v2023
  %v2031 = vmul.f32 %v1835, %v2024
  %v2032 = vmul.f32 %v1836, %v2025
  %v2033 = vmul.f32 %v1837, %v2026
  %v2034 = vmul.f32 %v1838, %v2027
  %v2035 = vmul.f32 %v1839, %v2028
  %v2036 = vld [vmem:[%s2 + $0x5c3] sm:$0x1]
  %v2037 = vlaneseq
  %v2038 = vshrl.u32 %v2037, 7
  %v2039 = vsub.s32 0, %v2038
  %v2040 = vrot.slane %v2036, %v2039
  %2041 = vmatprep.subr.mxu0 0.0
  %2042 = vmatpush1.msra.mxu0 %v1727
  %2043 = vmatprep.subr.mxu0 0.0
  %2044 = vmatpush1.msra.mxu0 %v1726
  %2045 = vmatprep.subr.mxu0 0.0
  %2046 = vmatpush1.msra.mxu0 %v1725
  %2047 = vmatprep.subr.mxu0 0.0
  %2048 = vmatpush1.msra.mxu0 %v1724
  %2049 = vmatprep.subr.mxu0 0.0
  %2050 = vmatpush1.msra.mxu0 %v1723
  %2051 = vmatprep.subr.mxu0 0.0
  %2052 = vmatpush1.msra.mxu0 %v1722
  %2053 = vmatprep.subr.mxu0 0.0
  %2054 = vmatpush1.msra.mxu0 %v1721
  %2055 = vmatprep.subr.mxu0 0.0
  %2056 = vmatpush1.msra.mxu0 %v1720
  %2057 = vmatprep.subr.mxu0 0.0
  %2058 = vmatpush1.msra.mxu0 %v1719
  %2059 = vmatprep.subr.mxu0 0.0
  %2060 = vmatpush1.msra.mxu0 %v1718
  %2061 = vmatprep.subr.mxu0 0.0
  %2062 = vmatpush1.msra.mxu0 %v1717
  %2063 = vmatprep.subr.mxu0 0.0
  %2064 = vmatpush1.msra.mxu0 %v1716
  %2065 = vmatprep.subr.mxu0 0.0
  %2066 = vmatpush1.msra.mxu0 %v1715
  %2067 = vmatprep.subr.mxu0 0.0
  %2068 = vmatpush1.msra.mxu0 %v1714
  %2069 = vmatprep.subr.mxu0 0.0
  %2070 = vmatpush1.msra.mxu0 %v1713
  %2071 = vmatprep.subr.mxu0 0.0
  %2072 = vmatpush1.msra.mxu0 %v1712
  %2073 = vmatprep.subr.mxu0 0.0
  %2074 = vmatpush2.msra.mxu0 0.0
  %2075 = vmatprep.subr.mxu0 0.0
  %2076 = vmatpush2.msra.mxu0 0.0
  %2077 = vmatprep.subr.mxu0 0.0
  %2078 = vmatpush2.msra.mxu0 0.0
  %2079 = vmatprep.subr.mxu0 0.0
  %2080 = vmatpush2.msra.mxu0 0.0
  %2081 = vmatprep.subr.mxu0 0.0
  %2082 = vmatpush2.msra.mxu0 0.0
  %2083 = vmatprep.subr.mxu0 0.0
  %2084 = vmatpush2.msra.mxu0 0.0
  %2085 = vmatprep.subr.mxu0 0.0
  %2086 = vmatpush2.msra.mxu0 0.0
  %2087 = vmatprep.subr.mxu0 0.0
  %2088 = vmatpush2.msra.mxu0 0.0
  %2089 = vmatprep.subr.mxu0 0.0
  %2090 = vmatpush2.msra.mxu0 0.0
  %2091 = vmatprep.subr.mxu0 0.0
  %2092 = vmatpush2.msra.mxu0 0.0
  %2093 = vmatprep.subr.mxu0 0.0
  %2094 = vmatpush2.msra.mxu0 0.0
  %2095 = vmatprep.subr.mxu0 0.0
  %2096 = vmatpush2.msra.mxu0 0.0
  %2097 = vmatprep.subr.mxu0 0.0
  %2098 = vmatpush2.msra.mxu0 0.0
  %2099 = vmatprep.subr.mxu0 0.0
  %2100 = vmatpush2.msra.mxu0 0.0
  %2101 = vmatprep.subr.mxu0 0.0
  %2102 = vmatpush2.msra.mxu0 0.0
  %2103 = vmatprep.subr.mxu0 0.0
  %2104 = vmatpush2.msra.mxu0 0.0
  %2105 = vmatprep.mubr.f32.mxu0 0.0
  %2106 = vmatmul.mubr.f32.gmra.mxu0 %v2029
  %v2107 = vpop.f32.mrf.mxu0
  %v2108 = vadd.f32 %v2040, %v2107
  %v2109 = vpop.f32.mrf.mxu0
  %2110 = vmatprep.mubr.f32.mxu0 0.0
  %2111 = vmatmul.mubr.f32.gmra.mxu0 %v2030
  %v2112 = vpop.f32.mrf.mxu0
  %v2113 = vadd.f32 %v2040, %v2112
  %v2114 = vpop.f32.mrf.mxu0
  %2115 = vmatprep.mubr.f32.mxu0 0.0
  %2116 = vmatmul.mubr.f32.gmra.mxu0 %v2031
  %v2117 = vpop.f32.mrf.mxu0
  %v2118 = vadd.f32 %v2040, %v2117
  %v2119 = vpop.f32.mrf.mxu0
  %2120 = vmatprep.mubr.f32.mxu0 0.0
  %2121 = vmatmul.mubr.f32.gmra.mxu0 %v2032
  %v2122 = vpop.f32.mrf.mxu0
  %v2123 = vadd.f32 %v2040, %v2122
  %v2124 = vpop.f32.mrf.mxu0
  %2125 = vmatprep.mubr.f32.mxu0 0.0
  %2126 = vmatmul.mubr.f32.gmra.mxu0 %v2033
  %v2127 = vpop.f32.mrf.mxu0
  %v2128 = vadd.f32 %v2040, %v2127
  %v2129 = vpop.f32.mrf.mxu0
  %2130 = vmatprep.mubr.f32.mxu0 0.0
  %2131 = vmatmul.mubr.f32.gmra.mxu0 %v2034
  %v2132 = vpop.f32.mrf.mxu0
  %v2133 = vadd.f32 %v2040, %v2132
  %v2134 = vpop.f32.mrf.mxu0
  %2135 = vmatprep.mubr.f32.mxu0 0.0
  %2136 = vmatmul.mubr.f32.gmra.mxu0 %v2035
  %v2137 = vpop.f32.mrf.mxu0
  %v2138 = vadd.f32 %v2040, %v2137
  %v2139 = vpop.f32.mrf.mxu0
  %2140 = vdwg.mxu0
  %v2141 = vadd.f32 %v2108, %v1395
  %v2142 = vadd.f32 %v2113, %v1396
  %v2143 = vadd.f32 %v2118, %v1397
  %v2144 = vadd.f32 %v2123, %v1398
  %v2145 = vadd.f32 %v2128, %v1399
  %v2146 = vadd.f32 %v2133, %v1400
  %v2147 = vadd.f32 %v2138, %v1401
  %2148 = vmatprep.subr.mxu0 0.0
  %2149 = vmatpush1.msra.mxu0 %v159
  %2150 = vmatprep.subr.mxu0 0.0
  %2151 = vmatpush1.msra.mxu0 %v158
  %2152 = vmatprep.subr.mxu0 0.0
  %2153 = vmatpush1.msra.mxu0 %v157
  %2154 = vmatprep.subr.mxu0 0.0
  %2155 = vmatpush1.msra.mxu0 %v156
  %2156 = vmatprep.subr.mxu0 0.0
  %2157 = vmatpush1.msra.mxu0 %v155
  %2158 = vmatprep.subr.mxu0 0.0
  %2159 = vmatpush1.msra.mxu0 %v154
  %2160 = vmatprep.subr.mxu0 0.0
  %2161 = vmatpush1.msra.mxu0 %v153
  %2162 = vmatprep.subr.mxu0 0.0
  %2163 = vmatpush1.msra.mxu0 %v152
  %2164 = vmatprep.subr.mxu0 0.0
  %2165 = vmatpush1.msra.mxu0 %v151
  %2166 = vmatprep.subr.mxu0 0.0
  %2167 = vmatpush1.msra.mxu0 %v150
  %2168 = vmatprep.subr.mxu0 0.0
  %2169 = vmatpush1.msra.mxu0 %v149
  %2170 = vmatprep.subr.mxu0 0.0
  %2171 = vmatpush1.msra.mxu0 %v148
  %2172 = vmatprep.subr.mxu0 0.0
  %2173 = vmatpush1.msra.mxu0 %v147
  %2174 = vmatprep.subr.mxu0 0.0
  %2175 = vmatpush1.msra.mxu0 %v146
  %2176 = vmatprep.subr.mxu0 0.0
  %2177 = vmatpush1.msra.mxu0 %v145
  %2178 = vmatprep.subr.mxu0 0.0
  %2179 = vmatpush1.msra.mxu0 %v144
  %2180 = vmatprep.subr.mxu0 0.0
  %2181 = vmatpush2.msra.mxu0 0.0
  %2182 = vmatprep.subr.mxu0 0.0
  %2183 = vmatpush2.msra.mxu0 0.0
  %2184 = vmatprep.subr.mxu0 0.0
  %2185 = vmatpush2.msra.mxu0 0.0
  %2186 = vmatprep.subr.mxu0 0.0
  %2187 = vmatpush2.msra.mxu0 0.0
  %2188 = vmatprep.subr.mxu0 0.0
  %2189 = vmatpush2.msra.mxu0 0.0
  %2190 = vmatprep.subr.mxu0 0.0
  %2191 = vmatpush2.msra.mxu0 0.0
  %2192 = vmatprep.subr.mxu0 0.0
  %2193 = vmatpush2.msra.mxu0 0.0
  %2194 = vmatprep.subr.mxu0 0.0
  %2195 = vmatpush2.msra.mxu0 0.0
  %2196 = vmatprep.subr.mxu0 0.0
  %2197 = vmatpush2.msra.mxu0 0.0
  %2198 = vmatprep.subr.mxu0 0.0
  %2199 = vmatpush2.msra.mxu0 0.0
  %2200 = vmatprep.subr.mxu0 0.0
  %2201 = vmatpush2.msra.mxu0 0.0
  %2202 = vmatprep.subr.mxu0 0.0
  %2203 = vmatpush2.msra.mxu0 0.0
  %2204 = vmatprep.subr.mxu0 0.0
  %2205 = vmatpush2.msra.mxu0 0.0
  %2206 = vmatprep.subr.mxu0 0.0
  %2207 = vmatpush2.msra.mxu0 0.0
  %2208 = vmatprep.subr.mxu0 0.0
  %2209 = vmatpush2.msra.mxu0 0.0
  %2210 = vmatprep.subr.mxu0 0.0
  %2211 = vmatpush2.msra.mxu0 0.0
  %2212 = vmatprep.mubr.f32.mxu0 0.0
  %2213 = vmatmul.mubr.f32.gmra.mxu0 %v2141
  %v2214 = vpop.f32.mrf.mxu0
  %v2215 = vadd.f32 0.0, %v2214
  %v2216 = vpop.f32.mrf.mxu0
  %2217 = vmatprep.mubr.f32.mxu0 0.0
  %2218 = vmatmul.mubr.f32.gmra.mxu0 %v2142
  %v2219 = vpop.f32.mrf.mxu0
  %v2220 = vadd.f32 0.0, %v2219
  %v2221 = vpop.f32.mrf.mxu0
  %2222 = vmatprep.mubr.f32.mxu0 0.0
  %2223 = vmatmul.mubr.f32.gmra.mxu0 %v2143
  %v2224 = vpop.f32.mrf.mxu0
  %v2225 = vadd.f32 0.0, %v2224
  %v2226 = vpop.f32.mrf.mxu0
  %2227 = vmatprep.mubr.f32.mxu0 0.0
  %2228 = vmatmul.mubr.f32.gmra.mxu0 %v2144
  %v2229 = vpop.f32.mrf.mxu0
  %v2230 = vadd.f32 0.0, %v2229
  %v2231 = vpop.f32.mrf.mxu0
  %2232 = vmatprep.mubr.f32.mxu0 0.0
  %2233 = vmatmul.mubr.f32.gmra.mxu0 %v2145
  %v2234 = vpop.f32.mrf.mxu0
  %v2235 = vadd.f32 0.0, %v2234
  %v2236 = vpop.f32.mrf.mxu0
  %2237 = vmatprep.mubr.f32.mxu0 0.0
  %2238 = vmatmul.mubr.f32.gmra.mxu0 %v2146
  %v2239 = vpop.f32.mrf.mxu0
  %v2240 = vadd.f32 0.0, %v2239
  %v2241 = vpop.f32.mrf.mxu0
  %2242 = vmatprep.mubr.f32.mxu0 0.0
  %2243 = vmatmul.mubr.f32.gmra.mxu0 %v2147
  %v2244 = vpop.f32.mrf.mxu0
  %v2245 = vadd.f32 0.0, %v2244
  %v2246 = vpop.f32.mrf.mxu0
  %2247 = vdwg.mxu0
  %v2248 = vmul.f32 %v2141, %v2141
  %v2249 = vmul.f32 %v2142, %v2142
  %v2250 = vmul.f32 %v2143, %v2143
  %v2251 = vmul.f32 %v2144, %v2144
  %v2252 = vmul.f32 %v2145, %v2145
  %v2253 = vmul.f32 %v2146, %v2146
  %v2254 = vmul.f32 %v2147, %v2147
  %2255 = vmatprep.subr.mxu0 0.0
  %2256 = vmatpush1.msra.mxu0 %v159
  %2257 = vmatprep.subr.mxu0 0.0
  %2258 = vmatpush1.msra.mxu0 %v158
  %2259 = vmatprep.subr.mxu0 0.0
  %2260 = vmatpush1.msra.mxu0 %v157
  %2261 = vmatprep.subr.mxu0 0.0
  %2262 = vmatpush1.msra.mxu0 %v156
  %2263 = vmatprep.subr.mxu0 0.0
  %2264 = vmatpush1.msra.mxu0 %v155
  %2265 = vmatprep.subr.mxu0 0.0
  %2266 = vmatpush1.msra.mxu0 %v154
  %2267 = vmatprep.subr.mxu0 0.0
  %2268 = vmatpush1.msra.mxu0 %v153
  %2269 = vmatprep.subr.mxu0 0.0
  %2270 = vmatpush1.msra.mxu0 %v152
  %2271 = vmatprep.subr.mxu0 0.0
  %2272 = vmatpush1.msra.mxu0 %v151
  %2273 = vmatprep.subr.mxu0 0.0
  %2274 = vmatpush1.msra.mxu0 %v150
  %2275 = vmatprep.subr.mxu0 0.0
  %2276 = vmatpush1.msra.mxu0 %v149
  %2277 = vmatprep.subr.mxu0 0.0
  %2278 = vmatpush1.msra.mxu0 %v148
  %2279 = vmatprep.subr.mxu0 0.0
  %2280 = vmatpush1.msra.mxu0 %v147
  %2281 = vmatprep.subr.mxu0 0.0
  %2282 = vmatpush1.msra.mxu0 %v146
  %2283 = vmatprep.subr.mxu0 0.0
  %2284 = vmatpush1.msra.mxu0 %v145
  %2285 = vmatprep.subr.mxu0 0.0
  %2286 = vmatpush1.msra.mxu0 %v144
  %2287 = vmatprep.subr.mxu0 0.0
  %2288 = vmatpush2.msra.mxu0 0.0
  %2289 = vmatprep.subr.mxu0 0.0
  %2290 = vmatpush2.msra.mxu0 0.0
  %2291 = vmatprep.subr.mxu0 0.0
  %2292 = vmatpush2.msra.mxu0 0.0
  %2293 = vmatprep.subr.mxu0 0.0
  %2294 = vmatpush2.msra.mxu0 0.0
  %2295 = vmatprep.subr.mxu0 0.0
  %2296 = vmatpush2.msra.mxu0 0.0
  %2297 = vmatprep.subr.mxu0 0.0
  %2298 = vmatpush2.msra.mxu0 0.0
  %2299 = vmatprep.subr.mxu0 0.0
  %2300 = vmatpush2.msra.mxu0 0.0
  %2301 = vmatprep.subr.mxu0 0.0
  %2302 = vmatpush2.msra.mxu0 0.0
  %2303 = vmatprep.subr.mxu0 0.0
  %2304 = vmatpush2.msra.mxu0 0.0
  %2305 = vmatprep.subr.mxu0 0.0
  %2306 = vmatpush2.msra.mxu0 0.0
  %2307 = vmatprep.subr.mxu0 0.0
  %2308 = vmatpush2.msra.mxu0 0.0
  %2309 = vmatprep.subr.mxu0 0.0
  %2310 = vmatpush2.msra.mxu0 0.0
  %2311 = vmatprep.subr.mxu0 0.0
  %2312 = vmatpush2.msra.mxu0 0.0
  %2313 = vmatprep.subr.mxu0 0.0
  %2314 = vmatpush2.msra.mxu0 0.0
  %2315 = vmatprep.subr.mxu0 0.0
  %2316 = vmatpush2.msra.mxu0 0.0
  %2317 = vmatprep.subr.mxu0 0.0
  %2318 = vmatpush2.msra.mxu0 0.0
  %2319 = vmatprep.mubr.f32.mxu0 0.0
  %2320 = vmatmul.mubr.f32.gmra.mxu0 %v2248
  %v2321 = vpop.f32.mrf.mxu0
  %v2322 = vadd.f32 0.0, %v2321
  %v2323 = vpop.f32.mrf.mxu0
  %2324 = vmatprep.mubr.f32.mxu0 0.0
  %2325 = vmatmul.mubr.f32.gmra.mxu0 %v2249
  %v2326 = vpop.f32.mrf.mxu0
  %v2327 = vadd.f32 0.0, %v2326
  %v2328 = vpop.f32.mrf.mxu0
  %2329 = vmatprep.mubr.f32.mxu0 0.0
  %2330 = vmatmul.mubr.f32.gmra.mxu0 %v2250
  %v2331 = vpop.f32.mrf.mxu0
  %v2332 = vadd.f32 0.0, %v2331
  %v2333 = vpop.f32.mrf.mxu0
  %2334 = vmatprep.mubr.f32.mxu0 0.0
  %2335 = vmatmul.mubr.f32.gmra.mxu0 %v2251
  %v2336 = vpop.f32.mrf.mxu0
  %v2337 = vadd.f32 0.0, %v2336
  %v2338 = vpop.f32.mrf.mxu0
  %2339 = vmatprep.mubr.f32.mxu0 0.0
  %2340 = vmatmul.mubr.f32.gmra.mxu0 %v2252
  %v2341 = vpop.f32.mrf.mxu0
  %v2342 = vadd.f32 0.0, %v2341
  %v2343 = vpop.f32.mrf.mxu0
  %2344 = vmatprep.mubr.f32.mxu0 0.0
  %2345 = vmatmul.mubr.f32.gmra.mxu0 %v2253
  %v2346 = vpop.f32.mrf.mxu0
  %v2347 = vadd.f32 0.0, %v2346
  %v2348 = vpop.f32.mrf.mxu0
  %2349 = vmatprep.mubr.f32.mxu0 0.0
  %2350 = vmatmul.mubr.f32.gmra.mxu0 %v2254
  %v2351 = vpop.f32.mrf.mxu0
  %v2352 = vadd.f32 0.0, %v2351
  %v2353 = vpop.f32.mrf.mxu0
  %2354 = vdwg.mxu0
  %v2355 = vmul.f32 %v2215, 0.015625
  %v2356 = vmul.f32 %v2220, 0.015625
  %v2357 = vmul.f32 %v2225, 0.015625
  %v2358 = vmul.f32 %v2230, 0.015625
  %v2359 = vmul.f32 %v2235, 0.015625
  %v2360 = vmul.f32 %v2240, 0.015625
  %v2361 = vmul.f32 %v2245, 0.015625
  %v2362 = vmul.f32 %v2322, 0.015625
  %v2363 = vmul.f32 %v2327, 0.015625
  %v2364 = vmul.f32 %v2332, 0.015625
  %v2365 = vmul.f32 %v2337, 0.015625
  %v2366 = vmul.f32 %v2342, 0.015625
  %v2367 = vmul.f32 %v2347, 0.015625
  %v2368 = vmul.f32 %v2352, 0.015625
  %v2369 = vmul.f32 %v2355, %v2355
  %v2370 = vmul.f32 %v2356, %v2356
  %v2371 = vmul.f32 %v2357, %v2357
  %v2372 = vmul.f32 %v2358, %v2358
  %v2373 = vmul.f32 %v2359, %v2359
  %v2374 = vmul.f32 %v2360, %v2360
  %v2375 = vmul.f32 %v2361, %v2361
  %v2376 = vsub.f32 %v2362, %v2369
  %v2377 = vsub.f32 %v2363, %v2370
  %v2378 = vsub.f32 %v2364, %v2371
  %v2379 = vsub.f32 %v2365, %v2372
  %v2380 = vsub.f32 %v2366, %v2373
  %v2381 = vsub.f32 %v2367, %v2374
  %v2382 = vsub.f32 %v2368, %v2375
  %v2383 = vmax.f32 %v2376, 0.0
  %v2384 = vmax.f32 %v2377, 0.0
  %v2385 = vmax.f32 %v2378, 0.0
  %v2386 = vmax.f32 %v2379, 0.0
  %v2387 = vmax.f32 %v2380, 0.0
  %v2388 = vmax.f32 %v2381, 0.0
  %v2389 = vmax.f32 %v2382, 0.0
  %v2390 = vsub.f32 %v2141, %v2355
  %v2391 = vsub.f32 %v2142, %v2356
  %v2392 = vsub.f32 %v2143, %v2357
  %v2393 = vsub.f32 %v2144, %v2358
  %v2394 = vsub.f32 %v2145, %v2359
  %v2395 = vsub.f32 %v2146, %v2360
  %v2396 = vsub.f32 %v2147, %v2361
  %v2397 = vadd.f32 %v2383, 1e-05
  %v2398 = vadd.f32 %v2384, 1e-05
  %v2399 = vadd.f32 %v2385, 1e-05
  %v2400 = vadd.f32 %v2386, 1e-05
  %v2401 = vadd.f32 %v2387, 1e-05
  %v2402 = vadd.f32 %v2388, 1e-05
  %v2403 = vadd.f32 %v2389, 1e-05
  %v2404 = vrsqrt.pop %v2397
  %v2405 = vrsqrt.pop %v2398
  %v2406 = vrsqrt.pop %v2399
  %v2407 = vrsqrt.pop %v2400
  %v2408 = vrsqrt.pop %v2401
  %v2409 = vrsqrt.pop %v2402
  %v2410 = vrsqrt.pop %v2403
  %v2411 = vmul.f32 %v2390, %v2404
  %v2412 = vmul.f32 %v2391, %v2405
  %v2413 = vmul.f32 %v2392, %v2406
  %v2414 = vmul.f32 %v2393, %v2407
  %v2415 = vmul.f32 %v2394, %v2408
  %v2416 = vmul.f32 %v2395, %v2409
  %v2417 = vmul.f32 %v2396, %v2410
  %v2418 = vld [vmem:[%s2 + $0x5c4] sm:$0x1]
  %v2419 = vlaneseq
  %v2420 = vshrl.u32 %v2419, 7
  %v2421 = vsub.s32 0, %v2420
  %v2422 = vrot.slane %v2418, %v2421
  %v2423 = vmul.f32 %v2411, %v2422
  %v2424 = vmul.f32 %v2412, %v2422
  %v2425 = vmul.f32 %v2413, %v2422
  %v2426 = vmul.f32 %v2414, %v2422
  %v2427 = vmul.f32 %v2415, %v2422
  %v2428 = vmul.f32 %v2416, %v2422
  %v2429 = vmul.f32 %v2417, %v2422
  %v2430 = vld [vmem:[%s2 + $0x5c5] sm:$0x1]
  %v2431 = vlaneseq
  %v2432 = vshrl.u32 %v2431, 7
  %v2433 = vsub.s32 0, %v2432
  %v2434 = vrot.slane %v2430, %v2433
  %v2435 = vadd.f32 %v2423, %v2434
  %v2436 = vadd.f32 %v2424, %v2434
  %v2437 = vadd.f32 %v2425, %v2434
  %v2438 = vadd.f32 %v2426, %v2434
  %v2439 = vadd.f32 %v2427, %v2434
  %v2440 = vadd.f32 %v2428, %v2434
  %v2441 = vadd.f32 %v2429, %v2434
  %v2442 = vld [vmem:[%s1 + $0x180] sm:$0xff]
  %v2443 = vld [vmem:[%s1 + $0x188] sm:$0xff]
  %v2444 = vld [vmem:[%s1 + $0x190] sm:$0xff]
  %v2445 = vld [vmem:[%s1 + $0x198] sm:$0xff]
  %v2446 = vld [vmem:[%s1 + $0x1a0] sm:$0xff]
  %v2447 = vld [vmem:[%s1 + $0x1a8] sm:$0xff]
  %v2448 = vld [vmem:[%s1 + $0x1b0] sm:$0xff]
  %v2449 = vld [vmem:[%s1 + $0x1b8] sm:$0xff]
  %v2450 = vld [vmem:[%s1 + $0x1c0] sm:$0xff]
  %v2451 = vld [vmem:[%s1 + $0x1c8] sm:$0xff]
  %v2452 = vld [vmem:[%s1 + $0x1d0] sm:$0xff]
  %v2453 = vld [vmem:[%s1 + $0x1d8] sm:$0xff]
  %v2454 = vld [vmem:[%s1 + $0x1e0] sm:$0xff]
  %v2455 = vld [vmem:[%s1 + $0x1e8] sm:$0xff]
  %v2456 = vld [vmem:[%s1 + $0x1f0] sm:$0xff]
  %v2457 = vld [vmem:[%s1 + $0x1f8] sm:$0xff]
  %v2458 = vld [vmem:[%s1 + $0x200] sm:$0xff]
  %v2459 = vld [vmem:[%s1 + $0x208] sm:$0xff]
  %v2460 = vld [vmem:[%s1 + $0x210] sm:$0xff]
  %v2461 = vld [vmem:[%s1 + $0x218] sm:$0xff]
  %v2462 = vld [vmem:[%s1 + $0x220] sm:$0xff]
  %v2463 = vld [vmem:[%s1 + $0x228] sm:$0xff]
  %v2464 = vld [vmem:[%s1 + $0x230] sm:$0xff]
  %v2465 = vld [vmem:[%s1 + $0x238] sm:$0xff]
  %v2466 = vld [vmem:[%s1 + $0x240] sm:$0xff]
  %v2467 = vld [vmem:[%s1 + $0x248] sm:$0xff]
  %v2468 = vld [vmem:[%s1 + $0x250] sm:$0xff]
  %v2469 = vld [vmem:[%s1 + $0x258] sm:$0xff]
  %v2470 = vld [vmem:[%s1 + $0x260] sm:$0xff]
  %v2471 = vld [vmem:[%s1 + $0x268] sm:$0xff]
  %v2472 = vld [vmem:[%s1 + $0x270] sm:$0xff]
  %v2473 = vld [vmem:[%s1 + $0x278] sm:$0xff]
  %v2474 = vld [vmem:[%s1 + $0x280] sm:$0xff]
  %v2475 = vld [vmem:[%s1 + $0x288] sm:$0xff]
  %v2476 = vld [vmem:[%s1 + $0x290] sm:$0xff]
  %v2477 = vld [vmem:[%s1 + $0x298] sm:$0xff]
  %v2478 = vld [vmem:[%s1 + $0x2a0] sm:$0xff]
  %v2479 = vld [vmem:[%s1 + $0x2a8] sm:$0xff]
  %v2480 = vld [vmem:[%s1 + $0x2b0] sm:$0xff]
  %v2481 = vld [vmem:[%s1 + $0x2b8] sm:$0xff]
  %v2482 = vld [vmem:[%s1 + $0x2c0] sm:$0xff]
  %v2483 = vld [vmem:[%s1 + $0x2c8] sm:$0xff]
  %v2484 = vld [vmem:[%s1 + $0x2d0] sm:$0xff]
  %v2485 = vld [vmem:[%s1 + $0x2d8] sm:$0xff]
  %v2486 = vld [vmem:[%s1 + $0x2e0] sm:$0xff]
  %v2487 = vld [vmem:[%s1 + $0x2e8] sm:$0xff]
  %v2488 = vld [vmem:[%s1 + $0x2f0] sm:$0xff]
  %v2489 = vld [vmem:[%s1 + $0x2f8] sm:$0xff]
  %v2490 = vld [vmem:[%s2 + $0x1b8] sm:$0xff]
  %v2491 = vld [vmem:[%s2 + $0x1c0] sm:$0xff]
  %v2492 = vld [vmem:[%s2 + $0x1c8] sm:$0xff]
  %v2493 = vld [vmem:[%s2 + $0x1d0] sm:$0xff]
  %v2494 = vld [vmem:[%s2 + $0x1d8] sm:$0xff]
  %v2495 = vld [vmem:[%s2 + $0x1e0] sm:$0xff]
  %v2496 = vld [vmem:[%s2 + $0x1e8] sm:$0xff]
  %v2497 = vld [vmem:[%s2 + $0x1f0] sm:$0xff]
  %v2498 = vld [vmem:[%s2 + $0x1f8] sm:$0xff]
  %v2499 = vld [vmem:[%s2 + $0x200] sm:$0xff]
  %v2500 = vld [vmem:[%s2 + $0x208] sm:$0xff]
  %v2501 = vld [vmem:[%s2 + $0x210] sm:$0xff]
  %v2502 = vld [vmem:[%s2 + $0x218] sm:$0xff]
  %v2503 = vld [vmem:[%s2 + $0x220] sm:$0xff]
  %v2504 = vld [vmem:[%s2 + $0x228] sm:$0xff]
  %v2505 = vld [vmem:[%s2 + $0x230] sm:$0xff]
  %2506 = vmatprep.subr.mxu0 %v2488
  %2507 = vmatpush1.msra.mxu0 %v2487
  %2508 = vmatprep.subr.mxu0 %v2485
  %2509 = vmatpush1.msra.mxu0 %v2484
  %2510 = vmatprep.subr.mxu0 %v2482
  %2511 = vmatpush1.msra.mxu0 %v2481
  %2512 = vmatprep.subr.mxu0 %v2479
  %2513 = vmatpush1.msra.mxu0 %v2478
  %2514 = vmatprep.subr.mxu0 %v2476
  %2515 = vmatpush1.msra.mxu0 %v2475
  %2516 = vmatprep.subr.mxu0 %v2473
  %2517 = vmatpush1.msra.mxu0 %v2472
  %2518 = vmatprep.subr.mxu0 %v2470
  %2519 = vmatpush1.msra.mxu0 %v2469
  %2520 = vmatprep.subr.mxu0 %v2467
  %2521 = vmatpush1.msra.mxu0 %v2466
  %2522 = vmatprep.subr.mxu0 %v2464
  %2523 = vmatpush1.msra.mxu0 %v2463
  %2524 = vmatprep.subr.mxu0 %v2461
  %2525 = vmatpush1.msra.mxu0 %v2460
  %2526 = vmatprep.subr.mxu0 %v2458
  %2527 = vmatpush1.msra.mxu0 %v2457
  %2528 = vmatprep.subr.mxu0 %v2455
  %2529 = vmatpush1.msra.mxu0 %v2454
  %2530 = vmatprep.subr.mxu0 %v2452
  %2531 = vmatpush1.msra.mxu0 %v2451
  %2532 = vmatprep.subr.mxu0 %v2449
  %2533 = vmatpush1.msra.mxu0 %v2448
  %2534 = vmatprep.subr.mxu0 %v2446
  %2535 = vmatpush1.msra.mxu0 %v2445
  %2536 = vmatprep.subr.mxu0 %v2443
  %2537 = vmatpush1.msra.mxu0 %v2442
  %2538 = vmatprep.subr.mxu0 0.0
  %2539 = vmatpush2.msra.mxu0 0.0
  %2540 = vmatprep.subr.mxu0 0.0
  %2541 = vmatpush2.msra.mxu0 0.0
  %2542 = vmatprep.subr.mxu0 0.0
  %2543 = vmatpush2.msra.mxu0 0.0
  %2544 = vmatprep.subr.mxu0 0.0
  %2545 = vmatpush2.msra.mxu0 0.0
  %2546 = vmatprep.subr.mxu0 0.0
  %2547 = vmatpush2.msra.mxu0 0.0
  %2548 = vmatprep.subr.mxu0 0.0
  %2549 = vmatpush2.msra.mxu0 0.0
  %2550 = vmatprep.subr.mxu0 0.0
  %2551 = vmatpush2.msra.mxu0 0.0
  %2552 = vmatprep.subr.mxu0 0.0
  %2553 = vmatpush2.msra.mxu0 0.0
  %2554 = vmatprep.subr.mxu0 0.0
  %2555 = vmatpush2.msra.mxu0 0.0
  %2556 = vmatprep.subr.mxu0 0.0
  %2557 = vmatpush2.msra.mxu0 0.0
  %2558 = vmatprep.subr.mxu0 0.0
  %2559 = vmatpush2.msra.mxu0 0.0
  %2560 = vmatprep.subr.mxu0 0.0
  %2561 = vmatpush2.msra.mxu0 0.0
  %2562 = vmatprep.subr.mxu0 0.0
  %2563 = vmatpush2.msra.mxu0 0.0
  %2564 = vmatprep.subr.mxu0 0.0
  %2565 = vmatpush2.msra.mxu0 0.0
  %2566 = vmatprep.subr.mxu0 0.0
  %2567 = vmatpush2.msra.mxu0 0.0
  %2568 = vmatprep.subr.mxu0 0.0
  %2569 = vmatpush2.msra.mxu0 0.0
  %2570 = vmatprep.mubr.f32.mxu0 0.0
  %2571 = vmatmul.mubr.f32.gmra.mxu0 %v2435
  %v2572 = vpop.f32.mrf.mxu0
  %v2573 = vadd.f32 0.0, %v2572
  %v2574 = vpop.f32.mrf.mxu0
  %v2575 = vadd.f32 0.0, %v2574
  %2576 = vmatprep.mubr.f32.mxu0 0.0
  %2577 = vmatmul.mubr.f32.gmra.mxu0 %v2436
  %v2578 = vpop.f32.mrf.mxu0
  %v2579 = vadd.f32 0.0, %v2578
  %v2580 = vpop.f32.mrf.mxu0
  %v2581 = vadd.f32 0.0, %v2580
  %2582 = vmatprep.mubr.f32.mxu0 0.0
  %2583 = vmatmul.mubr.f32.gmra.mxu0 %v2437
  %v2584 = vpop.f32.mrf.mxu0
  %v2585 = vadd.f32 0.0, %v2584
  %v2586 = vpop.f32.mrf.mxu0
  %v2587 = vadd.f32 0.0, %v2586
  %2588 = vmatprep.mubr.f32.mxu0 0.0
  %2589 = vmatmul.mubr.f32.gmra.mxu0 %v2438
  %v2590 = vpop.f32.mrf.mxu0
  %v2591 = vadd.f32 0.0, %v2590
  %v2592 = vpop.f32.mrf.mxu0
  %v2593 = vadd.f32 0.0, %v2592
  %2594 = vmatprep.mubr.f32.mxu0 0.0
  %2595 = vmatmul.mubr.f32.gmra.mxu0 %v2439
  %v2596 = vpop.f32.mrf.mxu0
  %v2597 = vadd.f32 0.0, %v2596
  %v2598 = vpop.f32.mrf.mxu0
  %v2599 = vadd.f32 0.0, %v2598
  %2600 = vmatprep.mubr.f32.mxu0 0.0
  %2601 = vmatmul.mubr.f32.gmra.mxu0 %v2440
  %v2602 = vpop.f32.mrf.mxu0
  %v2603 = vadd.f32 0.0, %v2602
  %v2604 = vpop.f32.mrf.mxu0
  %v2605 = vadd.f32 0.0, %v2604
  %2606 = vmatprep.mubr.f32.mxu0 0.0
  %2607 = vmatmul.mubr.f32.gmra.mxu0 %v2441
  %v2608 = vpop.f32.mrf.mxu0
  %v2609 = vadd.f32 0.0, %v2608
  %v2610 = vpop.f32.mrf.mxu0
  %v2611 = vadd.f32 0.0, %v2610
  %2612 = vdwg.mxu0
  %2613 = vmatprep.subr.mxu0 0.0
  %2614 = vmatpush1.msra.mxu0 %v2489
  %2615 = vmatprep.subr.mxu0 0.0
  %2616 = vmatpush1.msra.mxu0 %v2486
  %2617 = vmatprep.subr.mxu0 0.0
  %2618 = vmatpush1.msra.mxu0 %v2483
  %2619 = vmatprep.subr.mxu0 0.0
  %2620 = vmatpush1.msra.mxu0 %v2480
  %2621 = vmatprep.subr.mxu0 0.0
  %2622 = vmatpush1.msra.mxu0 %v2477
  %2623 = vmatprep.subr.mxu0 0.0
  %2624 = vmatpush1.msra.mxu0 %v2474
  %2625 = vmatprep.subr.mxu0 0.0
  %2626 = vmatpush1.msra.mxu0 %v2471
  %2627 = vmatprep.subr.mxu0 0.0
  %2628 = vmatpush1.msra.mxu0 %v2468
  %2629 = vmatprep.subr.mxu0 0.0
  %2630 = vmatpush1.msra.mxu0 %v2465
  %2631 = vmatprep.subr.mxu0 0.0
  %2632 = vmatpush1.msra.mxu0 %v2462
  %2633 = vmatprep.subr.mxu0 0.0
  %2634 = vmatpush1.msra.mxu0 %v2459
  %2635 = vmatprep.subr.mxu0 0.0
  %2636 = vmatpush1.msra.mxu0 %v2456
  %2637 = vmatprep.subr.mxu0 0.0
  %2638 = vmatpush1.msra.mxu0 %v2453
  %2639 = vmatprep.subr.mxu0 0.0
  %2640 = vmatpush1.msra.mxu0 %v2450
  %2641 = vmatprep.subr.mxu0 0.0
  %2642 = vmatpush1.msra.mxu0 %v2447
  %2643 = vmatprep.subr.mxu0 0.0
  %2644 = vmatpush1.msra.mxu0 %v2444
  %2645 = vmatprep.subr.mxu0 0.0
  %2646 = vmatpush2.msra.mxu0 0.0
  %2647 = vmatprep.subr.mxu0 0.0
  %2648 = vmatpush2.msra.mxu0 0.0
  %2649 = vmatprep.subr.mxu0 0.0
  %2650 = vmatpush2.msra.mxu0 0.0
  %2651 = vmatprep.subr.mxu0 0.0
  %2652 = vmatpush2.msra.mxu0 0.0
  %2653 = vmatprep.subr.mxu0 0.0
  %2654 = vmatpush2.msra.mxu0 0.0
  %2655 = vmatprep.subr.mxu0 0.0
  %2656 = vmatpush2.msra.mxu0 0.0
  %2657 = vmatprep.subr.mxu0 0.0
  %2658 = vmatpush2.msra.mxu0 0.0
  %2659 = vmatprep.subr.mxu0 0.0
  %2660 = vmatpush2.msra.mxu0 0.0
  %2661 = vmatprep.subr.mxu0 0.0
  %2662 = vmatpush2.msra.mxu0 0.0
  %2663 = vmatprep.subr.mxu0 0.0
  %2664 = vmatpush2.msra.mxu0 0.0
  %2665 = vmatprep.subr.mxu0 0.0
  %2666 = vmatpush2.msra.mxu0 0.0
  %2667 = vmatprep.subr.mxu0 0.0
  %2668 = vmatpush2.msra.mxu0 0.0
  %2669 = vmatprep.subr.mxu0 0.0
  %2670 = vmatpush2.msra.mxu0 0.0
  %2671 = vmatprep.subr.mxu0 0.0
  %2672 = vmatpush2.msra.mxu0 0.0
  %2673 = vmatprep.subr.mxu0 0.0
  %2674 = vmatpush2.msra.mxu0 0.0
  %2675 = vmatprep.subr.mxu0 0.0
  %2676 = vmatpush2.msra.mxu0 0.0
  %2677 = vmatprep.mubr.f32.mxu0 0.0
  %2678 = vmatmul.mubr.f32.gmra.mxu0 %v2435
  %v2679 = vpop.f32.mrf.mxu0
  %v2680 = vadd.f32 0.0, %v2679
  %v2681 = vpop.f32.mrf.mxu0
  %2682 = vmatprep.mubr.f32.mxu0 0.0
  %2683 = vmatmul.mubr.f32.gmra.mxu0 %v2436
  %v2684 = vpop.f32.mrf.mxu0
  %v2685 = vadd.f32 0.0, %v2684
  %v2686 = vpop.f32.mrf.mxu0
  %2687 = vmatprep.mubr.f32.mxu0 0.0
  %2688 = vmatmul.mubr.f32.gmra.mxu0 %v2437
  %v2689 = vpop.f32.mrf.mxu0
  %v2690 = vadd.f32 0.0, %v2689
  %v2691 = vpop.f32.mrf.mxu0
  %2692 = vmatprep.mubr.f32.mxu0 0.0
  %2693 = vmatmul.mubr.f32.gmra.mxu0 %v2438
  %v2694 = vpop.f32.mrf.mxu0
  %v2695 = vadd.f32 0.0, %v2694
  %v2696 = vpop.f32.mrf.mxu0
  %2697 = vmatprep.mubr.f32.mxu0 0.0
  %2698 = vmatmul.mubr.f32.gmra.mxu0 %v2439
  %v2699 = vpop.f32.mrf.mxu0
  %v2700 = vadd.f32 0.0, %v2699
  %v2701 = vpop.f32.mrf.mxu0
  %2702 = vmatprep.mubr.f32.mxu0 0.0
  %2703 = vmatmul.mubr.f32.gmra.mxu0 %v2440
  %v2704 = vpop.f32.mrf.mxu0
  %v2705 = vadd.f32 0.0, %v2704
  %v2706 = vpop.f32.mrf.mxu0
  %2707 = vmatprep.mubr.f32.mxu0 0.0
  %2708 = vmatmul.mubr.f32.gmra.mxu0 %v2441
  %v2709 = vpop.f32.mrf.mxu0
  %v2710 = vadd.f32 0.0, %v2709
  %v2711 = vpop.f32.mrf.mxu0
  %2712 = vdwg.mxu0
  %v2713 = vld [vmem:[%s2 + $0x5c6] sm:$0x1]
  %v2714 = vlaneseq
  %v2715 = vshrl.u32 %v2714, 7
  %v2716 = vsub.s32 0, %v2715
  %v2717 = vrot.slane %v2713, %v2716
  %v2718 = vadd.f32 %v2573, %v2717
  %v2719 = vadd.f32 %v2579, %v2717
  %v2720 = vadd.f32 %v2585, %v2717
  %v2721 = vadd.f32 %v2591, %v2717
  %v2722 = vadd.f32 %v2597, %v2717
  %v2723 = vadd.f32 %v2603, %v2717
  %v2724 = vadd.f32 %v2609, %v2717
  %v2725 = vld [vmem:[%s2 + $0x5c7] sm:$0x1]
  %v2726 = vlaneseq
  %v2727 = vshrl.u32 %v2726, 7
  %v2728 = vsub.s32 0, %v2727
  %v2729 = vrot.slane %v2725, %v2728
  %v2730 = vadd.f32 %v2575, %v2729
  %v2731 = vadd.f32 %v2581, %v2729
  %v2732 = vadd.f32 %v2587, %v2729
  %v2733 = vadd.f32 %v2593, %v2729
  %v2734 = vadd.f32 %v2599, %v2729
  %v2735 = vadd.f32 %v2605, %v2729
  %v2736 = vadd.f32 %v2611, %v2729
  %v2737 = vld [vmem:[%s2 + $0x5c8] sm:$0x1]
  %v2738 = vlaneseq
  %v2739 = vshrl.u32 %v2738, 7
  %v2740 = vsub.s32 0, %v2739
  %v2741 = vrot.slane %v2737, %v2740
  %v2742 = vadd.f32 %v2680, %v2741
  %v2743 = vadd.f32 %v2685, %v2741
  %v2744 = vadd.f32 %v2690, %v2741
  %v2745 = vadd.f32 %v2695, %v2741
  %v2746 = vadd.f32 %v2700, %v2741
  %v2747 = vadd.f32 %v2705, %v2741
  %v2748 = vadd.f32 %v2710, %v2741
  %v2749 = vmul.f32 %v2718, %v2730
  %v2750 = vmul.f32 %v2719, %v2731
  %v2751 = vmul.f32 %v2720, %v2732
  %v2752 = vmul.f32 %v2721, %v2733
  %v2753 = vmul.f32 %v2722, %v2734
  %v2754 = vmul.f32 %v2723, %v2735
  %v2755 = vmul.f32 %v2724, %v2736
  %2756 = vmatprep.subr.mxu0 0.0
  %2757 = vmatpush1.msra.mxu0 %v533
  %2758 = vmatprep.subr.mxu0 0.0
  %2759 = vmatpush1.msra.mxu0 %v532
  %2760 = vmatprep.subr.mxu0 0.0
  %2761 = vmatpush1.msra.mxu0 %v531
  %2762 = vmatprep.subr.mxu0 0.0
  %2763 = vmatpush1.msra.mxu0 %v530
  %2764 = vmatprep.subr.mxu0 0.0
  %2765 = vmatpush1.msra.mxu0 %v529
  %2766 = vmatprep.subr.mxu0 0.0
  %2767 = vmatpush1.msra.mxu0 %v528
  %2768 = vmatprep.subr.mxu0 0.0
  %2769 = vmatpush1.msra.mxu0 %v527
  %2770 = vmatprep.subr.mxu0 0.0
  %2771 = vmatpush1.msra.mxu0 %v526
  %2772 = vmatprep.subr.mxu0 0.0
  %2773 = vmatpush1.msra.mxu0 %v525
  %2774 = vmatprep.subr.mxu0 0.0
  %2775 = vmatpush1.msra.mxu0 %v524
  %2776 = vmatprep.subr.mxu0 0.0
  %2777 = vmatpush1.msra.mxu0 %v523
  %2778 = vmatprep.subr.mxu0 0.0
  %2779 = vmatpush1.msra.mxu0 %v522
  %2780 = vmatprep.subr.mxu0 0.0
  %2781 = vmatpush1.msra.mxu0 %v521
  %2782 = vmatprep.subr.mxu0 0.0
  %2783 = vmatpush1.msra.mxu0 %v520
  %2784 = vmatprep.subr.mxu0 0.0
  %2785 = vmatpush1.msra.mxu0 %v519
  %2786 = vmatprep.subr.mxu0 0.0
  %2787 = vmatpush1.msra.mxu0 %v518
  %2788 = vmatprep.subr.mxu0 0.0
  %2789 = vmatpush2.msra.mxu0 0.0
  %2790 = vmatprep.subr.mxu0 0.0
  %2791 = vmatpush2.msra.mxu0 0.0
  %2792 = vmatprep.subr.mxu0 0.0
  %2793 = vmatpush2.msra.mxu0 0.0
  %2794 = vmatprep.subr.mxu0 0.0
  %2795 = vmatpush2.msra.mxu0 0.0
  %2796 = vmatprep.subr.mxu0 0.0
  %2797 = vmatpush2.msra.mxu0 0.0
  %2798 = vmatprep.subr.mxu0 0.0
  %2799 = vmatpush2.msra.mxu0 0.0
  %2800 = vmatprep.subr.mxu0 0.0
  %2801 = vmatpush2.msra.mxu0 0.0
  %2802 = vmatprep.subr.mxu0 0.0
  %2803 = vmatpush2.msra.mxu0 0.0
  %2804 = vmatprep.subr.mxu0 0.0
  %2805 = vmatpush2.msra.mxu0 0.0
  %2806 = vmatprep.subr.mxu0 0.0
  %2807 = vmatpush2.msra.mxu0 0.0
  %2808 = vmatprep.subr.mxu0 0.0
  %2809 = vmatpush2.msra.mxu0 0.0
  %2810 = vmatprep.subr.mxu0 0.0
  %2811 = vmatpush2.msra.mxu0 0.0
  %2812 = vmatprep.subr.mxu0 0.0
  %2813 = vmatpush2.msra.mxu0 0.0
  %2814 = vmatprep.subr.mxu0 0.0
  %2815 = vmatpush2.msra.mxu0 0.0
  %2816 = vmatprep.subr.mxu0 0.0
  %2817 = vmatpush2.msra.mxu0 0.0
  %2818 = vmatprep.subr.mxu0 0.0
  %2819 = vmatpush2.msra.mxu0 0.0
  %2820 = vmatprep.mubr.f32.mxu0 0.0
  %2821 = vmatmul.mubr.f32.gmra.mxu0 %v2749
  %v2822 = vpop.f32.mrf.mxu0
  %v2823 = vadd.f32 0.0, %v2822
  %v2824 = vpop.f32.mrf.mxu0
  %2825 = vmatprep.mubr.f32.mxu0 0.0
  %2826 = vmatmul.mubr.f32.gmra.mxu0 %v2750
  %v2827 = vpop.f32.mrf.mxu0
  %v2828 = vadd.f32 0.0, %v2827
  %v2829 = vpop.f32.mrf.mxu0
  %2830 = vmatprep.mubr.f32.mxu0 0.0
  %2831 = vmatmul.mubr.f32.gmra.mxu0 %v2751
  %v2832 = vpop.f32.mrf.mxu0
  %v2833 = vadd.f32 0.0, %v2832
  %v2834 = vpop.f32.mrf.mxu0
  %2835 = vmatprep.mubr.f32.mxu0 0.0
  %2836 = vmatmul.mubr.f32.gmra.mxu0 %v2752
  %v2837 = vpop.f32.mrf.mxu0
  %v2838 = vadd.f32 0.0, %v2837
  %v2839 = vpop.f32.mrf.mxu0
  %2840 = vmatprep.mubr.f32.mxu0 0.0
  %2841 = vmatmul.mubr.f32.gmra.mxu0 %v2753
  %v2842 = vpop.f32.mrf.mxu0
  %v2843 = vadd.f32 0.0, %v2842
  %v2844 = vpop.f32.mrf.mxu0
  %2845 = vmatprep.mubr.f32.mxu0 0.0
  %2846 = vmatmul.mubr.f32.gmra.mxu0 %v2754
  %v2847 = vpop.f32.mrf.mxu0
  %v2848 = vadd.f32 0.0, %v2847
  %v2849 = vpop.f32.mrf.mxu0
  %2850 = vmatprep.mubr.f32.mxu0 0.0
  %2851 = vmatmul.mubr.f32.gmra.mxu0 %v2755
  %v2852 = vpop.f32.mrf.mxu0
  %v2853 = vadd.f32 0.0, %v2852
  %v2854 = vpop.f32.mrf.mxu0
  %2855 = vdwg.mxu0
  %2856 = vrot.lane.b32.xlu0 %v2730, 64
  %v2857 = vpop.permute.xlu0 %2856
  %2858 = vrot.lane.b32.xlu0 %v2731, 64
  %v2859 = vpop.permute.xlu0 %2858
  %2860 = vrot.lane.b32.xlu0 %v2732, 64
  %v2861 = vpop.permute.xlu0 %2860
  %2862 = vrot.lane.b32.xlu0 %v2733, 64
  %v2863 = vpop.permute.xlu0 %2862
  %2864 = vrot.lane.b32.xlu0 %v2734, 64
  %v2865 = vpop.permute.xlu0 %2864
  %2866 = vrot.lane.b32.xlu0 %v2735, 64
  %v2867 = vpop.permute.xlu0 %2866
  %2868 = vrot.lane.b32.xlu0 %v2736, 64
  %v2869 = vpop.permute.xlu0 %2868
  %v2870 = vmul.f32 %v2718, %v2857
  %v2871 = vmul.f32 %v2719, %v2859
  %v2872 = vmul.f32 %v2720, %v2861
  %v2873 = vmul.f32 %v2721, %v2863
  %v2874 = vmul.f32 %v2722, %v2865
  %v2875 = vmul.f32 %v2723, %v2867
  %v2876 = vmul.f32 %v2724, %v2869
  %2877 = vmatprep.subr.mxu0 0.0
  %2878 = vmatpush1.msra.mxu0 %v533
  %2879 = vmatprep.subr.mxu0 0.0
  %2880 = vmatpush1.msra.mxu0 %v532
  %2881 = vmatprep.subr.mxu0 0.0
  %2882 = vmatpush1.msra.mxu0 %v531
  %2883 = vmatprep.subr.mxu0 0.0
  %2884 = vmatpush1.msra.mxu0 %v530
  %2885 = vmatprep.subr.mxu0 0.0
  %2886 = vmatpush1.msra.mxu0 %v529
  %2887 = vmatprep.subr.mxu0 0.0
  %2888 = vmatpush1.msra.mxu0 %v528
  %2889 = vmatprep.subr.mxu0 0.0
  %2890 = vmatpush1.msra.mxu0 %v527
  %2891 = vmatprep.subr.mxu0 0.0
  %2892 = vmatpush1.msra.mxu0 %v526
  %2893 = vmatprep.subr.mxu0 0.0
  %2894 = vmatpush1.msra.mxu0 %v525
  %2895 = vmatprep.subr.mxu0 0.0
  %2896 = vmatpush1.msra.mxu0 %v524
  %2897 = vmatprep.subr.mxu0 0.0
  %2898 = vmatpush1.msra.mxu0 %v523
  %2899 = vmatprep.subr.mxu0 0.0
  %2900 = vmatpush1.msra.mxu0 %v522
  %2901 = vmatprep.subr.mxu0 0.0
  %2902 = vmatpush1.msra.mxu0 %v521
  %2903 = vmatprep.subr.mxu0 0.0
  %2904 = vmatpush1.msra.mxu0 %v520
  %2905 = vmatprep.subr.mxu0 0.0
  %2906 = vmatpush1.msra.mxu0 %v519
  %2907 = vmatprep.subr.mxu0 0.0
  %2908 = vmatpush1.msra.mxu0 %v518
  %2909 = vmatprep.subr.mxu0 0.0
  %2910 = vmatpush2.msra.mxu0 0.0
  %2911 = vmatprep.subr.mxu0 0.0
  %2912 = vmatpush2.msra.mxu0 0.0
  %2913 = vmatprep.subr.mxu0 0.0
  %2914 = vmatpush2.msra.mxu0 0.0
  %2915 = vmatprep.subr.mxu0 0.0
  %2916 = vmatpush2.msra.mxu0 0.0
  %2917 = vmatprep.subr.mxu0 0.0
  %2918 = vmatpush2.msra.mxu0 0.0
  %2919 = vmatprep.subr.mxu0 0.0
  %2920 = vmatpush2.msra.mxu0 0.0
  %2921 = vmatprep.subr.mxu0 0.0
  %2922 = vmatpush2.msra.mxu0 0.0
  %2923 = vmatprep.subr.mxu0 0.0
  %2924 = vmatpush2.msra.mxu0 0.0
  %2925 = vmatprep.subr.mxu0 0.0
  %2926 = vmatpush2.msra.mxu0 0.0
  %2927 = vmatprep.subr.mxu0 0.0
  %2928 = vmatpush2.msra.mxu0 0.0
  %2929 = vmatprep.subr.mxu0 0.0
  %2930 = vmatpush2.msra.mxu0 0.0
  %2931 = vmatprep.subr.mxu0 0.0
  %2932 = vmatpush2.msra.mxu0 0.0
  %2933 = vmatprep.subr.mxu0 0.0
  %2934 = vmatpush2.msra.mxu0 0.0
  %2935 = vmatprep.subr.mxu0 0.0
  %2936 = vmatpush2.msra.mxu0 0.0
  %2937 = vmatprep.subr.mxu0 0.0
  %2938 = vmatpush2.msra.mxu0 0.0
  %2939 = vmatprep.subr.mxu0 0.0
  %2940 = vmatpush2.msra.mxu0 0.0
  %2941 = vmatprep.mubr.f32.mxu0 0.0
  %2942 = vmatmul.mubr.f32.gmra.mxu0 %v2870
  %v2943 = vpop.f32.mrf.mxu0
  %v2944 = vadd.f32 0.0, %v2943
  %v2945 = vpop.f32.mrf.mxu0
  %2946 = vmatprep.mubr.f32.mxu0 0.0
  %2947 = vmatmul.mubr.f32.gmra.mxu0 %v2871
  %v2948 = vpop.f32.mrf.mxu0
  %v2949 = vadd.f32 0.0, %v2948
  %v2950 = vpop.f32.mrf.mxu0
  %2951 = vmatprep.mubr.f32.mxu0 0.0
  %2952 = vmatmul.mubr.f32.gmra.mxu0 %v2872
  %v2953 = vpop.f32.mrf.mxu0
  %v2954 = vadd.f32 0.0, %v2953
  %v2955 = vpop.f32.mrf.mxu0
  %2956 = vmatprep.mubr.f32.mxu0 0.0
  %2957 = vmatmul.mubr.f32.gmra.mxu0 %v2873
  %v2958 = vpop.f32.mrf.mxu0
  %v2959 = vadd.f32 0.0, %v2958
  %v2960 = vpop.f32.mrf.mxu0
  %2961 = vmatprep.mubr.f32.mxu0 0.0
  %2962 = vmatmul.mubr.f32.gmra.mxu0 %v2874
  %v2963 = vpop.f32.mrf.mxu0
  %v2964 = vadd.f32 0.0, %v2963
  %v2965 = vpop.f32.mrf.mxu0
  %2966 = vmatprep.mubr.f32.mxu0 0.0
  %2967 = vmatmul.mubr.f32.gmra.mxu0 %v2875
  %v2968 = vpop.f32.mrf.mxu0
  %v2969 = vadd.f32 0.0, %v2968
  %v2970 = vpop.f32.mrf.mxu0
  %2971 = vmatprep.mubr.f32.mxu0 0.0
  %2972 = vmatmul.mubr.f32.gmra.mxu0 %v2876
  %v2973 = vpop.f32.mrf.mxu0
  %v2974 = vadd.f32 0.0, %v2973
  %v2975 = vpop.f32.mrf.mxu0
  %2976 = vdwg.mxu0
  %v2977 = vld [vmem:[%s2 + $0x5c9] sm:$0x1]
  %v2978 = vlaneseq
  %v2979 = vshrl.u32 %v2978, 7
  %v2980 = vsub.s32 0, %v2979
  %v2981 = vrot.slane %v2977, %v2980
  %v2982 = vmul.f32 %v2718, %v2981
  %v2983 = vmul.f32 %v2719, %v2981
  %v2984 = vmul.f32 %v2720, %v2981
  %v2985 = vmul.f32 %v2721, %v2981
  %v2986 = vmul.f32 %v2722, %v2981
  %v2987 = vmul.f32 %v2723, %v2981
  %v2988 = vmul.f32 %v2724, %v2981
  %2989 = vmatprep.subr.mxu0 0.0
  %2990 = vmatpush1.msra.mxu0 %v533
  %2991 = vmatprep.subr.mxu0 0.0
  %2992 = vmatpush1.msra.mxu0 %v532
  %2993 = vmatprep.subr.mxu0 0.0
  %2994 = vmatpush1.msra.mxu0 %v531
  %2995 = vmatprep.subr.mxu0 0.0
  %2996 = vmatpush1.msra.mxu0 %v530
  %2997 = vmatprep.subr.mxu0 0.0
  %2998 = vmatpush1.msra.mxu0 %v529
  %2999 = vmatprep.subr.mxu0 0.0
  %3000 = vmatpush1.msra.mxu0 %v528
  %3001 = vmatprep.subr.mxu0 0.0
  %3002 = vmatpush1.msra.mxu0 %v527
  %3003 = vmatprep.subr.mxu0 0.0
  %3004 = vmatpush1.msra.mxu0 %v526
  %3005 = vmatprep.subr.mxu0 0.0
  %3006 = vmatpush1.msra.mxu0 %v525
  %3007 = vmatprep.subr.mxu0 0.0
  %3008 = vmatpush1.msra.mxu0 %v524
  %3009 = vmatprep.subr.mxu0 0.0
  %3010 = vmatpush1.msra.mxu0 %v523
  %3011 = vmatprep.subr.mxu0 0.0
  %3012 = vmatpush1.msra.mxu0 %v522
  %3013 = vmatprep.subr.mxu0 0.0
  %3014 = vmatpush1.msra.mxu0 %v521
  %3015 = vmatprep.subr.mxu0 0.0
  %3016 = vmatpush1.msra.mxu0 %v520
  %3017 = vmatprep.subr.mxu0 0.0
  %3018 = vmatpush1.msra.mxu0 %v519
  %3019 = vmatprep.subr.mxu0 0.0
  %3020 = vmatpush1.msra.mxu0 %v518
  %3021 = vmatprep.subr.mxu0 0.0
  %3022 = vmatpush2.msra.mxu0 0.0
  %3023 = vmatprep.subr.mxu0 0.0
  %3024 = vmatpush2.msra.mxu0 0.0
  %3025 = vmatprep.subr.mxu0 0.0
  %3026 = vmatpush2.msra.mxu0 0.0
  %3027 = vmatprep.subr.mxu0 0.0
  %3028 = vmatpush2.msra.mxu0 0.0
  %3029 = vmatprep.subr.mxu0 0.0
  %3030 = vmatpush2.msra.mxu0 0.0
  %3031 = vmatprep.subr.mxu0 0.0
  %3032 = vmatpush2.msra.mxu0 0.0
  %3033 = vmatprep.subr.mxu0 0.0
  %3034 = vmatpush2.msra.mxu0 0.0
  %3035 = vmatprep.subr.mxu0 0.0
  %3036 = vmatpush2.msra.mxu0 0.0
  %3037 = vmatprep.subr.mxu0 0.0
  %3038 = vmatpush2.msra.mxu0 0.0
  %3039 = vmatprep.subr.mxu0 0.0
  %3040 = vmatpush2.msra.mxu0 0.0
  %3041 = vmatprep.subr.mxu0 0.0
  %3042 = vmatpush2.msra.mxu0 0.0
  %3043 = vmatprep.subr.mxu0 0.0
  %3044 = vmatpush2.msra.mxu0 0.0
  %3045 = vmatprep.subr.mxu0 0.0
  %3046 = vmatpush2.msra.mxu0 0.0
  %3047 = vmatprep.subr.mxu0 0.0
  %3048 = vmatpush2.msra.mxu0 0.0
  %3049 = vmatprep.subr.mxu0 0.0
  %3050 = vmatpush2.msra.mxu0 0.0
  %3051 = vmatprep.subr.mxu0 0.0
  %3052 = vmatpush2.msra.mxu0 0.0
  %3053 = vmatprep.mubr.f32.mxu0 0.0
  %3054 = vmatmul.mubr.f32.gmra.mxu0 %v2982
  %v3055 = vpop.f32.mrf.mxu0
  %v3056 = vadd.f32 0.0, %v3055
  %v3057 = vpop.f32.mrf.mxu0
  %3058 = vmatprep.mubr.f32.mxu0 0.0
  %3059 = vmatmul.mubr.f32.gmra.mxu0 %v2983
  %v3060 = vpop.f32.mrf.mxu0
  %v3061 = vadd.f32 0.0, %v3060
  %v3062 = vpop.f32.mrf.mxu0
  %3063 = vmatprep.mubr.f32.mxu0 0.0
  %3064 = vmatmul.mubr.f32.gmra.mxu0 %v2984
  %v3065 = vpop.f32.mrf.mxu0
  %v3066 = vadd.f32 0.0, %v3065
  %v3067 = vpop.f32.mrf.mxu0
  %3068 = vmatprep.mubr.f32.mxu0 0.0
  %3069 = vmatmul.mubr.f32.gmra.mxu0 %v2985
  %v3070 = vpop.f32.mrf.mxu0
  %v3071 = vadd.f32 0.0, %v3070
  %v3072 = vpop.f32.mrf.mxu0
  %3073 = vmatprep.mubr.f32.mxu0 0.0
  %3074 = vmatmul.mubr.f32.gmra.mxu0 %v2986
  %v3075 = vpop.f32.mrf.mxu0
  %v3076 = vadd.f32 0.0, %v3075
  %v3077 = vpop.f32.mrf.mxu0
  %3078 = vmatprep.mubr.f32.mxu0 0.0
  %3079 = vmatmul.mubr.f32.gmra.mxu0 %v2987
  %v3080 = vpop.f32.mrf.mxu0
  %v3081 = vadd.f32 0.0, %v3080
  %v3082 = vpop.f32.mrf.mxu0
  %3083 = vmatprep.mubr.f32.mxu0 0.0
  %3084 = vmatmul.mubr.f32.gmra.mxu0 %v2988
  %v3085 = vpop.f32.mrf.mxu0
  %v3086 = vadd.f32 0.0, %v3085
  %v3087 = vpop.f32.mrf.mxu0
  %3088 = vdwg.mxu0
  %v3089 = vmax.f32 %v2823, %v2944
  %v3090 = vmax.f32 %v2828, %v2949
  %v3091 = vmax.f32 %v2833, %v2954
  %v3092 = vmax.f32 %v2838, %v2959
  %v3093 = vmax.f32 %v2843, %v2964
  %v3094 = vmax.f32 %v2848, %v2969
  %v3095 = vmax.f32 %v2853, %v2974
  %v3096 = vmax.f32 %v3089, %v3056
  %v3097 = vmax.f32 %v3090, %v3061
  %v3098 = vmax.f32 %v3091, %v3066
  %v3099 = vmax.f32 %v3092, %v3071
  %v3100 = vmax.f32 %v3093, %v3076
  %v3101 = vmax.f32 %v3094, %v3081
  %v3102 = vmax.f32 %v3095, %v3086
  %v3103 = vsub.f32 %v2823, %v3096
  %v3104 = vsub.f32 %v2828, %v3097
  %v3105 = vsub.f32 %v2833, %v3098
  %v3106 = vsub.f32 %v2838, %v3099
  %v3107 = vsub.f32 %v2843, %v3100
  %v3108 = vsub.f32 %v2848, %v3101
  %v3109 = vsub.f32 %v2853, %v3102
  %v3110 = vmul.f32 %v3103, 1.442695
  %v3111 = vpow.pop %v3110
  %v3112 = vmul.f32 %v3104, 1.442695
  %v3113 = vpow.pop %v3112
  %v3114 = vmul.f32 %v3105, 1.442695
  %v3115 = vpow.pop %v3114
  %v3116 = vmul.f32 %v3106, 1.442695
  %v3117 = vpow.pop %v3116
  %v3118 = vmul.f32 %v3107, 1.442695
  %v3119 = vpow.pop %v3118
  %v3120 = vmul.f32 %v3108, 1.442695
  %v3121 = vpow.pop %v3120
  %v3122 = vmul.f32 %v3109, 1.442695
  %v3123 = vpow.pop %v3122
  %v3124 = vsub.f32 %v2944, %v3096
  %v3125 = vsub.f32 %v2949, %v3097
  %v3126 = vsub.f32 %v2954, %v3098
  %v3127 = vsub.f32 %v2959, %v3099
  %v3128 = vsub.f32 %v2964, %v3100
  %v3129 = vsub.f32 %v2969, %v3101
  %v3130 = vsub.f32 %v2974, %v3102
  %v3131 = vmul.f32 %v3124, 1.442695
  %v3132 = vpow.pop %v3131
  %v3133 = vmul.f32 %v3125, 1.442695
  %v3134 = vpow.pop %v3133
  %v3135 = vmul.f32 %v3126, 1.442695
  %v3136 = vpow.pop %v3135
  %v3137 = vmul.f32 %v3127, 1.442695
  %v3138 = vpow.pop %v3137
  %v3139 = vmul.f32 %v3128, 1.442695
  %v3140 = vpow.pop %v3139
  %v3141 = vmul.f32 %v3129, 1.442695
  %v3142 = vpow.pop %v3141
  %v3143 = vmul.f32 %v3130, 1.442695
  %v3144 = vpow.pop %v3143
  %v3145 = vsub.f32 %v3056, %v3096
  %v3146 = vsub.f32 %v3061, %v3097
  %v3147 = vsub.f32 %v3066, %v3098
  %v3148 = vsub.f32 %v3071, %v3099
  %v3149 = vsub.f32 %v3076, %v3100
  %v3150 = vsub.f32 %v3081, %v3101
  %v3151 = vsub.f32 %v3086, %v3102
  %v3152 = vmul.f32 %v3145, 1.442695
  %v3153 = vpow.pop %v3152
  %v3154 = vmul.f32 %v3146, 1.442695
  %v3155 = vpow.pop %v3154
  %v3156 = vmul.f32 %v3147, 1.442695
  %v3157 = vpow.pop %v3156
  %v3158 = vmul.f32 %v3148, 1.442695
  %v3159 = vpow.pop %v3158
  %v3160 = vmul.f32 %v3149, 1.442695
  %v3161 = vpow.pop %v3160
  %v3162 = vmul.f32 %v3150, 1.442695
  %v3163 = vpow.pop %v3162
  %v3164 = vmul.f32 %v3151, 1.442695
  %v3165 = vpow.pop %v3164
  %v3166 = vadd.f32 %v3111, %v3132
  %v3167 = vadd.f32 %v3113, %v3134
  %v3168 = vadd.f32 %v3115, %v3136
  %v3169 = vadd.f32 %v3117, %v3138
  %v3170 = vadd.f32 %v3119, %v3140
  %v3171 = vadd.f32 %v3121, %v3142
  %v3172 = vadd.f32 %v3123, %v3144
  %v3173 = vadd.f32 %v3166, %v3153
  %v3174 = vadd.f32 %v3167, %v3155
  %v3175 = vadd.f32 %v3168, %v3157
  %v3176 = vadd.f32 %v3169, %v3159
  %v3177 = vadd.f32 %v3170, %v3161
  %v3178 = vadd.f32 %v3171, %v3163
  %v3179 = vadd.f32 %v3172, %v3165
  %v3180 = vrcp.pop %v3173
  %v3181 = vrcp.pop %v3174
  %v3182 = vrcp.pop %v3175
  %v3183 = vrcp.pop %v3176
  %v3184 = vrcp.pop %v3177
  %v3185 = vrcp.pop %v3178
  %v3186 = vrcp.pop %v3179
  %v3187 = vmul.f32 %v3111, %v3180
  %v3188 = vmul.f32 %v3113, %v3181
  %v3189 = vmul.f32 %v3115, %v3182
  %v3190 = vmul.f32 %v3117, %v3183
  %v3191 = vmul.f32 %v3119, %v3184
  %v3192 = vmul.f32 %v3121, %v3185
  %v3193 = vmul.f32 %v3123, %v3186
  %v3194 = vmul.f32 %v3187, %v2742
  %v3195 = vmul.f32 %v3188, %v2743
  %v3196 = vmul.f32 %v3189, %v2744
  %v3197 = vmul.f32 %v3190, %v2745
  %v3198 = vmul.f32 %v3191, %v2746
  %v3199 = vmul.f32 %v3192, %v2747
  %v3200 = vmul.f32 %v3193, %v2748
  %3201 = vrot.lane.b32.xlu0 %v2742, 64
  %v3202 = vpop.permute.xlu0 %3201
  %3203 = vrot.lane.b32.xlu0 %v2743, 64
  %v3204 = vpop.permute.xlu0 %3203
  %3205 = vrot.lane.b32.xlu0 %v2744, 64
  %v3206 = vpop.permute.xlu0 %3205
  %3207 = vrot.lane.b32.xlu0 %v2745, 64
  %v3208 = vpop.permute.xlu0 %3207
  %3209 = vrot.lane.b32.xlu0 %v2746, 64
  %v3210 = vpop.permute.xlu0 %3209
  %3211 = vrot.lane.b32.xlu0 %v2747, 64
  %v3212 = vpop.permute.xlu0 %3211
  %3213 = vrot.lane.b32.xlu0 %v2748, 64
  %v3214 = vpop.permute.xlu0 %3213
  %v3215 = vmul.f32 %v3132, %v3180
  %v3216 = vmul.f32 %v3134, %v3181
  %v3217 = vmul.f32 %v3136, %v3182
  %v3218 = vmul.f32 %v3138, %v3183
  %v3219 = vmul.f32 %v3140, %v3184
  %v3220 = vmul.f32 %v3142, %v3185
  %v3221 = vmul.f32 %v3144, %v3186
  %v3222 = vmul.f32 %v3215, %v3202
  %v3223 = vmul.f32 %v3216, %v3204
  %v3224 = vmul.f32 %v3217, %v3206
  %v3225 = vmul.f32 %v3218, %v3208
  %v3226 = vmul.f32 %v3219, %v3210
  %v3227 = vmul.f32 %v3220, %v3212
  %v3228 = vmul.f32 %v3221, %v3214
  %v3229 = vadd.f32 %v3194, %v3222
  %v3230 = vadd.f32 %v3195, %v3223
  %v3231 = vadd.f32 %v3196, %v3224
  %v3232 = vadd.f32 %v3197, %v3225
  %v3233 = vadd.f32 %v3198, %v3226
  %v3234 = vadd.f32 %v3199, %v3227
  %v3235 = vadd.f32 %v3200, %v3228
  %v3236 = vmul.f32 %v3153, %v3180
  %v3237 = vmul.f32 %v3155, %v3181
  %v3238 = vmul.f32 %v3157, %v3182
  %v3239 = vmul.f32 %v3159, %v3183
  %v3240 = vmul.f32 %v3161, %v3184
  %v3241 = vmul.f32 %v3163, %v3185
  %v3242 = vmul.f32 %v3165, %v3186
  %v3243 = vld [vmem:[%s2 + $0x5ca] sm:$0x1]
  %v3244 = vlaneseq
  %v3245 = vshrl.u32 %v3244, 7
  %v3246 = vsub.s32 0, %v3245
  %v3247 = vrot.slane %v3243, %v3246
  %v3248 = vmul.f32 %v3236, %v3247
  %v3249 = vmul.f32 %v3237, %v3247
  %v3250 = vmul.f32 %v3238, %v3247
  %v3251 = vmul.f32 %v3239, %v3247
  %v3252 = vmul.f32 %v3240, %v3247
  %v3253 = vmul.f32 %v3241, %v3247
  %v3254 = vmul.f32 %v3242, %v3247
  %v3255 = vadd.f32 %v3229, %v3248
  %v3256 = vadd.f32 %v3230, %v3249
  %v3257 = vadd.f32 %v3231, %v3250
  %v3258 = vadd.f32 %v3232, %v3251
  %v3259 = vadd.f32 %v3233, %v3252
  %v3260 = vadd.f32 %v3234, %v3253
  %v3261 = vadd.f32 %v3235, %v3254
  %v3262 = vld [vmem:[%s2 + $0x5cb] sm:$0x1]
  %v3263 = vlaneseq
  %v3264 = vshrl.u32 %v3263, 7
  %v3265 = vsub.s32 0, %v3264
  %v3266 = vrot.slane %v3262, %v3265
  %3267 = vmatprep.subr.mxu0 0.0
  %3268 = vmatpush1.msra.mxu0 %v2505
  %3269 = vmatprep.subr.mxu0 0.0
  %3270 = vmatpush1.msra.mxu0 %v2504
  %3271 = vmatprep.subr.mxu0 0.0
  %3272 = vmatpush1.msra.mxu0 %v2503
  %3273 = vmatprep.subr.mxu0 0.0
  %3274 = vmatpush1.msra.mxu0 %v2502
  %3275 = vmatprep.subr.mxu0 0.0
  %3276 = vmatpush1.msra.mxu0 %v2501
  %3277 = vmatprep.subr.mxu0 0.0
  %3278 = vmatpush1.msra.mxu0 %v2500
  %3279 = vmatprep.subr.mxu0 0.0
  %3280 = vmatpush1.msra.mxu0 %v2499
  %3281 = vmatprep.subr.mxu0 0.0
  %3282 = vmatpush1.msra.mxu0 %v2498
  %3283 = vmatprep.subr.mxu0 0.0
  %3284 = vmatpush1.msra.mxu0 %v2497
  %3285 = vmatprep.subr.mxu0 0.0
  %3286 = vmatpush1.msra.mxu0 %v2496
  %3287 = vmatprep.subr.mxu0 0.0
  %3288 = vmatpush1.msra.mxu0 %v2495
  %3289 = vmatprep.subr.mxu0 0.0
  %3290 = vmatpush1.msra.mxu0 %v2494
  %3291 = vmatprep.subr.mxu0 0.0
  %3292 = vmatpush1.msra.mxu0 %v2493
  %3293 = vmatprep.subr.mxu0 0.0
  %3294 = vmatpush1.msra.mxu0 %v2492
  %3295 = vmatprep.subr.mxu0 0.0
  %3296 = vmatpush1.msra.mxu0 %v2491
  %3297 = vmatprep.subr.mxu0 0.0
  %3298 = vmatpush1.msra.mxu0 %v2490
  %3299 = vmatprep.subr.mxu0 0.0
  %3300 = vmatpush2.msra.mxu0 0.0
  %3301 = vmatprep.subr.mxu0 0.0
  %3302 = vmatpush2.msra.mxu0 0.0
  %3303 = vmatprep.subr.mxu0 0.0
  %3304 = vmatpush2.msra.mxu0 0.0
  %3305 = vmatprep.subr.mxu0 0.0
  %3306 = vmatpush2.msra.mxu0 0.0
  %3307 = vmatprep.subr.mxu0 0.0
  %3308 = vmatpush2.msra.mxu0 0.0
  %3309 = vmatprep.subr.mxu0 0.0
  %3310 = vmatpush2.msra.mxu0 0.0
  %3311 = vmatprep.subr.mxu0 0.0
  %3312 = vmatpush2.msra.mxu0 0.0
  %3313 = vmatprep.subr.mxu0 0.0
  %3314 = vmatpush2.msra.mxu0 0.0
  %3315 = vmatprep.subr.mxu0 0.0
  %3316 = vmatpush2.msra.mxu0 0.0
  %3317 = vmatprep.subr.mxu0 0.0
  %3318 = vmatpush2.msra.mxu0 0.0
  %3319 = vmatprep.subr.mxu0 0.0
  %3320 = vmatpush2.msra.mxu0 0.0
  %3321 = vmatprep.subr.mxu0 0.0
  %3322 = vmatpush2.msra.mxu0 0.0
  %3323 = vmatprep.subr.mxu0 0.0
  %3324 = vmatpush2.msra.mxu0 0.0
  %3325 = vmatprep.subr.mxu0 0.0
  %3326 = vmatpush2.msra.mxu0 0.0
  %3327 = vmatprep.subr.mxu0 0.0
  %3328 = vmatpush2.msra.mxu0 0.0
  %3329 = vmatprep.subr.mxu0 0.0
  %3330 = vmatpush2.msra.mxu0 0.0
  %3331 = vmatprep.mubr.f32.mxu0 0.0
  %3332 = vmatmul.mubr.f32.gmra.mxu0 %v3255
  %v3333 = vpop.f32.mrf.mxu0
  %v3334 = vadd.f32 %v3266, %v3333
  %v3335 = vpop.f32.mrf.mxu0
  %3336 = vmatprep.mubr.f32.mxu0 0.0
  %3337 = vmatmul.mubr.f32.gmra.mxu0 %v3256
  %v3338 = vpop.f32.mrf.mxu0
  %v3339 = vadd.f32 %v3266, %v3338
  %v3340 = vpop.f32.mrf.mxu0
  %3341 = vmatprep.mubr.f32.mxu0 0.0
  %3342 = vmatmul.mubr.f32.gmra.mxu0 %v3257
  %v3343 = vpop.f32.mrf.mxu0
  %v3344 = vadd.f32 %v3266, %v3343
  %v3345 = vpop.f32.mrf.mxu0
  %3346 = vmatprep.mubr.f32.mxu0 0.0
  %3347 = vmatmul.mubr.f32.gmra.mxu0 %v3258
  %v3348 = vpop.f32.mrf.mxu0
  %v3349 = vadd.f32 %v3266, %v3348
  %v3350 = vpop.f32.mrf.mxu0
  %3351 = vmatprep.mubr.f32.mxu0 0.0
  %3352 = vmatmul.mubr.f32.gmra.mxu0 %v3259
  %v3353 = vpop.f32.mrf.mxu0
  %v3354 = vadd.f32 %v3266, %v3353
  %v3355 = vpop.f32.mrf.mxu0
  %3356 = vmatprep.mubr.f32.mxu0 0.0
  %3357 = vmatmul.mubr.f32.gmra.mxu0 %v3260
  %v3358 = vpop.f32.mrf.mxu0
  %v3359 = vadd.f32 %v3266, %v3358
  %v3360 = vpop.f32.mrf.mxu0
  %3361 = vmatprep.mubr.f32.mxu0 0.0
  %3362 = vmatmul.mubr.f32.gmra.mxu0 %v3261
  %v3363 = vpop.f32.mrf.mxu0
  %v3364 = vadd.f32 %v3266, %v3363
  %v3365 = vpop.f32.mrf.mxu0
  %3366 = vdwg.mxu0
  %v3367 = vadd.f32 %v3334, %v2435
  %v3368 = vadd.f32 %v3339, %v2436
  %v3369 = vadd.f32 %v3344, %v2437
  %v3370 = vadd.f32 %v3349, %v2438
  %v3371 = vadd.f32 %v3354, %v2439
  %v3372 = vadd.f32 %v3359, %v2440
  %v3373 = vadd.f32 %v3364, %v2441
  %3374 = vmatprep.subr.mxu0 0.0
  %3375 = vmatpush1.msra.mxu0 %v159
  %3376 = vmatprep.subr.mxu0 0.0
  %3377 = vmatpush1.msra.mxu0 %v158
  %3378 = vmatprep.subr.mxu0 0.0
  %3379 = vmatpush1.msra.mxu0 %v157
  %3380 = vmatprep.subr.mxu0 0.0
  %3381 = vmatpush1.msra.mxu0 %v156
  %3382 = vmatprep.subr.mxu0 0.0
  %3383 = vmatpush1.msra.mxu0 %v155
  %3384 = vmatprep.subr.mxu0 0.0
  %3385 = vmatpush1.msra.mxu0 %v154
  %3386 = vmatprep.subr.mxu0 0.0
  %3387 = vmatpush1.msra.mxu0 %v153
  %3388 = vmatprep.subr.mxu0 0.0
  %3389 = vmatpush1.msra.mxu0 %v152
  %3390 = vmatprep.subr.mxu0 0.0
  %3391 = vmatpush1.msra.mxu0 %v151
  %3392 = vmatprep.subr.mxu0 0.0
  %3393 = vmatpush1.msra.mxu0 %v150
  %3394 = vmatprep.subr.mxu0 0.0
  %3395 = vmatpush1.msra.mxu0 %v149
  %3396 = vmatprep.subr.mxu0 0.0
  %3397 = vmatpush1.msra.mxu0 %v148
  %3398 = vmatprep.subr.mxu0 0.0
  %3399 = vmatpush1.msra.mxu0 %v147
  %3400 = vmatprep.subr.mxu0 0.0
  %3401 = vmatpush1.msra.mxu0 %v146
  %3402 = vmatprep.subr.mxu0 0.0
  %3403 = vmatpush1.msra.mxu0 %v145
  %3404 = vmatprep.subr.mxu0 0.0
  %3405 = vmatpush1.msra.mxu0 %v144
  %3406 = vmatprep.subr.mxu0 0.0
  %3407 = vmatpush2.msra.mxu0 0.0
  %3408 = vmatprep.subr.mxu0 0.0
  %3409 = vmatpush2.msra.mxu0 0.0
  %3410 = vmatprep.subr.mxu0 0.0
  %3411 = vmatpush2.msra.mxu0 0.0
  %3412 = vmatprep.subr.mxu0 0.0
  %3413 = vmatpush2.msra.mxu0 0.0
  %3414 = vmatprep.subr.mxu0 0.0
  %3415 = vmatpush2.msra.mxu0 0.0
  %3416 = vmatprep.subr.mxu0 0.0
  %3417 = vmatpush2.msra.mxu0 0.0
  %3418 = vmatprep.subr.mxu0 0.0
  %3419 = vmatpush2.msra.mxu0 0.0
  %3420 = vmatprep.subr.mxu0 0.0
  %3421 = vmatpush2.msra.mxu0 0.0
  %3422 = vmatprep.subr.mxu0 0.0
  %3423 = vmatpush2.msra.mxu0 0.0
  %3424 = vmatprep.subr.mxu0 0.0
  %3425 = vmatpush2.msra.mxu0 0.0
  %3426 = vmatprep.subr.mxu0 0.0
  %3427 = vmatpush2.msra.mxu0 0.0
  %3428 = vmatprep.subr.mxu0 0.0
  %3429 = vmatpush2.msra.mxu0 0.0
  %3430 = vmatprep.subr.mxu0 0.0
  %3431 = vmatpush2.msra.mxu0 0.0
  %3432 = vmatprep.subr.mxu0 0.0
  %3433 = vmatpush2.msra.mxu0 0.0
  %3434 = vmatprep.subr.mxu0 0.0
  %3435 = vmatpush2.msra.mxu0 0.0
  %3436 = vmatprep.subr.mxu0 0.0
  %3437 = vmatpush2.msra.mxu0 0.0
  %3438 = vmatprep.mubr.f32.mxu0 0.0
  %3439 = vmatmul.mubr.f32.gmra.mxu0 %v3367
  %v3440 = vpop.f32.mrf.mxu0
  %v3441 = vadd.f32 0.0, %v3440
  %v3442 = vpop.f32.mrf.mxu0
  %3443 = vmatprep.mubr.f32.mxu0 0.0
  %3444 = vmatmul.mubr.f32.gmra.mxu0 %v3368
  %v3445 = vpop.f32.mrf.mxu0
  %v3446 = vadd.f32 0.0, %v3445
  %v3447 = vpop.f32.mrf.mxu0
  %3448 = vmatprep.mubr.f32.mxu0 0.0
  %3449 = vmatmul.mubr.f32.gmra.mxu0 %v3369
  %v3450 = vpop.f32.mrf.mxu0
  %v3451 = vadd.f32 0.0, %v3450
  %v3452 = vpop.f32.mrf.mxu0
  %3453 = vmatprep.mubr.f32.mxu0 0.0
  %3454 = vmatmul.mubr.f32.gmra.mxu0 %v3370
  %v3455 = vpop.f32.mrf.mxu0
  %v3456 = vadd.f32 0.0, %v3455
  %v3457 = vpop.f32.mrf.mxu0
  %3458 = vmatprep.mubr.f32.mxu0 0.0
  %3459 = vmatmul.mubr.f32.gmra.mxu0 %v3371
  %v3460 = vpop.f32.mrf.mxu0
  %v3461 = vadd.f32 0.0, %v3460
  %v3462 = vpop.f32.mrf.mxu0
  %3463 = vmatprep.mubr.f32.mxu0 0.0
  %3464 = vmatmul.mubr.f32.gmra.mxu0 %v3372
  %v3465 = vpop.f32.mrf.mxu0
  %v3466 = vadd.f32 0.0, %v3465
  %v3467 = vpop.f32.mrf.mxu0
  %3468 = vmatprep.mubr.f32.mxu0 0.0
  %3469 = vmatmul.mubr.f32.gmra.mxu0 %v3373
  %v3470 = vpop.f32.mrf.mxu0
  %v3471 = vadd.f32 0.0, %v3470
  %v3472 = vpop.f32.mrf.mxu0
  %3473 = vdwg.mxu0
  %v3474 = vmul.f32 %v3367, %v3367
  %v3475 = vmul.f32 %v3368, %v3368
  %v3476 = vmul.f32 %v3369, %v3369
  %v3477 = vmul.f32 %v3370, %v3370
  %v3478 = vmul.f32 %v3371, %v3371
  %v3479 = vmul.f32 %v3372, %v3372
  %v3480 = vmul.f32 %v3373, %v3373
  %3481 = vmatprep.subr.mxu0 0.0
  %3482 = vmatpush1.msra.mxu0 %v159
  %3483 = vmatprep.subr.mxu0 0.0
  %3484 = vmatpush1.msra.mxu0 %v158
  %3485 = vmatprep.subr.mxu0 0.0
  %3486 = vmatpush1.msra.mxu0 %v157
  %3487 = vmatprep.subr.mxu0 0.0
  %3488 = vmatpush1.msra.mxu0 %v156
  %3489 = vmatprep.subr.mxu0 0.0
  %3490 = vmatpush1.msra.mxu0 %v155
  %3491 = vmatprep.subr.mxu0 0.0
  %3492 = vmatpush1.msra.mxu0 %v154
  %3493 = vmatprep.subr.mxu0 0.0
  %3494 = vmatpush1.msra.mxu0 %v153
  %3495 = vmatprep.subr.mxu0 0.0
  %3496 = vmatpush1.msra.mxu0 %v152
  %3497 = vmatprep.subr.mxu0 0.0
  %3498 = vmatpush1.msra.mxu0 %v151
  %3499 = vmatprep.subr.mxu0 0.0
  %3500 = vmatpush1.msra.mxu0 %v150
  %3501 = vmatprep.subr.mxu0 0.0
  %3502 = vmatpush1.msra.mxu0 %v149
  %3503 = vmatprep.subr.mxu0 0.0
  %3504 = vmatpush1.msra.mxu0 %v148
  %3505 = vmatprep.subr.mxu0 0.0
  %3506 = vmatpush1.msra.mxu0 %v147
  %3507 = vmatprep.subr.mxu0 0.0
  %3508 = vmatpush1.msra.mxu0 %v146
  %3509 = vmatprep.subr.mxu0 0.0
  %3510 = vmatpush1.msra.mxu0 %v145
  %3511 = vmatprep.subr.mxu0 0.0
  %3512 = vmatpush1.msra.mxu0 %v144
  %3513 = vmatprep.subr.mxu0 0.0
  %3514 = vmatpush2.msra.mxu0 0.0
  %3515 = vmatprep.subr.mxu0 0.0
  %3516 = vmatpush2.msra.mxu0 0.0
  %3517 = vmatprep.subr.mxu0 0.0
  %3518 = vmatpush2.msra.mxu0 0.0
  %3519 = vmatprep.subr.mxu0 0.0
  %3520 = vmatpush2.msra.mxu0 0.0
  %3521 = vmatprep.subr.mxu0 0.0
  %3522 = vmatpush2.msra.mxu0 0.0
  %3523 = vmatprep.subr.mxu0 0.0
  %3524 = vmatpush2.msra.mxu0 0.0
  %3525 = vmatprep.subr.mxu0 0.0
  %3526 = vmatpush2.msra.mxu0 0.0
  %3527 = vmatprep.subr.mxu0 0.0
  %3528 = vmatpush2.msra.mxu0 0.0
  %3529 = vmatprep.subr.mxu0 0.0
  %3530 = vmatpush2.msra.mxu0 0.0
  %3531 = vmatprep.subr.mxu0 0.0
  %3532 = vmatpush2.msra.mxu0 0.0
  %3533 = vmatprep.subr.mxu0 0.0
  %3534 = vmatpush2.msra.mxu0 0.0
  %3535 = vmatprep.subr.mxu0 0.0
  %3536 = vmatpush2.msra.mxu0 0.0
  %3537 = vmatprep.subr.mxu0 0.0
  %3538 = vmatpush2.msra.mxu0 0.0
  %3539 = vmatprep.subr.mxu0 0.0
  %3540 = vmatpush2.msra.mxu0 0.0
  %3541 = vmatprep.subr.mxu0 0.0
  %3542 = vmatpush2.msra.mxu0 0.0
  %3543 = vmatprep.subr.mxu0 0.0
  %3544 = vmatpush2.msra.mxu0 0.0
  %3545 = vmatprep.mubr.f32.mxu0 0.0
  %3546 = vmatmul.mubr.f32.gmra.mxu0 %v3474
  %v3547 = vpop.f32.mrf.mxu0
  %v3548 = vadd.f32 0.0, %v3547
  %v3549 = vpop.f32.mrf.mxu0
  %3550 = vmatprep.mubr.f32.mxu0 0.0
  %3551 = vmatmul.mubr.f32.gmra.mxu0 %v3475
  %v3552 = vpop.f32.mrf.mxu0
  %v3553 = vadd.f32 0.0, %v3552
  %v3554 = vpop.f32.mrf.mxu0
  %3555 = vmatprep.mubr.f32.mxu0 0.0
  %3556 = vmatmul.mubr.f32.gmra.mxu0 %v3476
  %v3557 = vpop.f32.mrf.mxu0
  %v3558 = vadd.f32 0.0, %v3557
  %v3559 = vpop.f32.mrf.mxu0
  %3560 = vmatprep.mubr.f32.mxu0 0.0
  %3561 = vmatmul.mubr.f32.gmra.mxu0 %v3477
  %v3562 = vpop.f32.mrf.mxu0
  %v3563 = vadd.f32 0.0, %v3562
  %v3564 = vpop.f32.mrf.mxu0
  %3565 = vmatprep.mubr.f32.mxu0 0.0
  %3566 = vmatmul.mubr.f32.gmra.mxu0 %v3478
  %v3567 = vpop.f32.mrf.mxu0
  %v3568 = vadd.f32 0.0, %v3567
  %v3569 = vpop.f32.mrf.mxu0
  %3570 = vmatprep.mubr.f32.mxu0 0.0
  %3571 = vmatmul.mubr.f32.gmra.mxu0 %v3479
  %v3572 = vpop.f32.mrf.mxu0
  %v3573 = vadd.f32 0.0, %v3572
  %v3574 = vpop.f32.mrf.mxu0
  %3575 = vmatprep.mubr.f32.mxu0 0.0
  %3576 = vmatmul.mubr.f32.gmra.mxu0 %v3480
  %v3577 = vpop.f32.mrf.mxu0
  %v3578 = vadd.f32 0.0, %v3577
  %v3579 = vpop.f32.mrf.mxu0
  %3580 = vdwg.mxu0
  %v3581 = vmul.f32 %v3441, 0.015625
  %v3582 = vmul.f32 %v3446, 0.015625
  %v3583 = vmul.f32 %v3451, 0.015625
  %v3584 = vmul.f32 %v3456, 0.015625
  %v3585 = vmul.f32 %v3461, 0.015625
  %v3586 = vmul.f32 %v3466, 0.015625
  %v3587 = vmul.f32 %v3471, 0.015625
  %v3588 = vmul.f32 %v3548, 0.015625
  %v3589 = vmul.f32 %v3553, 0.015625
  %v3590 = vmul.f32 %v3558, 0.015625
  %v3591 = vmul.f32 %v3563, 0.015625
  %v3592 = vmul.f32 %v3568, 0.015625
  %v3593 = vmul.f32 %v3573, 0.015625
  %v3594 = vmul.f32 %v3578, 0.015625
  %v3595 = vmul.f32 %v3581, %v3581
  %v3596 = vmul.f32 %v3582, %v3582
  %v3597 = vmul.f32 %v3583, %v3583
  %v3598 = vmul.f32 %v3584, %v3584
  %v3599 = vmul.f32 %v3585, %v3585
  %v3600 = vmul.f32 %v3586, %v3586
  %v3601 = vmul.f32 %v3587, %v3587
  %v3602 = vsub.f32 %v3588, %v3595
  %v3603 = vsub.f32 %v3589, %v3596
  %v3604 = vsub.f32 %v3590, %v3597
  %v3605 = vsub.f32 %v3591, %v3598
  %v3606 = vsub.f32 %v3592, %v3599
  %v3607 = vsub.f32 %v3593, %v3600
  %v3608 = vsub.f32 %v3594, %v3601
  %v3609 = vmax.f32 %v3602, 0.0
  %v3610 = vmax.f32 %v3603, 0.0
  %v3611 = vmax.f32 %v3604, 0.0
  %v3612 = vmax.f32 %v3605, 0.0
  %v3613 = vmax.f32 %v3606, 0.0
  %v3614 = vmax.f32 %v3607, 0.0
  %v3615 = vmax.f32 %v3608, 0.0
  %v3616 = vsub.f32 %v3367, %v3581
  %v3617 = vsub.f32 %v3368, %v3582
  %v3618 = vsub.f32 %v3369, %v3583
  %v3619 = vsub.f32 %v3370, %v3584
  %v3620 = vsub.f32 %v3371, %v3585
  %v3621 = vsub.f32 %v3372, %v3586
  %v3622 = vsub.f32 %v3373, %v3587
  %v3623 = vadd.f32 %v3609, 1e-05
  %v3624 = vadd.f32 %v3610, 1e-05
  %v3625 = vadd.f32 %v3611, 1e-05
  %v3626 = vadd.f32 %v3612, 1e-05
  %v3627 = vadd.f32 %v3613, 1e-05
  %v3628 = vadd.f32 %v3614, 1e-05
  %v3629 = vadd.f32 %v3615, 1e-05
  %v3630 = vrsqrt.pop %v3623
  %v3631 = vrsqrt.pop %v3624
  %v3632 = vrsqrt.pop %v3625
  %v3633 = vrsqrt.pop %v3626
  %v3634 = vrsqrt.pop %v3627
  %v3635 = vrsqrt.pop %v3628
  %v3636 = vrsqrt.pop %v3629
  %v3637 = vmul.f32 %v3616, %v3630
  %v3638 = vmul.f32 %v3617, %v3631
  %v3639 = vmul.f32 %v3618, %v3632
  %v3640 = vmul.f32 %v3619, %v3633
  %v3641 = vmul.f32 %v3620, %v3634
  %v3642 = vmul.f32 %v3621, %v3635
  %v3643 = vmul.f32 %v3622, %v3636
  %v3644 = vld [vmem:[%s2 + $0x5cc] sm:$0x1]
  %v3645 = vlaneseq
  %v3646 = vshrl.u32 %v3645, 7
  %v3647 = vsub.s32 0, %v3646
  %v3648 = vrot.slane %v3644, %v3647
  %v3649 = vmul.f32 %v3637, %v3648
  %v3650 = vmul.f32 %v3638, %v3648
  %v3651 = vmul.f32 %v3639, %v3648
  %v3652 = vmul.f32 %v3640, %v3648
  %v3653 = vmul.f32 %v3641, %v3648
  %v3654 = vmul.f32 %v3642, %v3648
  %v3655 = vmul.f32 %v3643, %v3648
  %v3656 = vld [vmem:[%s2 + $0x5cd] sm:$0x1]
  %v3657 = vlaneseq
  %v3658 = vshrl.u32 %v3657, 7
  %v3659 = vsub.s32 0, %v3658
  %v3660 = vrot.slane %v3656, %v3659
  %v3661 = vadd.f32 %v3649, %v3660
  %v3662 = vadd.f32 %v3650, %v3660
  %v3663 = vadd.f32 %v3651, %v3660
  %v3664 = vadd.f32 %v3652, %v3660
  %v3665 = vadd.f32 %v3653, %v3660
  %v3666 = vadd.f32 %v3654, %v3660
  %v3667 = vadd.f32 %v3655, %v3660
  %v3668 = vld [vmem:[%s2 + $0x238] sm:$0xff]
  %v3669 = vld [vmem:[%s2 + $0x240] sm:$0xff]
  %v3670 = vld [vmem:[%s2 + $0x248] sm:$0xff]
  %v3671 = vld [vmem:[%s2 + $0x250] sm:$0xff]
  %v3672 = vld [vmem:[%s2 + $0x258] sm:$0xff]
  %v3673 = vld [vmem:[%s2 + $0x260] sm:$0xff]
  %v3674 = vld [vmem:[%s2 + $0x268] sm:$0xff]
  %v3675 = vld [vmem:[%s2 + $0x270] sm:$0xff]
  %v3676 = vld [vmem:[%s2 + $0x278] sm:$0xff]
  %v3677 = vld [vmem:[%s2 + $0x280] sm:$0xff]
  %v3678 = vld [vmem:[%s2 + $0x288] sm:$0xff]
  %v3679 = vld [vmem:[%s2 + $0x290] sm:$0xff]
  %v3680 = vld [vmem:[%s2 + $0x298] sm:$0xff]
  %v3681 = vld [vmem:[%s2 + $0x2a0] sm:$0xff]
  %v3682 = vld [vmem:[%s2 + $0x2a8] sm:$0xff]
  %v3683 = vld [vmem:[%s2 + $0x2b0] sm:$0xff]
  %v3684 = vld [vmem:[%s2 + $0x2b8] sm:$0xff]
  %v3685 = vld [vmem:[%s2 + $0x2c0] sm:$0xff]
  %v3686 = vld [vmem:[%s2 + $0x2c8] sm:$0xff]
  %v3687 = vld [vmem:[%s2 + $0x2d0] sm:$0xff]
  %v3688 = vld [vmem:[%s2 + $0x2d8] sm:$0xff]
  %v3689 = vld [vmem:[%s2 + $0x2e0] sm:$0xff]
  %v3690 = vld [vmem:[%s2 + $0x2e8] sm:$0xff]
  %v3691 = vld [vmem:[%s2 + $0x2f0] sm:$0xff]
  %v3692 = vld [vmem:[%s2 + $0x2f8] sm:$0xff]
  %v3693 = vld [vmem:[%s2 + $0x300] sm:$0xff]
  %v3694 = vld [vmem:[%s2 + $0x308] sm:$0xff]
  %v3695 = vld [vmem:[%s2 + $0x310] sm:$0xff]
  %v3696 = vld [vmem:[%s2 + $0x318] sm:$0xff]
  %v3697 = vld [vmem:[%s2 + $0x320] sm:$0xff]
  %v3698 = vld [vmem:[%s2 + $0x328] sm:$0xff]
  %v3699 = vld [vmem:[%s2 + $0x330] sm:$0xff]
  %v3700 = vld [vmem:[%s2 + $0x5ce] sm:$0x1]
  %v3701 = vlaneseq
  %v3702 = vshrl.u32 %v3701, 7
  %v3703 = vsub.s32 0, %v3702
  %v3704 = vrot.slane %v3700, %v3703
  %3705 = vmatprep.subr.mxu0 0.0
  %3706 = vmatpush1.msra.mxu0 %v3683
  %3707 = vmatprep.subr.mxu0 0.0
  %3708 = vmatpush1.msra.mxu0 %v3682
  %3709 = vmatprep.subr.mxu0 0.0
  %3710 = vmatpush1.msra.mxu0 %v3681
  %3711 = vmatprep.subr.mxu0 0.0
  %3712 = vmatpush1.msra.mxu0 %v3680
  %3713 = vmatprep.subr.mxu0 0.0
  %3714 = vmatpush1.msra.mxu0 %v3679
  %3715 = vmatprep.subr.mxu0 0.0
  %3716 = vmatpush1.msra.mxu0 %v3678
  %3717 = vmatprep.subr.mxu0 0.0
  %3718 = vmatpush1.msra.mxu0 %v3677
  %3719 = vmatprep.subr.mxu0 0.0
  %3720 = vmatpush1.msra.mxu0 %v3676
  %3721 = vmatprep.subr.mxu0 0.0
  %3722 = vmatpush1.msra.mxu0 %v3675
  %3723 = vmatprep.subr.mxu0 0.0
  %3724 = vmatpush1.msra.mxu0 %v3674
  %3725 = vmatprep.subr.mxu0 0.0
  %3726 = vmatpush1.msra.mxu0 %v3673
  %3727 = vmatprep.subr.mxu0 0.0
  %3728 = vmatpush1.msra.mxu0 %v3672
  %3729 = vmatprep.subr.mxu0 0.0
  %3730 = vmatpush1.msra.mxu0 %v3671
  %3731 = vmatprep.subr.mxu0 0.0
  %3732 = vmatpush1.msra.mxu0 %v3670
  %3733 = vmatprep.subr.mxu0 0.0
  %3734 = vmatpush1.msra.mxu0 %v3669
  %3735 = vmatprep.subr.mxu0 0.0
  %3736 = vmatpush1.msra.mxu0 %v3668
  %3737 = vmatprep.subr.mxu0 0.0
  %3738 = vmatpush2.msra.mxu0 0.0
  %3739 = vmatprep.subr.mxu0 0.0
  %3740 = vmatpush2.msra.mxu0 0.0
  %3741 = vmatprep.subr.mxu0 0.0
  %3742 = vmatpush2.msra.mxu0 0.0
  %3743 = vmatprep.subr.mxu0 0.0
  %3744 = vmatpush2.msra.mxu0 0.0
  %3745 = vmatprep.subr.mxu0 0.0
  %3746 = vmatpush2.msra.mxu0 0.0
  %3747 = vmatprep.subr.mxu0 0.0
  %3748 = vmatpush2.msra.mxu0 0.0
  %3749 = vmatprep.subr.mxu0 0.0
  %3750 = vmatpush2.msra.mxu0 0.0
  %3751 = vmatprep.subr.mxu0 0.0
  %3752 = vmatpush2.msra.mxu0 0.0
  %3753 = vmatprep.subr.mxu0 0.0
  %3754 = vmatpush2.msra.mxu0 0.0
  %3755 = vmatprep.subr.mxu0 0.0
  %3756 = vmatpush2.msra.mxu0 0.0
  %3757 = vmatprep.subr.mxu0 0.0
  %3758 = vmatpush2.msra.mxu0 0.0
  %3759 = vmatprep.subr.mxu0 0.0
  %3760 = vmatpush2.msra.mxu0 0.0
  %3761 = vmatprep.subr.mxu0 0.0
  %3762 = vmatpush2.msra.mxu0 0.0
  %3763 = vmatprep.subr.mxu0 0.0
  %3764 = vmatpush2.msra.mxu0 0.0
  %3765 = vmatprep.subr.mxu0 0.0
  %3766 = vmatpush2.msra.mxu0 0.0
  %3767 = vmatprep.subr.mxu0 0.0
  %3768 = vmatpush2.msra.mxu0 0.0
  %3769 = vmatprep.mubr.f32.mxu0 0.0
  %3770 = vmatmul.mubr.f32.gmra.mxu0 %v3661
  %v3771 = vpop.f32.mrf.mxu0
  %v3772 = vadd.f32 %v3704, %v3771
  %v3773 = vpop.f32.mrf.mxu0
  %3774 = vmatprep.mubr.f32.mxu0 0.0
  %3775 = vmatmul.mubr.f32.gmra.mxu0 %v3662
  %v3776 = vpop.f32.mrf.mxu0
  %v3777 = vadd.f32 %v3704, %v3776
  %v3778 = vpop.f32.mrf.mxu0
  %3779 = vmatprep.mubr.f32.mxu0 0.0
  %3780 = vmatmul.mubr.f32.gmra.mxu0 %v3663
  %v3781 = vpop.f32.mrf.mxu0
  %v3782 = vadd.f32 %v3704, %v3781
  %v3783 = vpop.f32.mrf.mxu0
  %3784 = vmatprep.mubr.f32.mxu0 0.0
  %3785 = vmatmul.mubr.f32.gmra.mxu0 %v3664
  %v3786 = vpop.f32.mrf.mxu0
  %v3787 = vadd.f32 %v3704, %v3786
  %v3788 = vpop.f32.mrf.mxu0
  %3789 = vmatprep.mubr.f32.mxu0 0.0
  %3790 = vmatmul.mubr.f32.gmra.mxu0 %v3665
  %v3791 = vpop.f32.mrf.mxu0
  %v3792 = vadd.f32 %v3704, %v3791
  %v3793 = vpop.f32.mrf.mxu0
  %3794 = vmatprep.mubr.f32.mxu0 0.0
  %3795 = vmatmul.mubr.f32.gmra.mxu0 %v3666
  %v3796 = vpop.f32.mrf.mxu0
  %v3797 = vadd.f32 %v3704, %v3796
  %v3798 = vpop.f32.mrf.mxu0
  %3799 = vmatprep.mubr.f32.mxu0 0.0
  %3800 = vmatmul.mubr.f32.gmra.mxu0 %v3667
  %v3801 = vpop.f32.mrf.mxu0
  %v3802 = vadd.f32 %v3704, %v3801
  %v3803 = vpop.f32.mrf.mxu0
  %3804 = vdwg.mxu0
  %v3805 = vmul.f32 %v3772, 0.5
  %v3806 = vmul.f32 %v3777, 0.5
  %v3807 = vmul.f32 %v3782, 0.5
  %v3808 = vmul.f32 %v3787, 0.5
  %v3809 = vmul.f32 %v3792, 0.5
  %v3810 = vmul.f32 %v3797, 0.5
  %v3811 = vmul.f32 %v3802, 0.5
  %v3812 = vmul.f32 %v3772, 0.70710677
  %v3813 = vmul.f32 %v3777, 0.70710677
  %v3814 = vmul.f32 %v3782, 0.70710677
  %v3815 = vmul.f32 %v3787, 0.70710677
  %v3816 = vmul.f32 %v3792, 0.70710677
  %v3817 = vmul.f32 %v3797, 0.70710677
  %v3818 = vmul.f32 %v3802, 0.70710677
  %v3819 = vand.u32 2147483647, %v3812
  %v3820 = vand.u32 2147483647, %v3813
  %v3821 = vand.u32 2147483647, %v3814
  %v3822 = vand.u32 2147483647, %v3815
  %v3823 = vand.u32 2147483647, %v3816
  %v3824 = vand.u32 2147483647, %v3817
  %v3825 = vand.u32 2147483647, %v3818
  %v3826 = vmul.f32 %v3819, 0.3275911
  %v3827 = vmul.f32 %v3820, 0.3275911
  %v3828 = vmul.f32 %v3821, 0.3275911
  %v3829 = vmul.f32 %v3822, 0.3275911
  %v3830 = vmul.f32 %v3823, 0.3275911
  %v3831 = vmul.f32 %v3824, 0.3275911
  %v3832 = vmul.f32 %v3825, 0.3275911
  %v3833 = vadd.f32 %v3826, 1.0
  %v3834 = vadd.f32 %v3827, 1.0
  %v3835 = vadd.f32 %v3828, 1.0
  %v3836 = vadd.f32 %v3829, 1.0
  %v3837 = vadd.f32 %v3830, 1.0
  %v3838 = vadd.f32 %v3831, 1.0
  %v3839 = vadd.f32 %v3832, 1.0
  %v3840 = vrcp.pop %v3833
  %v3841 = vrcp.pop %v3834
  %v3842 = vrcp.pop %v3835
  %v3843 = vrcp.pop %v3836
  %v3844 = vrcp.pop %v3837
  %v3845 = vrcp.pop %v3838
  %v3846 = vrcp.pop %v3839
  %v3847 = vmul.f32 %v3833, %v3840
  %v3848 = vmul.f32 %v3834, %v3841
  %v3849 = vmul.f32 %v3835, %v3842
  %v3850 = vmul.f32 %v3836, %v3843
  %v3851 = vmul.f32 %v3837, %v3844
  %v3852 = vmul.f32 %v3838, %v3845
  %v3853 = vmul.f32 %v3839, %v3846
  %v3854 = vsub.f32 2.0, %v3847
  %v3855 = vsub.f32 2.0, %v3848
  %v3856 = vsub.f32 2.0, %v3849
  %v3857 = vsub.f32 2.0, %v3850
  %v3858 = vsub.f32 2.0, %v3851
  %v3859 = vsub.f32 2.0, %v3852
  %v3860 = vsub.f32 2.0, %v3853
  %v3861 = vmul.f32 %v3840, %v3854
  %v3862 = vmul.f32 %v3841, %v3855
  %v3863 = vmul.f32 %v3842, %v3856
  %v3864 = vmul.f32 %v3843, %v3857
  %v3865 = vmul.f32 %v3844, %v3858
  %v3866 = vmul.f32 %v3845, %v3859
  %v3867 = vmul.f32 %v3846, %v3860
  %v3868 = vmul.f32 %v3861, 1.0614054
  %v3869 = vmul.f32 %v3862, 1.0614054
  %v3870 = vmul.f32 %v3863, 1.0614054
  %v3871 = vmul.f32 %v3864, 1.0614054
  %v3872 = vmul.f32 %v3865, 1.0614054
  %v3873 = vmul.f32 %v3866, 1.0614054
  %v3874 = vmul.f32 %v3867, 1.0614054
  %v3875 = vadd.f32 %v3868, -1.4531521
  %v3876 = vadd.f32 %v3869, -1.4531521
  %v3877 = vadd.f32 %v3870, -1.4531521
  %v3878 = vadd.f32 %v3871, -1.4531521
  %v3879 = vadd.f32 %v3872, -1.4531521
  %v3880 = vadd.f32 %v3873, -1.4531521
  %v3881 = vadd.f32 %v3874, -1.4531521
  %v3882 = vmul.f32 %v3875, %v3861
  %v3883 = vmul.f32 %v3876, %v3862
  %v3884 = vmul.f32 %v3877, %v3863
  %v3885 = vmul.f32 %v3878, %v3864
  %v3886 = vmul.f32 %v3879, %v3865
  %v3887 = vmul.f32 %v3880, %v3866
  %v3888 = vmul.f32 %v3881, %v3867
  %v3889 = vadd.f32 %v3882, 1.4214138
  %v3890 = vadd.f32 %v3883, 1.4214138
  %v3891 = vadd.f32 %v3884, 1.4214138
  %v3892 = vadd.f32 %v3885, 1.4214138
  %v3893 = vadd.f32 %v3886, 1.4214138
  %v3894 = vadd.f32 %v3887, 1.4214138
  %v3895 = vadd.f32 %v3888, 1.4214138
  %v3896 = vmul.f32 %v3889, %v3861
  %v3897 = vmul.f32 %v3890, %v3862
  %v3898 = vmul.f32 %v3891, %v3863
  %v3899 = vmul.f32 %v3892, %v3864
  %v3900 = vmul.f32 %v3893, %v3865
  %v3901 = vmul.f32 %v3894, %v3866
  %v3902 = vmul.f32 %v3895, %v3867
  %v3903 = vadd.f32 %v3896, -0.28449672
  %v3904 = vadd.f32 %v3897, -0.28449672
  %v3905 = vadd.f32 %v3898, -0.28449672
  %v3906 = vadd.f32 %v3899, -0.28449672
  %v3907 = vadd.f32 %v3900, -0.28449672
  %v3908 = vadd.f32 %v3901, -0.28449672
  %v3909 = vadd.f32 %v3902, -0.28449672
  %v3910 = vmul.f32 %v3903, %v3861
  %v3911 = vmul.f32 %v3904, %v3862
  %v3912 = vmul.f32 %v3905, %v3863
  %v3913 = vmul.f32 %v3906, %v3864
  %v3914 = vmul.f32 %v3907, %v3865
  %v3915 = vmul.f32 %v3908, %v3866
  %v3916 = vmul.f32 %v3909, %v3867
  %v3917 = vadd.f32 %v3910, 0.2548296
  %v3918 = vadd.f32 %v3911, 0.2548296
  %v3919 = vadd.f32 %v3912, 0.2548296
  %v3920 = vadd.f32 %v3913, 0.2548296
  %v3921 = vadd.f32 %v3914, 0.2548296
  %v3922 = vadd.f32 %v3915, 0.2548296
  %v3923 = vadd.f32 %v3916, 0.2548296
  %v3924 = vmul.f32 %v3917, %v3861
  %v3925 = vmul.f32 %v3918, %v3862
  %v3926 = vmul.f32 %v3919, %v3863
  %v3927 = vmul.f32 %v3920, %v3864
  %v3928 = vmul.f32 %v3921, %v3865
  %v3929 = vmul.f32 %v3922, %v3866
  %v3930 = vmul.f32 %v3923, %v3867
  %v3931 = vsub.f32 0.0, %v3819
  %v3932 = vsub.f32 0.0, %v3820
  %v3933 = vsub.f32 0.0, %v3821
  %v3934 = vsub.f32 0.0, %v3822
  %v3935 = vsub.f32 0.0, %v3823
  %v3936 = vsub.f32 0.0, %v3824
  %v3937 = vsub.f32 0.0, %v3825
  %v3938 = vmul.f32 %v3931, %v3819
  %v3939 = vmul.f32 %v3932, %v3820
  %v3940 = vmul.f32 %v3933, %v3821
  %v3941 = vmul.f32 %v3934, %v3822
  %v3942 = vmul.f32 %v3935, %v3823
  %v3943 = vmul.f32 %v3936, %v3824
  %v3944 = vmul.f32 %v3937, %v3825
  %v3945 = vmul.f32 %v3938, 1.442695
  %v3946 = vpow.pop %v3945
  %v3947 = vmul.f32 %v3939, 1.442695
  %v3948 = vpow.pop %v3947
  %v3949 = vmul.f32 %v3940, 1.442695
  %v3950 = vpow.pop %v3949
  %v3951 = vmul.f32 %v3941, 1.442695
  %v3952 = vpow.pop %v3951
  %v3953 = vmul.f32 %v3942, 1.442695
  %v3954 = vpow.pop %v3953
  %v3955 = vmul.f32 %v3943, 1.442695
  %v3956 = vpow.pop %v3955
  %v3957 = vmul.f32 %v3944, 1.442695
  %v3958 = vpow.pop %v3957
  %v3959 = vmul.f32 %v3924, %v3946
  %v3960 = vmul.f32 %v3925, %v3948
  %v3961 = vmul.f32 %v3926, %v3950
  %v3962 = vmul.f32 %v3927, %v3952
  %v3963 = vmul.f32 %v3928, %v3954
  %v3964 = vmul.f32 %v3929, %v3956
  %v3965 = vmul.f32 %v3930, %v3958
  %v3966 = vsub.f32 1.0, %v3959
  %v3967 = vsub.f32 1.0, %v3960
  %v3968 = vsub.f32 1.0, %v3961
  %v3969 = vsub.f32 1.0, %v3962
  %v3970 = vsub.f32 1.0, %v3963
  %v3971 = vsub.f32 1.0, %v3964
  %v3972 = vsub.f32 1.0, %v3965
  %vm3973 = vcmp.ge.f32.partialorder %v3812, 0.0
  %vm3974 = vcmp.ge.f32.partialorder %v3813, 0.0
  %vm3975 = vcmp.ge.f32.partialorder %v3814, 0.0
  %vm3976 = vcmp.ge.f32.partialorder %v3815, 0.0
  %vm3977 = vcmp.ge.f32.partialorder %v3816, 0.0
  %vm3978 = vcmp.ge.f32.partialorder %v3817, 0.0
  %vm3979 = vcmp.ge.f32.partialorder %v3818, 0.0
  %v3980 = vsub.f32 0.0, %v3966
  %v3981 = vsub.f32 0.0, %v3967
  %v3982 = vsub.f32 0.0, %v3968
  %v3983 = vsub.f32 0.0, %v3969
  %v3984 = vsub.f32 0.0, %v3970
  %v3985 = vsub.f32 0.0, %v3971
  %v3986 = vsub.f32 0.0, %v3972
  %v3987 = vsel %vm3973, %v3966, %v3980
  %v3988 = vsel %vm3974, %v3967, %v3981
  %v3989 = vsel %vm3975, %v3968, %v3982
  %v3990 = vsel %vm3976, %v3969, %v3983
  %v3991 = vsel %vm3977, %v3970, %v3984
  %v3992 = vsel %vm3978, %v3971, %v3985
  %v3993 = vsel %vm3979, %v3972, %v3986
  %v3994 = vadd.f32 %v3987, 1.0
  %v3995 = vadd.f32 %v3988, 1.0
  %v3996 = vadd.f32 %v3989, 1.0
  %v3997 = vadd.f32 %v3990, 1.0
  %v3998 = vadd.f32 %v3991, 1.0
  %v3999 = vadd.f32 %v3992, 1.0
  %v4000 = vadd.f32 %v3993, 1.0
  %v4001 = vmul.f32 %v3805, %v3994
  %v4002 = vmul.f32 %v3806, %v3995
  %v4003 = vmul.f32 %v3807, %v3996
  %v4004 = vmul.f32 %v3808, %v3997
  %v4005 = vmul.f32 %v3809, %v3998
  %v4006 = vmul.f32 %v3810, %v3999
  %v4007 = vmul.f32 %v3811, %v4000
  %v4008 = vld [vmem:[%s2 + $0x5cf] sm:$0x1]
  %v4009 = vlaneseq
  %v4010 = vshrl.u32 %v4009, 7
  %v4011 = vsub.s32 0, %v4010
  %v4012 = vrot.slane %v4008, %v4011
  %4013 = vmatprep.subr.mxu0 0.0
  %4014 = vmatpush1.msra.mxu0 %v3699
  %4015 = vmatprep.subr.mxu0 0.0
  %4016 = vmatpush1.msra.mxu0 %v3698
  %4017 = vmatprep.subr.mxu0 0.0
  %4018 = vmatpush1.msra.mxu0 %v3697
  %4019 = vmatprep.subr.mxu0 0.0
  %4020 = vmatpush1.msra.mxu0 %v3696
  %4021 = vmatprep.subr.mxu0 0.0
  %4022 = vmatpush1.msra.mxu0 %v3695
  %4023 = vmatprep.subr.mxu0 0.0
  %4024 = vmatpush1.msra.mxu0 %v3694
  %4025 = vmatprep.subr.mxu0 0.0
  %4026 = vmatpush1.msra.mxu0 %v3693
  %4027 = vmatprep.subr.mxu0 0.0
  %4028 = vmatpush1.msra.mxu0 %v3692
  %4029 = vmatprep.subr.mxu0 0.0
  %4030 = vmatpush1.msra.mxu0 %v3691
  %4031 = vmatprep.subr.mxu0 0.0
  %4032 = vmatpush1.msra.mxu0 %v3690
  %4033 = vmatprep.subr.mxu0 0.0
  %4034 = vmatpush1.msra.mxu0 %v3689
  %4035 = vmatprep.subr.mxu0 0.0
  %4036 = vmatpush1.msra.mxu0 %v3688
  %4037 = vmatprep.subr.mxu0 0.0
  %4038 = vmatpush1.msra.mxu0 %v3687
  %4039 = vmatprep.subr.mxu0 0.0
  %4040 = vmatpush1.msra.mxu0 %v3686
  %4041 = vmatprep.subr.mxu0 0.0
  %4042 = vmatpush1.msra.mxu0 %v3685
  %4043 = vmatprep.subr.mxu0 0.0
  %4044 = vmatpush1.msra.mxu0 %v3684
  %4045 = vmatprep.subr.mxu0 0.0
  %4046 = vmatpush2.msra.mxu0 0.0
  %4047 = vmatprep.subr.mxu0 0.0
  %4048 = vmatpush2.msra.mxu0 0.0
  %4049 = vmatprep.subr.mxu0 0.0
  %4050 = vmatpush2.msra.mxu0 0.0
  %4051 = vmatprep.subr.mxu0 0.0
  %4052 = vmatpush2.msra.mxu0 0.0
  %4053 = vmatprep.subr.mxu0 0.0
  %4054 = vmatpush2.msra.mxu0 0.0
  %4055 = vmatprep.subr.mxu0 0.0
  %4056 = vmatpush2.msra.mxu0 0.0
  %4057 = vmatprep.subr.mxu0 0.0
  %4058 = vmatpush2.msra.mxu0 0.0
  %4059 = vmatprep.subr.mxu0 0.0
  %4060 = vmatpush2.msra.mxu0 0.0
  %4061 = vmatprep.subr.mxu0 0.0
  %4062 = vmatpush2.msra.mxu0 0.0
  %4063 = vmatprep.subr.mxu0 0.0
  %4064 = vmatpush2.msra.mxu0 0.0
  %4065 = vmatprep.subr.mxu0 0.0
  %4066 = vmatpush2.msra.mxu0 0.0
  %4067 = vmatprep.subr.mxu0 0.0
  %4068 = vmatpush2.msra.mxu0 0.0
  %4069 = vmatprep.subr.mxu0 0.0
  %4070 = vmatpush2.msra.mxu0 0.0
  %4071 = vmatprep.subr.mxu0 0.0
  %4072 = vmatpush2.msra.mxu0 0.0
  %4073 = vmatprep.subr.mxu0 0.0
  %4074 = vmatpush2.msra.mxu0 0.0
  %4075 = vmatprep.subr.mxu0 0.0
  %4076 = vmatpush2.msra.mxu0 0.0
  %4077 = vmatprep.mubr.f32.mxu0 0.0
  %4078 = vmatmul.mubr.f32.gmra.mxu0 %v4001
  %v4079 = vpop.f32.mrf.mxu0
  %v4080 = vadd.f32 %v4012, %v4079
  %v4081 = vpop.f32.mrf.mxu0
  %4082 = vmatprep.mubr.f32.mxu0 0.0
  %4083 = vmatmul.mubr.f32.gmra.mxu0 %v4002
  %v4084 = vpop.f32.mrf.mxu0
  %v4085 = vadd.f32 %v4012, %v4084
  %v4086 = vpop.f32.mrf.mxu0
  %4087 = vmatprep.mubr.f32.mxu0 0.0
  %4088 = vmatmul.mubr.f32.gmra.mxu0 %v4003
  %v4089 = vpop.f32.mrf.mxu0
  %v4090 = vadd.f32 %v4012, %v4089
  %v4091 = vpop.f32.mrf.mxu0
  %4092 = vmatprep.mubr.f32.mxu0 0.0
  %4093 = vmatmul.mubr.f32.gmra.mxu0 %v4004
  %v4094 = vpop.f32.mrf.mxu0
  %v4095 = vadd.f32 %v4012, %v4094
  %v4096 = vpop.f32.mrf.mxu0
  %4097 = vmatprep.mubr.f32.mxu0 0.0
  %4098 = vmatmul.mubr.f32.gmra.mxu0 %v4005
  %v4099 = vpop.f32.mrf.mxu0
  %v4100 = vadd.f32 %v4012, %v4099
  %v4101 = vpop.f32.mrf.mxu0
  %4102 = vmatprep.mubr.f32.mxu0 0.0
  %4103 = vmatmul.mubr.f32.gmra.mxu0 %v4006
  %v4104 = vpop.f32.mrf.mxu0
  %v4105 = vadd.f32 %v4012, %v4104
  %v4106 = vpop.f32.mrf.mxu0
  %4107 = vmatprep.mubr.f32.mxu0 0.0
  %4108 = vmatmul.mubr.f32.gmra.mxu0 %v4007
  %v4109 = vpop.f32.mrf.mxu0
  %v4110 = vadd.f32 %v4012, %v4109
  %v4111 = vpop.f32.mrf.mxu0
  %4112 = vdwg.mxu0
  %v4113 = vadd.f32 %v4080, %v3367
  %v4114 = vadd.f32 %v4085, %v3368
  %v4115 = vadd.f32 %v4090, %v3369
  %v4116 = vadd.f32 %v4095, %v3370
  %v4117 = vadd.f32 %v4100, %v3371
  %v4118 = vadd.f32 %v4105, %v3372
  %v4119 = vadd.f32 %v4110, %v3373
  %4120 = vmatprep.subr.mxu0 0.0
  %4121 = vmatpush1.msra.mxu0 %v159
  %4122 = vmatprep.subr.mxu0 0.0
  %4123 = vmatpush1.msra.mxu0 %v158
  %4124 = vmatprep.subr.mxu0 0.0
  %4125 = vmatpush1.msra.mxu0 %v157
  %4126 = vmatprep.subr.mxu0 0.0
  %4127 = vmatpush1.msra.mxu0 %v156
  %4128 = vmatprep.subr.mxu0 0.0
  %4129 = vmatpush1.msra.mxu0 %v155
  %4130 = vmatprep.subr.mxu0 0.0
  %4131 = vmatpush1.msra.mxu0 %v154
  %4132 = vmatprep.subr.mxu0 0.0
  %4133 = vmatpush1.msra.mxu0 %v153
  %4134 = vmatprep.subr.mxu0 0.0
  %4135 = vmatpush1.msra.mxu0 %v152
  %4136 = vmatprep.subr.mxu0 0.0
  %4137 = vmatpush1.msra.mxu0 %v151
  %4138 = vmatprep.subr.mxu0 0.0
  %4139 = vmatpush1.msra.mxu0 %v150
  %4140 = vmatprep.subr.mxu0 0.0
  %4141 = vmatpush1.msra.mxu0 %v149
  %4142 = vmatprep.subr.mxu0 0.0
  %4143 = vmatpush1.msra.mxu0 %v148
  %4144 = vmatprep.subr.mxu0 0.0
  %4145 = vmatpush1.msra.mxu0 %v147
  %4146 = vmatprep.subr.mxu0 0.0
  %4147 = vmatpush1.msra.mxu0 %v146
  %4148 = vmatprep.subr.mxu0 0.0
  %4149 = vmatpush1.msra.mxu0 %v145
  %4150 = vmatprep.subr.mxu0 0.0
  %4151 = vmatpush1.msra.mxu0 %v144
  %4152 = vmatprep.subr.mxu0 0.0
  %4153 = vmatpush2.msra.mxu0 0.0
  %4154 = vmatprep.subr.mxu0 0.0
  %4155 = vmatpush2.msra.mxu0 0.0
  %4156 = vmatprep.subr.mxu0 0.0
  %4157 = vmatpush2.msra.mxu0 0.0
  %4158 = vmatprep.subr.mxu0 0.0
  %4159 = vmatpush2.msra.mxu0 0.0
  %4160 = vmatprep.subr.mxu0 0.0
  %4161 = vmatpush2.msra.mxu0 0.0
  %4162 = vmatprep.subr.mxu0 0.0
  %4163 = vmatpush2.msra.mxu0 0.0
  %4164 = vmatprep.subr.mxu0 0.0
  %4165 = vmatpush2.msra.mxu0 0.0
  %4166 = vmatprep.subr.mxu0 0.0
  %4167 = vmatpush2.msra.mxu0 0.0
  %4168 = vmatprep.subr.mxu0 0.0
  %4169 = vmatpush2.msra.mxu0 0.0
  %4170 = vmatprep.subr.mxu0 0.0
  %4171 = vmatpush2.msra.mxu0 0.0
  %4172 = vmatprep.subr.mxu0 0.0
  %4173 = vmatpush2.msra.mxu0 0.0
  %4174 = vmatprep.subr.mxu0 0.0
  %4175 = vmatpush2.msra.mxu0 0.0
  %4176 = vmatprep.subr.mxu0 0.0
  %4177 = vmatpush2.msra.mxu0 0.0
  %4178 = vmatprep.subr.mxu0 0.0
  %4179 = vmatpush2.msra.mxu0 0.0
  %4180 = vmatprep.subr.mxu0 0.0
  %4181 = vmatpush2.msra.mxu0 0.0
  %4182 = vmatprep.subr.mxu0 0.0
  %4183 = vmatpush2.msra.mxu0 0.0
  %4184 = vmatprep.mubr.f32.mxu0 0.0
  %4185 = vmatmul.mubr.f32.gmra.mxu0 %v4113
  %v4186 = vpop.f32.mrf.mxu0
  %v4187 = vadd.f32 0.0, %v4186
  %v4188 = vpop.f32.mrf.mxu0
  %4189 = vmatprep.mubr.f32.mxu0 0.0
  %4190 = vmatmul.mubr.f32.gmra.mxu0 %v4114
  %v4191 = vpop.f32.mrf.mxu0
  %v4192 = vadd.f32 0.0, %v4191
  %v4193 = vpop.f32.mrf.mxu0
  %4194 = vmatprep.mubr.f32.mxu0 0.0
  %4195 = vmatmul.mubr.f32.gmra.mxu0 %v4115
  %v4196 = vpop.f32.mrf.mxu0
  %v4197 = vadd.f32 0.0, %v4196
  %v4198 = vpop.f32.mrf.mxu0
  %4199 = vmatprep.mubr.f32.mxu0 0.0
  %4200 = vmatmul.mubr.f32.gmra.mxu0 %v4116
  %v4201 = vpop.f32.mrf.mxu0
  %v4202 = vadd.f32 0.0, %v4201
  %v4203 = vpop.f32.mrf.mxu0
  %4204 = vmatprep.mubr.f32.mxu0 0.0
  %4205 = vmatmul.mubr.f32.gmra.mxu0 %v4117
  %v4206 = vpop.f32.mrf.mxu0
  %v4207 = vadd.f32 0.0, %v4206
  %v4208 = vpop.f32.mrf.mxu0
  %4209 = vmatprep.mubr.f32.mxu0 0.0
  %4210 = vmatmul.mubr.f32.gmra.mxu0 %v4118
  %v4211 = vpop.f32.mrf.mxu0
  %v4212 = vadd.f32 0.0, %v4211
  %v4213 = vpop.f32.mrf.mxu0
  %4214 = vmatprep.mubr.f32.mxu0 0.0
  %4215 = vmatmul.mubr.f32.gmra.mxu0 %v4119
  %v4216 = vpop.f32.mrf.mxu0
  %v4217 = vadd.f32 0.0, %v4216
  %v4218 = vpop.f32.mrf.mxu0
  %4219 = vdwg.mxu0
  %v4220 = vmul.f32 %v4113, %v4113
  %v4221 = vmul.f32 %v4114, %v4114
  %v4222 = vmul.f32 %v4115, %v4115
  %v4223 = vmul.f32 %v4116, %v4116
  %v4224 = vmul.f32 %v4117, %v4117
  %v4225 = vmul.f32 %v4118, %v4118
  %v4226 = vmul.f32 %v4119, %v4119
  %4227 = vmatprep.subr.mxu0 0.0
  %4228 = vmatpush1.msra.mxu0 %v159
  %4229 = vmatprep.subr.mxu0 0.0
  %4230 = vmatpush1.msra.mxu0 %v158
  %4231 = vmatprep.subr.mxu0 0.0
  %4232 = vmatpush1.msra.mxu0 %v157
  %4233 = vmatprep.subr.mxu0 0.0
  %4234 = vmatpush1.msra.mxu0 %v156
  %4235 = vmatprep.subr.mxu0 0.0
  %4236 = vmatpush1.msra.mxu0 %v155
  %4237 = vmatprep.subr.mxu0 0.0
  %4238 = vmatpush1.msra.mxu0 %v154
  %4239 = vmatprep.subr.mxu0 0.0
  %4240 = vmatpush1.msra.mxu0 %v153
  %4241 = vmatprep.subr.mxu0 0.0
  %4242 = vmatpush1.msra.mxu0 %v152
  %4243 = vmatprep.subr.mxu0 0.0
  %4244 = vmatpush1.msra.mxu0 %v151
  %4245 = vmatprep.subr.mxu0 0.0
  %4246 = vmatpush1.msra.mxu0 %v150
  %4247 = vmatprep.subr.mxu0 0.0
  %4248 = vmatpush1.msra.mxu0 %v149
  %4249 = vmatprep.subr.mxu0 0.0
  %4250 = vmatpush1.msra.mxu0 %v148
  %4251 = vmatprep.subr.mxu0 0.0
  %4252 = vmatpush1.msra.mxu0 %v147
  %4253 = vmatprep.subr.mxu0 0.0
  %4254 = vmatpush1.msra.mxu0 %v146
  %4255 = vmatprep.subr.mxu0 0.0
  %4256 = vmatpush1.msra.mxu0 %v145
  %4257 = vmatprep.subr.mxu0 0.0
  %4258 = vmatpush1.msra.mxu0 %v144
  %4259 = vmatprep.subr.mxu0 0.0
  %4260 = vmatpush2.msra.mxu0 0.0
  %4261 = vmatprep.subr.mxu0 0.0
  %4262 = vmatpush2.msra.mxu0 0.0
  %4263 = vmatprep.subr.mxu0 0.0
  %4264 = vmatpush2.msra.mxu0 0.0
  %4265 = vmatprep.subr.mxu0 0.0
  %4266 = vmatpush2.msra.mxu0 0.0
  %4267 = vmatprep.subr.mxu0 0.0
  %4268 = vmatpush2.msra.mxu0 0.0
  %4269 = vmatprep.subr.mxu0 0.0
  %4270 = vmatpush2.msra.mxu0 0.0
  %4271 = vmatprep.subr.mxu0 0.0
  %4272 = vmatpush2.msra.mxu0 0.0
  %4273 = vmatprep.subr.mxu0 0.0
  %4274 = vmatpush2.msra.mxu0 0.0
  %4275 = vmatprep.subr.mxu0 0.0
  %4276 = vmatpush2.msra.mxu0 0.0
  %4277 = vmatprep.subr.mxu0 0.0
  %4278 = vmatpush2.msra.mxu0 0.0
  %4279 = vmatprep.subr.mxu0 0.0
  %4280 = vmatpush2.msra.mxu0 0.0
  %4281 = vmatprep.subr.mxu0 0.0
  %4282 = vmatpush2.msra.mxu0 0.0
  %4283 = vmatprep.subr.mxu0 0.0
  %4284 = vmatpush2.msra.mxu0 0.0
  %4285 = vmatprep.subr.mxu0 0.0
  %4286 = vmatpush2.msra.mxu0 0.0
  %4287 = vmatprep.subr.mxu0 0.0
  %4288 = vmatpush2.msra.mxu0 0.0
  %4289 = vmatprep.subr.mxu0 0.0
  %4290 = vmatpush2.msra.mxu0 0.0
  %4291 = vmatprep.mubr.f32.mxu0 0.0
  %4292 = vmatmul.mubr.f32.gmra.mxu0 %v4220
  %v4293 = vpop.f32.mrf.mxu0
  %v4294 = vadd.f32 0.0, %v4293
  %v4295 = vpop.f32.mrf.mxu0
  %4296 = vmatprep.mubr.f32.mxu0 0.0
  %4297 = vmatmul.mubr.f32.gmra.mxu0 %v4221
  %v4298 = vpop.f32.mrf.mxu0
  %v4299 = vadd.f32 0.0, %v4298
  %v4300 = vpop.f32.mrf.mxu0
  %4301 = vmatprep.mubr.f32.mxu0 0.0
  %4302 = vmatmul.mubr.f32.gmra.mxu0 %v4222
  %v4303 = vpop.f32.mrf.mxu0
  %v4304 = vadd.f32 0.0, %v4303
  %v4305 = vpop.f32.mrf.mxu0
  %4306 = vmatprep.mubr.f32.mxu0 0.0
  %4307 = vmatmul.mubr.f32.gmra.mxu0 %v4223
  %v4308 = vpop.f32.mrf.mxu0
  %v4309 = vadd.f32 0.0, %v4308
  %v4310 = vpop.f32.mrf.mxu0
  %4311 = vmatprep.mubr.f32.mxu0 0.0
  %4312 = vmatmul.mubr.f32.gmra.mxu0 %v4224
  %v4313 = vpop.f32.mrf.mxu0
  %v4314 = vadd.f32 0.0, %v4313
  %v4315 = vpop.f32.mrf.mxu0
  %4316 = vmatprep.mubr.f32.mxu0 0.0
  %4317 = vmatmul.mubr.f32.gmra.mxu0 %v4225
  %v4318 = vpop.f32.mrf.mxu0
  %v4319 = vadd.f32 0.0, %v4318
  %v4320 = vpop.f32.mrf.mxu0
  %4321 = vmatprep.mubr.f32.mxu0 0.0
  %4322 = vmatmul.mubr.f32.gmra.mxu0 %v4226
  %v4323 = vpop.f32.mrf.mxu0
  %v4324 = vadd.f32 0.0, %v4323
  %v4325 = vpop.f32.mrf.mxu0
  %4326 = vdwg.mxu0
  %v4327 = vmul.f32 %v4187, 0.015625
  %v4328 = vmul.f32 %v4192, 0.015625
  %v4329 = vmul.f32 %v4197, 0.015625
  %v4330 = vmul.f32 %v4202, 0.015625
  %v4331 = vmul.f32 %v4207, 0.015625
  %v4332 = vmul.f32 %v4212, 0.015625
  %v4333 = vmul.f32 %v4217, 0.015625
  %v4334 = vmul.f32 %v4294, 0.015625
  %v4335 = vmul.f32 %v4299, 0.015625
  %v4336 = vmul.f32 %v4304, 0.015625
  %v4337 = vmul.f32 %v4309, 0.015625
  %v4338 = vmul.f32 %v4314, 0.015625
  %v4339 = vmul.f32 %v4319, 0.015625
  %v4340 = vmul.f32 %v4324, 0.015625
  %v4341 = vmul.f32 %v4327, %v4327
  %v4342 = vmul.f32 %v4328, %v4328
  %v4343 = vmul.f32 %v4329, %v4329
  %v4344 = vmul.f32 %v4330, %v4330
  %v4345 = vmul.f32 %v4331, %v4331
  %v4346 = vmul.f32 %v4332, %v4332
  %v4347 = vmul.f32 %v4333, %v4333
  %v4348 = vsub.f32 %v4334, %v4341
  %v4349 = vsub.f32 %v4335, %v4342
  %v4350 = vsub.f32 %v4336, %v4343
  %v4351 = vsub.f32 %v4337, %v4344
  %v4352 = vsub.f32 %v4338, %v4345
  %v4353 = vsub.f32 %v4339, %v4346
  %v4354 = vsub.f32 %v4340, %v4347
  %v4355 = vmax.f32 %v4348, 0.0
  %v4356 = vmax.f32 %v4349, 0.0
  %v4357 = vmax.f32 %v4350, 0.0
  %v4358 = vmax.f32 %v4351, 0.0
  %v4359 = vmax.f32 %v4352, 0.0
  %v4360 = vmax.f32 %v4353, 0.0
  %v4361 = vmax.f32 %v4354, 0.0
  %v4362 = vsub.f32 %v4113, %v4327
  %v4363 = vsub.f32 %v4114, %v4328
  %v4364 = vsub.f32 %v4115, %v4329
  %v4365 = vsub.f32 %v4116, %v4330
  %v4366 = vsub.f32 %v4117, %v4331
  %v4367 = vsub.f32 %v4118, %v4332
  %v4368 = vsub.f32 %v4119, %v4333
  %v4369 = vadd.f32 %v4355, 1e-05
  %v4370 = vadd.f32 %v4356, 1e-05
  %v4371 = vadd.f32 %v4357, 1e-05
  %v4372 = vadd.f32 %v4358, 1e-05
  %v4373 = vadd.f32 %v4359, 1e-05
  %v4374 = vadd.f32 %v4360, 1e-05
  %v4375 = vadd.f32 %v4361, 1e-05
  %v4376 = vrsqrt.pop %v4369
  %v4377 = vrsqrt.pop %v4370
  %v4378 = vrsqrt.pop %v4371
  %v4379 = vrsqrt.pop %v4372
  %v4380 = vrsqrt.pop %v4373
  %v4381 = vrsqrt.pop %v4374
  %v4382 = vrsqrt.pop %v4375
  %v4383 = vmul.f32 %v4362, %v4376
  %v4384 = vmul.f32 %v4363, %v4377
  %v4385 = vmul.f32 %v4364, %v4378
  %v4386 = vmul.f32 %v4365, %v4379
  %v4387 = vmul.f32 %v4366, %v4380
  %v4388 = vmul.f32 %v4367, %v4381
  %v4389 = vmul.f32 %v4368, %v4382
  %v4390 = vld [vmem:[%s2 + $0x5d0] sm:$0x1]
  %v4391 = vlaneseq
  %v4392 = vshrl.u32 %v4391, 7
  %v4393 = vsub.s32 0, %v4392
  %v4394 = vrot.slane %v4390, %v4393
  %v4395 = vmul.f32 %v4383, %v4394
  %v4396 = vmul.f32 %v4384, %v4394
  %v4397 = vmul.f32 %v4385, %v4394
  %v4398 = vmul.f32 %v4386, %v4394
  %v4399 = vmul.f32 %v4387, %v4394
  %v4400 = vmul.f32 %v4388, %v4394
  %v4401 = vmul.f32 %v4389, %v4394
  %v4402 = vld [vmem:[%s2 + $0x5d1] sm:$0x1]
  %v4403 = vlaneseq
  %v4404 = vshrl.u32 %v4403, 7
  %v4405 = vsub.s32 0, %v4404
  %v4406 = vrot.slane %v4402, %v4405
  %v4407 = vadd.f32 %v4395, %v4406
  %v4408 = vadd.f32 %v4396, %v4406
  %v4409 = vadd.f32 %v4397, %v4406
  %v4410 = vadd.f32 %v4398, %v4406
  %v4411 = vadd.f32 %v4399, %v4406
  %v4412 = vadd.f32 %v4400, %v4406
  %v4413 = vadd.f32 %v4401, %v4406
  %v4414 = vlaneseq
  %v4415 = vshrl.u32 %v4414, 7
  %v4416 = vadd.s32 %v4415, 8
  %v4417 = vadd.s32 %v4415, 16
  %v4418 = vadd.s32 %v4415, 24
  %v4419 = vadd.s32 %v4415, 32
  %v4420 = vadd.s32 %v4415, 40
  %v4421 = vadd.s32 %v4415, 48
  %vm4422 = vcmp.lt.s32.totalorder %v4415, 50
  %vm4423 = vcmp.lt.s32.totalorder %v4416, 50
  %vm4424 = vcmp.lt.s32.totalorder %v4417, 50
  %vm4425 = vcmp.lt.s32.totalorder %v4418, 50
  %vm4426 = vcmp.lt.s32.totalorder %v4419, 50
  %vm4427 = vcmp.lt.s32.totalorder %v4420, 50
  %vm4428 = vcmp.lt.s32.totalorder %v4421, 50
  %v4429 = vsel %vm4422, %v4407, 0.0
  %v4430 = vsel %vm4423, %v4408, 0.0
  %v4431 = vsel %vm4424, %v4409, 0.0
  %v4432 = vsel %vm4425, %v4410, 0.0
  %v4433 = vsel %vm4426, %v4411, 0.0
  %v4434 = vsel %vm4427, %v4412, 0.0
  %v4435 = vsel %vm4428, %v4413, 0.0
  %v4436 = vadd.f32 %v4429, %v4430
  %v4437 = vadd.f32 %v4436, %v4431
  %v4438 = vadd.f32 %v4437, %v4432
  %v4439 = vadd.f32 %v4438, %v4433
  %v4440 = vadd.f32 %v4439, %v4434
  %v4441 = vadd.f32 %v4440, %v4435
  %v4442 = vrot.slane %v4441, 4
  %v4443 = vadd.f32 %v4441, %v4442
  %v4444 = vrot.slane %v4443, 2
  %v4445 = vadd.f32 %v4443, %v4444
  %v4446 = vrot.slane %v4445, 1
  %v4447 = vadd.f32 %v4445, %v4446
  %v4448 = vmul.f32 %v4447, 0.02
  %v4449 = vld [vmem:[%s2 + $0x338] sm:$0xff]
  %v4450 = vld [vmem:[%s2 + $0x340] sm:$0xff]
  %v4451 = vld [vmem:[%s2 + $0x348] sm:$0xff]
  %v4452 = vld [vmem:[%s2 + $0x350] sm:$0xff]
  %v4453 = vld [vmem:[%s2 + $0x358] sm:$0xff]
  %v4454 = vld [vmem:[%s2 + $0x360] sm:$0xff]
  %v4455 = vld [vmem:[%s2 + $0x368] sm:$0xff]
  %v4456 = vld [vmem:[%s2 + $0x370] sm:$0xff]
  %v4457 = vld [vmem:[%s2 + $0x378] sm:$0xff]
  %v4458 = vld [vmem:[%s2 + $0x380] sm:$0xff]
  %v4459 = vld [vmem:[%s2 + $0x388] sm:$0xff]
  %v4460 = vld [vmem:[%s2 + $0x390] sm:$0xff]
  %v4461 = vld [vmem:[%s2 + $0x398] sm:$0xff]
  %v4462 = vld [vmem:[%s2 + $0x3a0] sm:$0xff]
  %v4463 = vld [vmem:[%s2 + $0x3a8] sm:$0xff]
  %v4464 = vld [vmem:[%s2 + $0x3b0] sm:$0xff]
  %v4465 = vld [vmem:[%s2 + $0x5d2] sm:$0x1]
  %v4466 = vlaneseq
  %v4467 = vshrl.u32 %v4466, 7
  %v4468 = vsub.s32 0, %v4467
  %v4469 = vrot.slane %v4465, %v4468
  %4470 = vmatprep.subr.mxu0 0.0
  %4471 = vmatpush1.msra.mxu0 %v4464
  %4472 = vmatprep.subr.mxu0 0.0
  %4473 = vmatpush1.msra.mxu0 %v4463
  %4474 = vmatprep.subr.mxu0 0.0
  %4475 = vmatpush1.msra.mxu0 %v4462
  %4476 = vmatprep.subr.mxu0 0.0
  %4477 = vmatpush1.msra.mxu0 %v4461
  %4478 = vmatprep.subr.mxu0 0.0
  %4479 = vmatpush1.msra.mxu0 %v4460
  %4480 = vmatprep.subr.mxu0 0.0
  %4481 = vmatpush1.msra.mxu0 %v4459
  %4482 = vmatprep.subr.mxu0 0.0
  %4483 = vmatpush1.msra.mxu0 %v4458
  %4484 = vmatprep.subr.mxu0 0.0
  %4485 = vmatpush1.msra.mxu0 %v4457
  %4486 = vmatprep.subr.mxu0 0.0
  %4487 = vmatpush1.msra.mxu0 %v4456
  %4488 = vmatprep.subr.mxu0 0.0
  %4489 = vmatpush1.msra.mxu0 %v4455
  %4490 = vmatprep.subr.mxu0 0.0
  %4491 = vmatpush1.msra.mxu0 %v4454
  %4492 = vmatprep.subr.mxu0 0.0
  %4493 = vmatpush1.msra.mxu0 %v4453
  %4494 = vmatprep.subr.mxu0 0.0
  %4495 = vmatpush1.msra.mxu0 %v4452
  %4496 = vmatprep.subr.mxu0 0.0
  %4497 = vmatpush1.msra.mxu0 %v4451
  %4498 = vmatprep.subr.mxu0 0.0
  %4499 = vmatpush1.msra.mxu0 %v4450
  %4500 = vmatprep.subr.mxu0 0.0
  %4501 = vmatpush1.msra.mxu0 %v4449
  %4502 = vmatprep.subr.mxu0 0.0
  %4503 = vmatpush2.msra.mxu0 0.0
  %4504 = vmatprep.subr.mxu0 0.0
  %4505 = vmatpush2.msra.mxu0 0.0
  %4506 = vmatprep.subr.mxu0 0.0
  %4507 = vmatpush2.msra.mxu0 0.0
  %4508 = vmatprep.subr.mxu0 0.0
  %4509 = vmatpush2.msra.mxu0 0.0
  %4510 = vmatprep.subr.mxu0 0.0
  %4511 = vmatpush2.msra.mxu0 0.0
  %4512 = vmatprep.subr.mxu0 0.0
  %4513 = vmatpush2.msra.mxu0 0.0
  %4514 = vmatprep.subr.mxu0 0.0
  %4515 = vmatpush2.msra.mxu0 0.0
  %4516 = vmatprep.subr.mxu0 0.0
  %4517 = vmatpush2.msra.mxu0 0.0
  %4518 = vmatprep.subr.mxu0 0.0
  %4519 = vmatpush2.msra.mxu0 0.0
  %4520 = vmatprep.subr.mxu0 0.0
  %4521 = vmatpush2.msra.mxu0 0.0
  %4522 = vmatprep.subr.mxu0 0.0
  %4523 = vmatpush2.msra.mxu0 0.0
  %4524 = vmatprep.subr.mxu0 0.0
  %4525 = vmatpush2.msra.mxu0 0.0
  %4526 = vmatprep.subr.mxu0 0.0
  %4527 = vmatpush2.msra.mxu0 0.0
  %4528 = vmatprep.subr.mxu0 0.0
  %4529 = vmatpush2.msra.mxu0 0.0
  %4530 = vmatprep.subr.mxu0 0.0
  %4531 = vmatpush2.msra.mxu0 0.0
  %4532 = vmatprep.subr.mxu0 0.0
  %4533 = vmatpush2.msra.mxu0 0.0
  %4534 = vmatprep.mubr.f32.mxu0 0.0
  %4535 = vmatmul.mubr.f32.gmra.mxu0 %v4448
  %v4536 = vpop.f32.mrf.mxu0
  %v4537 = vadd.f32 %v4469, %v4536
  %v4538 = vpop.f32.mrf.mxu0
  %4539 = vdwg.mxu0
  %v4540 = vmul.f32 %v4537, 0.5
  %v4541 = vmul.f32 %v4537, 0.70710677
  %v4542 = vand.u32 2147483647, %v4541
  %v4543 = vmul.f32 %v4542, 0.3275911
  %v4544 = vadd.f32 %v4543, 1.0
  %v4545 = vrcp.pop %v4544
  %v4546 = vmul.f32 %v4544, %v4545
  %v4547 = vsub.f32 2.0, %v4546
  %v4548 = vmul.f32 %v4545, %v4547
  %v4549 = vmul.f32 %v4548, 1.0614054
  %v4550 = vadd.f32 %v4549, -1.4531521
  %v4551 = vmul.f32 %v4550, %v4548
  %v4552 = vadd.f32 %v4551, 1.4214138
  %v4553 = vmul.f32 %v4552, %v4548
  %v4554 = vadd.f32 %v4553, -0.28449672
  %v4555 = vmul.f32 %v4554, %v4548
  %v4556 = vadd.f32 %v4555, 0.2548296
  %v4557 = vmul.f32 %v4556, %v4548
  %v4558 = vsub.f32 0.0, %v4542
  %v4559 = vmul.f32 %v4558, %v4542
  %v4560 = vmul.f32 %v4559, 1.442695
  %v4561 = vpow.pop %v4560
  %v4562 = vmul.f32 %v4557, %v4561
  %v4563 = vsub.f32 1.0, %v4562
  %vm4564 = vcmp.ge.f32.partialorder %v4541, 0.0
  %v4565 = vsub.f32 0.0, %v4563
  %v4566 = vsel %vm4564, %v4563, %v4565
  %v4567 = vadd.f32 %v4566, 1.0
  %v4568 = vmul.f32 %v4540, %v4567
  %v4569 = vld [vmem:[%s2 + $0x3b8] sm:$0xff]
  %v4570 = vld [vmem:[%s2 + $0x3c0] sm:$0xff]
  %v4571 = vld [vmem:[%s2 + $0x3c8] sm:$0xff]
  %v4572 = vld [vmem:[%s2 + $0x3d0] sm:$0xff]
  %v4573 = vld [vmem:[%s2 + $0x3d8] sm:$0xff]
  %v4574 = vld [vmem:[%s2 + $0x3e0] sm:$0xff]
  %v4575 = vld [vmem:[%s2 + $0x3e8] sm:$0xff]
  %v4576 = vld [vmem:[%s2 + $0x3f0] sm:$0xff]
  %v4577 = vld [vmem:[%s2 + $0x3f8] sm:$0xff]
  %v4578 = vld [vmem:[%s2 + $0x400] sm:$0xff]
  %v4579 = vld [vmem:[%s2 + $0x408] sm:$0xff]
  %v4580 = vld [vmem:[%s2 + $0x410] sm:$0xff]
  %v4581 = vld [vmem:[%s2 + $0x418] sm:$0xff]
  %v4582 = vld [vmem:[%s2 + $0x420] sm:$0xff]
  %v4583 = vld [vmem:[%s2 + $0x428] sm:$0xff]
  %v4584 = vld [vmem:[%s2 + $0x430] sm:$0xff]
  %v4585 = vld [vmem:[%s2 + $0x5d3] sm:$0x1]
  %v4586 = vlaneseq
  %v4587 = vshrl.u32 %v4586, 7
  %v4588 = vsub.s32 0, %v4587
  %v4589 = vrot.slane %v4585, %v4588
  %4590 = vmatprep.subr.mxu0 0.0
  %4591 = vmatpush1.msra.mxu0 %v4584
  %4592 = vmatprep.subr.mxu0 0.0
  %4593 = vmatpush1.msra.mxu0 %v4583
  %4594 = vmatprep.subr.mxu0 0.0
  %4595 = vmatpush1.msra.mxu0 %v4582
  %4596 = vmatprep.subr.mxu0 0.0
  %4597 = vmatpush1.msra.mxu0 %v4581
  %4598 = vmatprep.subr.mxu0 0.0
  %4599 = vmatpush1.msra.mxu0 %v4580
  %4600 = vmatprep.subr.mxu0 0.0
  %4601 = vmatpush1.msra.mxu0 %v4579
  %4602 = vmatprep.subr.mxu0 0.0
  %4603 = vmatpush1.msra.mxu0 %v4578
  %4604 = vmatprep.subr.mxu0 0.0
  %4605 = vmatpush1.msra.mxu0 %v4577
  %4606 = vmatprep.subr.mxu0 0.0
  %4607 = vmatpush1.msra.mxu0 %v4576
  %4608 = vmatprep.subr.mxu0 0.0
  %4609 = vmatpush1.msra.mxu0 %v4575
  %4610 = vmatprep.subr.mxu0 0.0
  %4611 = vmatpush1.msra.mxu0 %v4574
  %4612 = vmatprep.subr.mxu0 0.0
  %4613 = vmatpush1.msra.mxu0 %v4573
  %4614 = vmatprep.subr.mxu0 0.0
  %4615 = vmatpush1.msra.mxu0 %v4572
  %4616 = vmatprep.subr.mxu0 0.0
  %4617 = vmatpush1.msra.mxu0 %v4571
  %4618 = vmatprep.subr.mxu0 0.0
  %4619 = vmatpush1.msra.mxu0 %v4570
  %4620 = vmatprep.subr.mxu0 0.0
  %4621 = vmatpush1.msra.mxu0 %v4569
  %4622 = vmatprep.subr.mxu0 0.0
  %4623 = vmatpush2.msra.mxu0 0.0
  %4624 = vmatprep.subr.mxu0 0.0
  %4625 = vmatpush2.msra.mxu0 0.0
  %4626 = vmatprep.subr.mxu0 0.0
  %4627 = vmatpush2.msra.mxu0 0.0
  %4628 = vmatprep.subr.mxu0 0.0
  %4629 = vmatpush2.msra.mxu0 0.0
  %4630 = vmatprep.subr.mxu0 0.0
  %4631 = vmatpush2.msra.mxu0 0.0
  %4632 = vmatprep.subr.mxu0 0.0
  %4633 = vmatpush2.msra.mxu0 0.0
  %4634 = vmatprep.subr.mxu0 0.0
  %4635 = vmatpush2.msra.mxu0 0.0
  %4636 = vmatprep.subr.mxu0 0.0
  %4637 = vmatpush2.msra.mxu0 0.0
  %4638 = vmatprep.subr.mxu0 0.0
  %4639 = vmatpush2.msra.mxu0 0.0
  %4640 = vmatprep.subr.mxu0 0.0
  %4641 = vmatpush2.msra.mxu0 0.0
  %4642 = vmatprep.subr.mxu0 0.0
  %4643 = vmatpush2.msra.mxu0 0.0
  %4644 = vmatprep.subr.mxu0 0.0
  %4645 = vmatpush2.msra.mxu0 0.0
  %4646 = vmatprep.subr.mxu0 0.0
  %4647 = vmatpush2.msra.mxu0 0.0
  %4648 = vmatprep.subr.mxu0 0.0
  %4649 = vmatpush2.msra.mxu0 0.0
  %4650 = vmatprep.subr.mxu0 0.0
  %4651 = vmatpush2.msra.mxu0 0.0
  %4652 = vmatprep.subr.mxu0 0.0
  %4653 = vmatpush2.msra.mxu0 0.0
  %4654 = vmatprep.mubr.f32.mxu0 0.0
  %4655 = vmatmul.mubr.f32.gmra.mxu0 %v4568
  %v4656 = vpop.f32.mrf.mxu0
  %v4657 = vadd.f32 %v4589, %v4656
  %v4658 = vpop.f32.mrf.mxu0
  %4659 = vdwg.mxu0
  %4660 = vmax.xlane.f32.xlu0 %v4657
  %v4661 = vpop.xlane.xlu0 %4660
  %v4662 = vsub.f32 %v4657, %v4661
  %v4663 = vmul.f32 %v4662, 1.442695
  %v4664 = vpow.pop %v4663
  %4665 = vmatprep.subr.mxu0 0.0
  %4666 = vmatpush1.msra.mxu0 %v159
  %4667 = vmatprep.subr.mxu0 0.0
  %4668 = vmatpush1.msra.mxu0 %v158
  %4669 = vmatprep.subr.mxu0 0.0
  %4670 = vmatpush1.msra.mxu0 %v157
  %4671 = vmatprep.subr.mxu0 0.0
  %4672 = vmatpush1.msra.mxu0 %v156
  %4673 = vmatprep.subr.mxu0 0.0
  %4674 = vmatpush1.msra.mxu0 %v155
  %4675 = vmatprep.subr.mxu0 0.0
  %4676 = vmatpush1.msra.mxu0 %v154
  %4677 = vmatprep.subr.mxu0 0.0
  %4678 = vmatpush1.msra.mxu0 %v153
  %4679 = vmatprep.subr.mxu0 0.0
  %4680 = vmatpush1.msra.mxu0 %v152
  %4681 = vmatprep.subr.mxu0 0.0
  %4682 = vmatpush1.msra.mxu0 %v151
  %4683 = vmatprep.subr.mxu0 0.0
  %4684 = vmatpush1.msra.mxu0 %v150
  %4685 = vmatprep.subr.mxu0 0.0
  %4686 = vmatpush1.msra.mxu0 %v149
  %4687 = vmatprep.subr.mxu0 0.0
  %4688 = vmatpush1.msra.mxu0 %v148
  %4689 = vmatprep.subr.mxu0 0.0
  %4690 = vmatpush1.msra.mxu0 %v147
  %4691 = vmatprep.subr.mxu0 0.0
  %4692 = vmatpush1.msra.mxu0 %v146
  %4693 = vmatprep.subr.mxu0 0.0
  %4694 = vmatpush1.msra.mxu0 %v145
  %4695 = vmatprep.subr.mxu0 0.0
  %4696 = vmatpush1.msra.mxu0 %v144
  %4697 = vmatprep.subr.mxu0 0.0
  %4698 = vmatpush2.msra.mxu0 0.0
  %4699 = vmatprep.subr.mxu0 0.0
  %4700 = vmatpush2.msra.mxu0 0.0
  %4701 = vmatprep.subr.mxu0 0.0
  %4702 = vmatpush2.msra.mxu0 0.0
  %4703 = vmatprep.subr.mxu0 0.0
  %4704 = vmatpush2.msra.mxu0 0.0
  %4705 = vmatprep.subr.mxu0 0.0
  %4706 = vmatpush2.msra.mxu0 0.0
  %4707 = vmatprep.subr.mxu0 0.0
  %4708 = vmatpush2.msra.mxu0 0.0
  %4709 = vmatprep.subr.mxu0 0.0
  %4710 = vmatpush2.msra.mxu0 0.0
  %4711 = vmatprep.subr.mxu0 0.0
  %4712 = vmatpush2.msra.mxu0 0.0
  %4713 = vmatprep.subr.mxu0 0.0
  %4714 = vmatpush2.msra.mxu0 0.0
  %4715 = vmatprep.subr.mxu0 0.0
  %4716 = vmatpush2.msra.mxu0 0.0
  %4717 = vmatprep.subr.mxu0 0.0
  %4718 = vmatpush2.msra.mxu0 0.0
  %4719 = vmatprep.subr.mxu0 0.0
  %4720 = vmatpush2.msra.mxu0 0.0
  %4721 = vmatprep.subr.mxu0 0.0
  %4722 = vmatpush2.msra.mxu0 0.0
  %4723 = vmatprep.subr.mxu0 0.0
  %4724 = vmatpush2.msra.mxu0 0.0
  %4725 = vmatprep.subr.mxu0 0.0
  %4726 = vmatpush2.msra.mxu0 0.0
  %4727 = vmatprep.subr.mxu0 0.0
  %4728 = vmatpush2.msra.mxu0 0.0
  %4729 = vmatprep.mubr.f32.mxu0 0.0
  %4730 = vmatmul.mubr.f32.gmra.mxu0 %v4664
  %v4731 = vpop.f32.mrf.mxu0
  %v4732 = vadd.f32 0.0, %v4731
  %v4733 = vpop.f32.mrf.mxu0
  %4734 = vdwg.mxu0
  %v4735 = vrcp.pop %v4732
  %v4736 = vmul.f32 %v4664, %v4735
  %4737 = vst [vmem:[%s3] sm:$0xff] %v4736
  // Predicated region
  $region14: #{vit_forward.1} parent=0 // pred_check
    _
  $region15: #{vit_forward.1} parent=0 // pred_check_branch
    %4739 = sbr.rel (0) target = $region17
  $region16: #{vit_forward.1} parent=0 // pred_region
    _
  $region17: #{vit_forward.1} parent=0 // pred_fallthru
    _
  // Predicated region
  $region18: #{vit_forward.1} parent=0 // pred_check
    _
  $region19: #{vit_forward.1} parent=0 // pred_check_branch
    %4741 = sbr.rel (0) target = $region21
  $region20: #{vit_forward.1} parent=0 // pred_region
    _
  $region21: #{vit_forward.1} parent=0 // pred_fallthru
    _

</llo_original>
